<compile_context>
chip_gen: v7x
topology: tpu7x:2x2x1
jax: 0.10.0
libtpu: 0.0.40
codegen_flags: <defaults>
</compile_context>

<pallas_src>
import jax
import jax.numpy as jnp
from jax.experimental import pallas as pl
from jax.experimental.pallas import tpu as pltpu


# ----------------------------------------------------------------------------- kernel

def _make_fcnet_kernel(n_layers):
    """Fused MLP forward for one batch tile, feature-major activations.

    Refs: (x, w1, b1, ..., wN, bN, o)
      x : [tile, dim_in]   f32  (native batch-major layout, straight from HBM)
      wK: [out_K, in_K]    bf16 (native PyTorch layout, no transpose)
      bK: [out_K, 1]       f32
      o : [dim_out, tile]  f32  (feature-major -> lane-dense store)
    """

    def kernel(*refs):
        x_ref, o_ref = refs[0], refs[-1]
        params = refs[1:-1]

        # Layer 1: contract x's feature (minor) axis against w1's in-axis so the
        # activation is produced feature-major ([out1, tile], batch on lanes)
        # without any wrapper- or kernel-side transpose of x.
        h = jax.lax.dot_general(
            params[0][...], x_ref[...].astype(jnp.bfloat16),
            dimension_numbers=(((1,), (1,)), ((), ())),
            preferred_element_type=jnp.float32)
        h = jnp.maximum(h + params[1][...], 0.0)

        for layer in range(1, n_layers):
            w_ref = params[2 * layer]
            b_ref = params[2 * layer + 1]
            # MXU: bf16 x bf16 -> f32 accumulate; bias + ReLU on the VPU in f32.
            h = jnp.dot(w_ref[...], h.astype(jnp.bfloat16),
                        preferred_element_type=jnp.float32)
            h = h + b_ref[...]
            if layer < n_layers - 1:
                h = jnp.maximum(h, 0.0)

        # TODO(synk): dropout (p_dropout > 0) not implemented; matches eval mode.
        o_ref[...] = h.astype(o_ref.dtype)

    return kernel


# ----------------------------------------------------------------------------- wrapper

_VMEM_BUDGET = 32 * 1024 * 1024   # conservative live-footprint budget for all gens


def _round_up(v, m):
    return ((v + m - 1) // m) * m


def _choose_tile(B, tile_m, per_row_vmem):
    """Batch-tile size: as large as possible (amortize ~0.35us/grid-step), capped
    by VMEM, and split into >=2 blocks when possible so v7x megacore can shard
    the "parallel" batch axis across its two TensorCores."""
    max_tile = max(128, (_VMEM_BUDGET // per_row_vmem) // 128 * 128)
    tile_m = max(128, min(tile_m, max_tile))
    if B > tile_m:
        return tile_m
    if B >= 256:
        return min(tile_m, _round_up((B + 1) // 2, 128))
    return B


def _fcnet_xla(x, weights, n_layers):
    out = x
    for i in range(1, n_layers + 1):
        out = out @ weights[f"w{i}"].T + weights[f"b{i}"]
        if i < n_layers:
            out = jnp.maximum(out, 0.0)
    return out


def fcnet_forward(x, weights, *, tile_m=8192, min_pallas_batch=512,
                  force_pallas=False):
    """Fused FCNet forward. x: [B, dim_input] f32 -> [B, dim_output] f32."""
    B, dim_in = x.shape
    n_layers = sum(1 for k in weights if k.startswith("w"))
    dims_in = [weights[f"w{i}"].shape[1] for i in range(1, n_layers + 1)]
    dims_out = [weights[f"w{i}"].shape[0] for i in range(1, n_layers + 1)]
    dim_out = dims_out[-1]

    # Tiny batches: the pallas_call fixed cost exceeds the whole compute.
    if B < min_pallas_batch and not force_pallas:
        return _fcnet_xla(x.astype(jnp.float32), weights, n_layers)

    # One-time layout plumbing (tiny: ~2.4K params).
    x = x.astype(jnp.float32)
    wts = [weights[f"w{i}"].astype(jnp.bfloat16) for i in range(1, n_layers + 1)]
    bss = [weights[f"b{i}"].reshape(-1, 1).astype(jnp.float32)
           for i in range(1, n_layers + 1)]

    # Per-batch-row live VMEM (double-buffered lane-padded x block dominates).
    lane_pad = lambda d: _round_up(max(d, 1), 128)
    sub_pad = lambda d: _round_up(max(d, 1), 8)
    per_row_vmem = (2 * lane_pad(dim_in) * 4          # x block (lane-padded to 128)
                    + 2 * sub_pad(dim_out) * 4        # feature-major out block
                    + 4 * sub_pad(max(dims_out)) * 4)  # live f32 activations
    param_vmem = 2 * sum(sub_pad(o) * lane_pad(i) * 2 + sub_pad(o) * 128 * 4
                         for o, i in zip(dims_out, dims_in))

    tile = _choose_tile(B, tile_m, per_row_vmem)
    grid = (pl.cdiv(B, tile),)   # ragged last block is fine: lanes are independent

    in_specs = [pl.BlockSpec((tile, dim_in), lambda i: (i, 0))]  # native x layout
    params = []
    for w, b in zip(wts, bss):
        in_specs.append(pl.BlockSpec(w.shape, lambda i: (0, 0)))
        in_specs.append(pl.BlockSpec(b.shape, lambda i: (0, 0)))
        params += [w, b]
    out_spec = pl.BlockSpec((dim_out, tile), lambda i: (0, i))   # lane-dense store

    vmem_est = per_row_vmem * tile + param_vmem
    vmem_limit = int(min(max(1.5 * vmem_est, 32 * 1024 * 1024), 56 * 1024 * 1024))

    rows = grid[0] * tile
    flops = 2 * rows * sum(i * o for i, o in zip(dims_in, dims_out))
    bytes_accessed = (B * dim_in * 4                      # x read once by the kernel
                      + sum(w.size * 2 for w in wts)
                      + sum(b.size * 4 for b in bss)
                      + dim_out * B * 4)                  # output write

    out_fm = pl.pallas_call(
        _make_fcnet_kernel(n_layers),
        out_shape=jax.ShapeDtypeStruct((dim_out, B), jnp.float32),
        grid=grid,
        in_specs=in_specs,
        out_specs=out_spec,
        compiler_params=pltpu.CompilerParams(
            dimension_semantics=("parallel",),
            vmem_limit_bytes=vmem_limit),
        cost_estimate=pl.CostEstimate(
            flops=flops, transcendentals=0, bytes_accessed=bytes_accessed),
    )(x, *params)

    # Tiny (dim_out x B) flip back to the module's [B, dim_out] contract.
    return out_fm.T


# ----------------------------------------------------------------------------- init / reference

def init_fcnet_weights(key, dim_input, dim_output, num_hidden_units):
    """Matches FCNet.initialise_weights: kaiming_normal_(fan_out, relu), zero biases."""
    dims = [dim_input] + list(num_hidden_units) + [dim_output]
    w = {}
    for i in range(len(dims) - 1):
        key, sub = jax.random.split(key)
        out_f, in_f = dims[i + 1], dims[i]
        std = (2.0 / out_f) ** 0.5
        w[f"w{i + 1}"] = std * jax.random.normal(sub, (out_f, in_f), dtype=jnp.float32)
        w[f"b{i + 1}"] = jnp.zeros((out_f,), dtype=jnp.float32)
    return w


def fcnet_reference(x, weights):
    """Pure-JAX f32 reference mirroring the PyTorch forward (p_dropout=0)."""
    n_layers = sum(1 for k in weights if k.startswith("w"))
    return _fcnet_xla(x, weights, n_layers)


# ----------------------------------------------------------------------------- main

if __name__ == "__main__":
    dim_input = 8
    num_hidden_units = (32, 32, 32)
    dim_output = 4

    key = jax.random.PRNGKey(0)
    key, k1, k2, k3 = jax.random.split(key, 4)
    weights = init_fcnet_weights(key, dim_input, dim_output, num_hidden_units)

    # Case 1: multi-step, evenly-divided "parallel" grid (2 steps -> v7x megacore).
    x1 = jax.random.normal(k1, (4096, dim_input), dtype=jnp.float32)
    out1 = jax.block_until_ready(fcnet_forward(x1, weights, tile_m=2048))
    ref1 = fcnet_reference(x1, weights)
    assert out1.shape == (4096, dim_output)
    assert jnp.allclose(out1, ref1, atol=5e-2, rtol=5e-2), "mismatch (even grid)"

    # Case 2: ragged last block (no wrapper pad / slice copies of x).
    x2 = jax.random.normal(k2, (3000, dim_input), dtype=jnp.float32)
    out2 = jax.block_until_ready(fcnet_forward(x2, weights, tile_m=1024))
    ref2 = fcnet_reference(x2, weights)
    assert out2.shape == (3000, dim_output)
    assert jnp.allclose(out2, ref2, atol=5e-2, rtol=5e-2), "mismatch (ragged grid)"

    # Case 3: tiny batch -> pure-XLA fallback path (pallas fixed cost not worth it).
    x3 = jax.random.normal(k3, (16, dim_input), dtype=jnp.float32)
    out3 = jax.block_until_ready(fcnet_forward(x3, weights))
    ref3 = fcnet_reference(x3, weights)
    assert out3.shape == (16, dim_output)
    assert jnp.allclose(out3, ref3, atol=5e-2, rtol=5e-2), "mismatch (xla fallback)"

    print("KERNEL_OK")
</pallas_src>

<mosaic_0001>
module attributes {stable_mosaic.version = 11 : i64} {
  func.func @kernel(%arg0: i32, %arg1: memref<2048x8xf32, #tpu.memory_space<vmem>>, %arg2: memref<32x8xbf16, #tpu.memory_space<vmem>>, %arg3: memref<32x1xf32, #tpu.memory_space<vmem>>, %arg4: memref<32x32xbf16, #tpu.memory_space<vmem>>, %arg5: memref<32x1xf32, #tpu.memory_space<vmem>>, %arg6: memref<32x32xbf16, #tpu.memory_space<vmem>>, %arg7: memref<32x1xf32, #tpu.memory_space<vmem>>, %arg8: memref<4x32xbf16, #tpu.memory_space<vmem>>, %arg9: memref<4x1xf32, #tpu.memory_space<vmem>>, %arg10: memref<4x2048xf32, #tpu.memory_space<vmem>>) attributes {dimension_semantics = [#tpu.dimension_semantics<parallel>], iteration_bounds = array<i64: 2>, scalar_prefetch = 0 : i64, scratch_operands = 0 : i64, tpu.core_type = #tpu.core_type<tc>, window_params = [{transform_indices = @transform_0, window_bounds = array<i64: 2048, 8>}, {pipeline_mode = #tpu.pipeline_mode<synchronous>, transform_indices = @transform_1, window_bounds = array<i64: 32, 8>}, {pipeline_mode = #tpu.pipeline_mode<synchronous>, transform_indices = @transform_2, window_bounds = array<i64: 32, 1>}, {pipeline_mode = #tpu.pipeline_mode<synchronous>, transform_indices = @transform_3, window_bounds = array<i64: 32, 32>}, {pipeline_mode = #tpu.pipeline_mode<synchronous>, transform_indices = @transform_4, window_bounds = array<i64: 32, 1>}, {pipeline_mode = #tpu.pipeline_mode<synchronous>, transform_indices = @transform_5, window_bounds = array<i64: 32, 32>}, {pipeline_mode = #tpu.pipeline_mode<synchronous>, transform_indices = @transform_6, window_bounds = array<i64: 32, 1>}, {pipeline_mode = #tpu.pipeline_mode<synchronous>, transform_indices = @transform_7, window_bounds = array<i64: 4, 32>}, {pipeline_mode = #tpu.pipeline_mode<synchronous>, transform_indices = @transform_8, window_bounds = array<i64: 4, 1>}, {transform_indices = @transform_9, window_bounds = array<i64: 4, 2048>}]} {
    %c0 = arith.constant 0 : index
    %c0_0 = arith.constant 0 : index
    %0 = vector.load %arg2[%c0, %c0_0] : memref<32x8xbf16, #tpu.memory_space<vmem>>, vector<32x8xbf16>
    %c0_1 = arith.constant 0 : index
    %c0_2 = arith.constant 0 : index
    %1 = vector.load %arg1[%c0_1, %c0_2] : memref<2048x8xf32, #tpu.memory_space<vmem>>, vector<2048x8xf32>
    %2 = arith.truncf %1 : vector<2048x8xf32> to vector<2048x8xbf16>
    %cst = arith.constant dense<0.000000e+00> : vector<32x2048xf32>
    %3 = tpu.matmul %0, %2, %cst {dimension_numbers = #tpu.dot_dimension_numbers<[1], [1], [0], [0], [0, 0, 1, 0], [], []>} : vector<32x8xbf16>, vector<2048x8xbf16>, vector<32x2048xf32> -> vector<32x2048xf32>
    %c0_3 = arith.constant 0 : index
    %c0_4 = arith.constant 0 : index
    %4 = vector.load %arg3[%c0_3, %c0_4] : memref<32x1xf32, #tpu.memory_space<vmem>>, vector<32x1xf32>
    %5 = vector.broadcast %4 : vector<32x1xf32> to vector<32x2048xf32>
    %6 = arith.addf %3, %5 : vector<32x2048xf32>
    %cst_5 = arith.constant 0.000000e+00 : f32
    %7 = vector.broadcast %cst_5 : f32 to vector<32x2048xf32>
    %8 = arith.maximumf %6, %7 : vector<32x2048xf32>
    %c0_6 = arith.constant 0 : index
    %c0_7 = arith.constant 0 : index
    %9 = vector.load %arg4[%c0_6, %c0_7] : memref<32x32xbf16, #tpu.memory_space<vmem>>, vector<32x32xbf16>
    %10 = arith.truncf %8 : vector<32x2048xf32> to vector<32x2048xbf16>
    %cst_8 = arith.constant dense<0.000000e+00> : vector<32x2048xf32>
    %11 = tpu.matmul %9, %10, %cst_8 {dimension_numbers = #tpu.dot_dimension_numbers<[1], [0], [0], [1], [0, 0, 1, 1], [], []>} : vector<32x32xbf16>, vector<32x2048xbf16>, vector<32x2048xf32> -> vector<32x2048xf32>
    %c0_9 = arith.constant 0 : index
    %c0_10 = arith.constant 0 : index
    %12 = vector.load %arg5[%c0_9, %c0_10] : memref<32x1xf32, #tpu.memory_space<vmem>>, vector<32x1xf32>
    %13 = vector.broadcast %12 : vector<32x1xf32> to vector<32x2048xf32>
    %14 = arith.addf %11, %13 : vector<32x2048xf32>
    %cst_11 = arith.constant 0.000000e+00 : f32
    %15 = vector.broadcast %cst_11 : f32 to vector<32x2048xf32>
    %16 = arith.maximumf %14, %15 : vector<32x2048xf32>
    %c0_12 = arith.constant 0 : index
    %c0_13 = arith.constant 0 : index
    %17 = vector.load %arg6[%c0_12, %c0_13] : memref<32x32xbf16, #tpu.memory_space<vmem>>, vector<32x32xbf16>
    %18 = arith.truncf %16 : vector<32x2048xf32> to vector<32x2048xbf16>
    %cst_14 = arith.constant dense<0.000000e+00> : vector<32x2048xf32>
    %19 = tpu.matmul %17, %18, %cst_14 {dimension_numbers = #tpu.dot_dimension_numbers<[1], [0], [0], [1], [0, 0, 1, 1], [], []>} : vector<32x32xbf16>, vector<32x2048xbf16>, vector<32x2048xf32> -> vector<32x2048xf32>
    %c0_15 = arith.constant 0 : index
    %c0_16 = arith.constant 0 : index
    %20 = vector.load %arg7[%c0_15, %c0_16] : memref<32x1xf32, #tpu.memory_space<vmem>>, vector<32x1xf32>
    %21 = vector.broadcast %20 : vector<32x1xf32> to vector<32x2048xf32>
    %22 = arith.addf %19, %21 : vector<32x2048xf32>
    %cst_17 = arith.constant 0.000000e+00 : f32
    %23 = vector.broadcast %cst_17 : f32 to vector<32x2048xf32>
    %24 = arith.maximumf %22, %23 : vector<32x2048xf32>
    %c0_18 = arith.constant 0 : index
    %c0_19 = arith.constant 0 : index
    %25 = vector.load %arg8[%c0_18, %c0_19] : memref<4x32xbf16, #tpu.memory_space<vmem>>, vector<4x32xbf16>
    %26 = arith.truncf %24 : vector<32x2048xf32> to vector<32x2048xbf16>
    %cst_20 = arith.constant dense<0.000000e+00> : vector<4x2048xf32>
    %27 = tpu.matmul %25, %26, %cst_20 {dimension_numbers = #tpu.dot_dimension_numbers<[1], [0], [0], [1], [0, 0, 1, 1], [], []>} : vector<4x32xbf16>, vector<32x2048xbf16>, vector<4x2048xf32> -> vector<4x2048xf32>
    %c0_21 = arith.constant 0 : index
    %c0_22 = arith.constant 0 : index
    %28 = vector.load %arg9[%c0_21, %c0_22] : memref<4x1xf32, #tpu.memory_space<vmem>>, vector<4x1xf32>
    %29 = vector.broadcast %28 : vector<4x1xf32> to vector<4x2048xf32>
    %30 = arith.addf %27, %29 : vector<4x2048xf32>
    %c0_23 = arith.constant 0 : index
    %c0_24 = arith.constant 0 : index
    %31 = vector.load %arg10[%c0_23, %c0_24] : memref<4x2048xf32, #tpu.memory_space<vmem>>, vector<4x2048xf32>
    tpu.vector_store %arg10[%c0_23, %c0_24], %30 {strides = array<i32>} : memref<4x2048xf32, #tpu.memory_space<vmem>>, vector<4x2048xf32>,
    return
  }
  func.func @transform_0(%arg0: i32) -> (i32, i32) {
    %c0_i32 = arith.constant 0 : i32
    %c0_i32_0 = arith.constant 0 : i32
    return %arg0, %c0_i32 : i32, i32
  }
  func.func @transform_1(%arg0: i32) -> (i32, i32) {
    %c0_i32 = arith.constant 0 : i32
    %c0_i32_0 = arith.constant 0 : i32
    %c0_i32_1 = arith.constant 0 : i32
    return %c0_i32, %c0_i32_0 : i32, i32
  }
  func.func @transform_2(%arg0: i32) -> (i32, i32) {
    %c0_i32 = arith.constant 0 : i32
    %c0_i32_0 = arith.constant 0 : i32
    %c0_i32_1 = arith.constant 0 : i32
    return %c0_i32, %c0_i32_0 : i32, i32
  }
  func.func @transform_3(%arg0: i32) -> (i32, i32) {
    %c0_i32 = arith.constant 0 : i32
    %c0_i32_0 = arith.constant 0 : i32
    %c0_i32_1 = arith.constant 0 : i32
    return %c0_i32, %c0_i32_0 : i32, i32
  }
  func.func @transform_4(%arg0: i32) -> (i32, i32) {
    %c0_i32 = arith.constant 0 : i32
    %c0_i32_0 = arith.constant 0 : i32
    %c0_i32_1 = arith.constant 0 : i32
    return %c0_i32, %c0_i32_0 : i32, i32
  }
  func.func @transform_5(%arg0: i32) -> (i32, i32) {
    %c0_i32 = arith.constant 0 : i32
    %c0_i32_0 = arith.constant 0 : i32
    %c0_i32_1 = arith.constant 0 : i32
    return %c0_i32, %c0_i32_0 : i32, i32
  }
  func.func @transform_6(%arg0: i32) -> (i32, i32) {
    %c0_i32 = arith.constant 0 : i32
    %c0_i32_0 = arith.constant 0 : i32
    %c0_i32_1 = arith.constant 0 : i32
    return %c0_i32, %c0_i32_0 : i32, i32
  }
  func.func @transform_7(%arg0: i32) -> (i32, i32) {
    %c0_i32 = arith.constant 0 : i32
    %c0_i32_0 = arith.constant 0 : i32
    %c0_i32_1 = arith.constant 0 : i32
    return %c0_i32, %c0_i32_0 : i32, i32
  }
  func.func @transform_8(%arg0: i32) -> (i32, i32) {
    %c0_i32 = arith.constant 0 : i32
    %c0_i32_0 = arith.constant 0 : i32
    %c0_i32_1 = arith.constant 0 : i32
    return %c0_i32, %c0_i32_0 : i32, i32
  }
  func.func @transform_9(%arg0: i32) -> (i32, i32) {
    %c0_i32 = arith.constant 0 : i32
    %c0_i32_0 = arith.constant 0 : i32
    return %c0_i32, %arg0 : i32, i32
  }
}

</mosaic_0001>

<llo_original>
// kernel: tpu_custom_call.1
$region0: #{tpu_custom_call.1}
  #allocation0 [shape = 'u32[]', space=smem, size = 0x4, offset = 0x4, fixed_abs, tag = 'smem constant byte address 0x4 - core index']
  #allocation1 [shape = 'u32[144,128]{1,0:T(1,128)}', space=vmem, size = 0x12000, scoped, tag = 'internal scratch']
  %s0 = inlined_call_operand.vmem [shape: f32[4096,8], index: 0, kind: input, shape index: {}]
  %s1 = inlined_call_operand.vmem [shape: bf16[32,8], index: 1, kind: input, shape index: {}]
  %s2 = inlined_call_operand.vmem [shape: f32[32,1], index: 2, kind: input, shape index: {}]
  %s3 = inlined_call_operand.vmem [shape: bf16[32,32], index: 3, kind: input, shape index: {}]
  %s4 = inlined_call_operand.vmem [shape: f32[32,1], index: 4, kind: input, shape index: {}]
  %s5 = inlined_call_operand.vmem [shape: bf16[32,32], index: 5, kind: input, shape index: {}]
  %s6 = inlined_call_operand.vmem [shape: f32[32,1], index: 6, kind: input, shape index: {}]
  %s7 = inlined_call_operand.vmem [shape: bf16[4,32], index: 7, kind: input, shape index: {}]
  %s8 = inlined_call_operand.vmem [shape: f32[4,1], index: 8, kind: input, shape index: {}]
  %s9 = inlined_call_operand.hbm [shape: f32[4,4096], index: 9, kind: output, shape index: {}]
  %s10 = sld [smem:[#allocation0]]
  $region69: #{tpu_custom_call.1} parent=0
    _
  %s12 = ssub.s32 1, %s10
  %s13 = scalar_select 0, %s12, %s10
  $region1: #{tpu_custom_call.1} parent=0
    #allocation2 [shape = 'u8[65536]{0}', space=vmem, size = 0x10000, scoped, tag = 'output window, operand 0']
    #allocation3 [shape = 's32[2]{0}', space=sflag, size = 0x8, scoped, tag = 'scoped memory for tpu_custom_call.1']
    %14 = vsyncpa [#allocation3], 0
    %s15 = scalar_lea.sflag [#allocation3], 1
    %16 = vsyncpa %s15, 0
    loop: start=0, step=1, limit=4
    $region2: #{tpu_custom_call.1} parent=1 // loop_pre_header
      _
    $region3: #{tpu_custom_call.1} parent=1 // loop_header
      %s18 = sphi 0, %s22
      %p19 = scmp.ge.s32.totalorder %s18, 4
      %s28 = sphi 0, %s30
      %s31 = sphi 0, %s28
      %s32 = sphi 0, %s31
      %s48 = sphi 0, %s32
      %s52 = sphi 0, %s52
      %s54 = sphi 0, %s52
      %s55 = sphi 0, %s54
      %s69 = sphi 0, %s55
      %s73 = sphi 0, %s73
      %s75 = sphi 0, %s73
      %s76 = sphi 0, %s75
      %s90 = sphi 0, %s76
      %s94 = sphi 0, %s94
      %s96 = sphi 0, %s94
      %s97 = sphi 0, %s96
      %s111 = sphi 0, %s97
      %s115 = sphi 0, %s115
      %s117 = sphi 0, %s115
      %s118 = sphi 0, %s117
      %s132 = sphi 0, %s118
      %s136 = sphi 0, %s136
      %s138 = sphi 0, %s136
      %s139 = sphi 0, %s138
      %s153 = sphi 0, %s139
      %s157 = sphi 0, %s157
      %s159 = sphi 0, %s157
      %s160 = sphi 0, %s159
      %s174 = sphi 0, %s160
      %s178 = sphi 0, %s178
      %s180 = sphi 0, %s178
      %s181 = sphi 0, %s180
      %s195 = sphi 0, %s181
      %s199 = sphi 0, %s199
      %s201 = sphi 0, %s199
      %s202 = sphi 0, %s201
      %s216 = sphi 0, %s202
      %s222 = sphi 0, %s224
      %s225 = sphi 0, %s222
      %s226 = sphi 0, %s225
      %s242 = sphi 0, %s226
    $region4: #{tpu_custom_call.1} parent=1 // loop_header_branch
      %21 = sbr.rel (%p19) target = $region8
    $region5: #{tpu_custom_call.1} parent=1 // loop_body
      %s23 = ssub.s32 %s18, 1
      %s24 = ssub.s32 %s18, 2
      %s25 = sadd.s32 %s18, 1
      %s26 = ssub.s32 %s18, %s25
      %p27 = scmp.eq.s32.totalorder %s26, 0
      %s29 = sadd.s32 %s28, 1
      %s30 = scalar_select %p27, %s28, %s29
      %p33 = pneg %p27
      %p34 = scmp.eq.s32.totalorder %s18, 1
      %p35 = por %p33, %p34
      %p36 = scmp.ne.s32.totalorder %s28, %s31
      %p37 = scmp.eq.s32.totalorder %s18, 0
      %p38 = por %p36, %p37
      %p39 = scmp.ne.s32.totalorder %s28, %s31
      %p40 = scmp.eq.s32.totalorder %s23, 1
      %p41 = por %p39, %p40
      %p42 = scmp.ne.s32.totalorder %s31, %s32
      %p43 = scmp.eq.s32.totalorder %s23, 0
      %p44 = por %p42, %p43
      %p45 = scmp.ne.s32.totalorder %s31, %s32
      %p46 = scmp.eq.s32.totalorder %s24, 1
      %p47 = por %p45, %p46
      %p49 = scmp.ne.s32.totalorder %s32, %s48
      %p50 = scmp.eq.s32.totalorder %s24, 0
      %p51 = por %p49, %p50
      %s53 = sadd.s32 %s52, 1
      %p56 = scmp.eq.s32.totalorder %s18, 1
      %p57 = scmp.ne.s32.totalorder %s52, %s54
      %p58 = scmp.eq.s32.totalorder %s18, 0
      %p59 = por %p57, %p58
      %p60 = scmp.ne.s32.totalorder %s52, %s54
      %p61 = scmp.eq.s32.totalorder %s23, 1
      %p62 = por %p60, %p61
      %p63 = scmp.ne.s32.totalorder %s54, %s55
      %p64 = scmp.eq.s32.totalorder %s23, 0
      %p65 = por %p63, %p64
      %p66 = scmp.ne.s32.totalorder %s54, %s55
      %p67 = scmp.eq.s32.totalorder %s24, 1
      %p68 = por %p66, %p67
      %p70 = scmp.ne.s32.totalorder %s55, %s69
      %p71 = scmp.eq.s32.totalorder %s24, 0
      %p72 = por %p70, %p71
      %s74 = sadd.s32 %s73, 1
      %p77 = scmp.eq.s32.totalorder %s18, 1
      %p78 = scmp.ne.s32.totalorder %s73, %s75
      %p79 = scmp.eq.s32.totalorder %s18, 0
      %p80 = por %p78, %p79
      %p81 = scmp.ne.s32.totalorder %s73, %s75
      %p82 = scmp.eq.s32.totalorder %s23, 1
      %p83 = por %p81, %p82
      %p84 = scmp.ne.s32.totalorder %s75, %s76
      %p85 = scmp.eq.s32.totalorder %s23, 0
      %p86 = por %p84, %p85
      %p87 = scmp.ne.s32.totalorder %s75, %s76
      %p88 = scmp.eq.s32.totalorder %s24, 1
      %p89 = por %p87, %p88
      %p91 = scmp.ne.s32.totalorder %s76, %s90
      %p92 = scmp.eq.s32.totalorder %s24, 0
      %p93 = por %p91, %p92
      %s95 = sadd.s32 %s94, 1
      %p98 = scmp.eq.s32.totalorder %s18, 1
      %p99 = scmp.ne.s32.totalorder %s94, %s96
      %p100 = scmp.eq.s32.totalorder %s18, 0
      %p101 = por %p99, %p100
      %p102 = scmp.ne.s32.totalorder %s94, %s96
      %p103 = scmp.eq.s32.totalorder %s23, 1
      %p104 = por %p102, %p103
      %p105 = scmp.ne.s32.totalorder %s96, %s97
      %p106 = scmp.eq.s32.totalorder %s23, 0
      %p107 = por %p105, %p106
      %p108 = scmp.ne.s32.totalorder %s96, %s97
      %p109 = scmp.eq.s32.totalorder %s24, 1
      %p110 = por %p108, %p109
      %p112 = scmp.ne.s32.totalorder %s97, %s111
      %p113 = scmp.eq.s32.totalorder %s24, 0
      %p114 = por %p112, %p113
      %s116 = sadd.s32 %s115, 1
      %p119 = scmp.eq.s32.totalorder %s18, 1
      %p120 = scmp.ne.s32.totalorder %s115, %s117
      %p121 = scmp.eq.s32.totalorder %s18, 0
      %p122 = por %p120, %p121
      %p123 = scmp.ne.s32.totalorder %s115, %s117
      %p124 = scmp.eq.s32.totalorder %s23, 1
      %p125 = por %p123, %p124
      %p126 = scmp.ne.s32.totalorder %s117, %s118
      %p127 = scmp.eq.s32.totalorder %s23, 0
      %p128 = por %p126, %p127
      %p129 = scmp.ne.s32.totalorder %s117, %s118
      %p130 = scmp.eq.s32.totalorder %s24, 1
      %p131 = por %p129, %p130
      %p133 = scmp.ne.s32.totalorder %s118, %s132
      %p134 = scmp.eq.s32.totalorder %s24, 0
      %p135 = por %p133, %p134
      %s137 = sadd.s32 %s136, 1
      %p140 = scmp.eq.s32.totalorder %s18, 1
      %p141 = scmp.ne.s32.totalorder %s136, %s138
      %p142 = scmp.eq.s32.totalorder %s18, 0
      %p143 = por %p141, %p142
      %p144 = scmp.ne.s32.totalorder %s136, %s138
      %p145 = scmp.eq.s32.totalorder %s23, 1
      %p146 = por %p144, %p145
      %p147 = scmp.ne.s32.totalorder %s138, %s139
      %p148 = scmp.eq.s32.totalorder %s23, 0
      %p149 = por %p147, %p148
      %p150 = scmp.ne.s32.totalorder %s138, %s139
      %p151 = scmp.eq.s32.totalorder %s24, 1
      %p152 = por %p150, %p151
      %p154 = scmp.ne.s32.totalorder %s139, %s153
      %p155 = scmp.eq.s32.totalorder %s24, 0
      %p156 = por %p154, %p155
      %s158 = sadd.s32 %s157, 1
      %p161 = scmp.eq.s32.totalorder %s18, 1
      %p162 = scmp.ne.s32.totalorder %s157, %s159
      %p163 = scmp.eq.s32.totalorder %s18, 0
      %p164 = por %p162, %p163
      %p165 = scmp.ne.s32.totalorder %s157, %s159
      %p166 = scmp.eq.s32.totalorder %s23, 1
      %p167 = por %p165, %p166
      %p168 = scmp.ne.s32.totalorder %s159, %s160
      %p169 = scmp.eq.s32.totalorder %s23, 0
      %p170 = por %p168, %p169
      %p171 = scmp.ne.s32.totalorder %s159, %s160
      %p172 = scmp.eq.s32.totalorder %s24, 1
      %p173 = por %p171, %p172
      %p175 = scmp.ne.s32.totalorder %s160, %s174
      %p176 = scmp.eq.s32.totalorder %s24, 0
      %p177 = por %p175, %p176
      %s179 = sadd.s32 %s178, 1
      %p182 = scmp.eq.s32.totalorder %s18, 1
      %p183 = scmp.ne.s32.totalorder %s178, %s180
      %p184 = scmp.eq.s32.totalorder %s18, 0
      %p185 = por %p183, %p184
      %p186 = scmp.ne.s32.totalorder %s178, %s180
      %p187 = scmp.eq.s32.totalorder %s23, 1
      %p188 = por %p186, %p187
      %p189 = scmp.ne.s32.totalorder %s180, %s181
      %p190 = scmp.eq.s32.totalorder %s23, 0
      %p191 = por %p189, %p190
      %p192 = scmp.ne.s32.totalorder %s180, %s181
      %p193 = scmp.eq.s32.totalorder %s24, 1
      %p194 = por %p192, %p193
      %p196 = scmp.ne.s32.totalorder %s181, %s195
      %p197 = scmp.eq.s32.totalorder %s24, 0
      %p198 = por %p196, %p197
      %s200 = sadd.s32 %s199, 1
      %p203 = scmp.eq.s32.totalorder %s18, 1
      %p204 = scmp.ne.s32.totalorder %s199, %s201
      %p205 = scmp.eq.s32.totalorder %s18, 0
      %p206 = por %p204, %p205
      %p207 = scmp.ne.s32.totalorder %s199, %s201
      %p208 = scmp.eq.s32.totalorder %s23, 1
      %p209 = por %p207, %p208
      %p210 = scmp.ne.s32.totalorder %s201, %s202
      %p211 = scmp.eq.s32.totalorder %s23, 0
      %p212 = por %p210, %p211
      %p213 = scmp.ne.s32.totalorder %s201, %s202
      %p214 = scmp.eq.s32.totalorder %s24, 1
      %p215 = por %p213, %p214
      %p217 = scmp.ne.s32.totalorder %s202, %s216
      %p218 = scmp.eq.s32.totalorder %s24, 0
      %p219 = por %p217, %p218
      %s220 = ssub.s32 %s18, %s25
      %p221 = scmp.eq.s32.totalorder %s220, 0
      %s223 = sadd.s32 %s222, 1
      %s224 = scalar_select %p221, %s222, %s223
      %p227 = pneg %p221
      %p228 = scmp.eq.s32.totalorder %s18, 1
      %p229 = por %p227, %p228
      %p230 = scmp.ne.s32.totalorder %s222, %s225
      %p231 = scmp.eq.s32.totalorder %s18, 0
      %p232 = por %p230, %p231
      %p233 = scmp.ne.s32.totalorder %s222, %s225
      %p234 = scmp.eq.s32.totalorder %s23, 1
      %p235 = por %p233, %p234
      %p236 = scmp.ne.s32.totalorder %s225, %s226
      %p237 = scmp.eq.s32.totalorder %s23, 0
      %p238 = por %p236, %p237
      %p239 = scmp.ne.s32.totalorder %s225, %s226
      %p240 = scmp.eq.s32.totalorder %s24, 1
      %p241 = por %p239, %p240
      %p243 = scmp.ne.s32.totalorder %s226, %s242
      %p244 = scmp.eq.s32.totalorder %s24, 0
      %p245 = por %p243, %p244
      %p246 = scmp.le.s32.totalorder 1, %s18
      %p247 = scmp.lt.s32.totalorder %s18, 3
      %p248 = pnand %p246, %p247
      %p249 = pneg %p248
      // Predicated region
      $region9: #{tpu_custom_call.1} parent=5 // pred_check
        _
      $region10: #{tpu_custom_call.1} parent=5 // pred_check_branch
        %251 = sbr.rel (%p248) target = $region12
      $region11: #{tpu_custom_call.1} parent=5 // pred_region
        %s252 = ssub.s32 %s18, 1
        // Predicated region
        $region13: #{tpu_custom_call.1} parent=11 // pred_check
          %p253 = pneg %p65
        $region14: #{tpu_custom_call.1} parent=11 // pred_check_branch
          %255 = sbr.rel (%p253) target = $region16
        $region15: #{tpu_custom_call.1} parent=11 // pred_region
          _
        $region16: #{tpu_custom_call.1} parent=11 // pred_fallthru
          _
        // Predicated region
        $region17: #{tpu_custom_call.1} parent=11 // pred_check
          %p256 = pneg %p86
        $region18: #{tpu_custom_call.1} parent=11 // pred_check_branch
          %258 = sbr.rel (%p256) target = $region20
        $region19: #{tpu_custom_call.1} parent=11 // pred_region
          _
        $region20: #{tpu_custom_call.1} parent=11 // pred_fallthru
          _
        // Predicated region
        $region21: #{tpu_custom_call.1} parent=11 // pred_check
          %p259 = pneg %p107
        $region22: #{tpu_custom_call.1} parent=11 // pred_check_branch
          %261 = sbr.rel (%p259) target = $region24
        $region23: #{tpu_custom_call.1} parent=11 // pred_region
          _
        $region24: #{tpu_custom_call.1} parent=11 // pred_fallthru
          _
        // Predicated region
        $region25: #{tpu_custom_call.1} parent=11 // pred_check
          %p262 = pneg %p128
        $region26: #{tpu_custom_call.1} parent=11 // pred_check_branch
          %264 = sbr.rel (%p262) target = $region28
        $region27: #{tpu_custom_call.1} parent=11 // pred_region
          _
        $region28: #{tpu_custom_call.1} parent=11 // pred_fallthru
          _
        // Predicated region
        $region29: #{tpu_custom_call.1} parent=11 // pred_check
          %p265 = pneg %p149
        $region30: #{tpu_custom_call.1} parent=11 // pred_check_branch
          %267 = sbr.rel (%p265) target = $region32
        $region31: #{tpu_custom_call.1} parent=11 // pred_region
          _
        $region32: #{tpu_custom_call.1} parent=11 // pred_fallthru
          _
        // Predicated region
        $region33: #{tpu_custom_call.1} parent=11 // pred_check
          %p268 = pneg %p170
        $region34: #{tpu_custom_call.1} parent=11 // pred_check_branch
          %270 = sbr.rel (%p268) target = $region36
        $region35: #{tpu_custom_call.1} parent=11 // pred_region
          _
        $region36: #{tpu_custom_call.1} parent=11 // pred_fallthru
          _
        // Predicated region
        $region37: #{tpu_custom_call.1} parent=11 // pred_check
          %p271 = pneg %p191
        $region38: #{tpu_custom_call.1} parent=11 // pred_check_branch
          %273 = sbr.rel (%p271) target = $region40
        $region39: #{tpu_custom_call.1} parent=11 // pred_region
          _
        $region40: #{tpu_custom_call.1} parent=11 // pred_fallthru
          _
        // Predicated region
        $region41: #{tpu_custom_call.1} parent=11 // pred_check
          %p274 = pneg %p212
        $region42: #{tpu_custom_call.1} parent=11 // pred_check_branch
          %276 = sbr.rel (%p274) target = $region44
        $region43: #{tpu_custom_call.1} parent=11 // pred_region
          _
        $region44: #{tpu_custom_call.1} parent=11 // pred_fallthru
          _
      $region12: #{tpu_custom_call.1} parent=5 // pred_fallthru
        _
      %p277 = scmp.lt.s32.totalorder %s18, 2
      // Predicated region
      $region45: #{tpu_custom_call.1} parent=5 // pred_check
        %p278 = pneg %p277
      $region46: #{tpu_custom_call.1} parent=5 // pred_check_branch
        %280 = sbr.rel (%p278) target = $region48
      $region47: #{tpu_custom_call.1} parent=5 // pred_region
        // Predicated region
        $region49: #{tpu_custom_call.1} parent=47 // pred_check
          %p281 = pneg %p38
        $region50: #{tpu_custom_call.1} parent=47 // pred_check_branch
          %283 = sbr.rel (%p281) target = $region52
        $region51: #{tpu_custom_call.1} parent=47 // pred_region
          %s284 = smul.u32 256, %s18
          %p285 = scmp.lt.s32.totalorder %s284, 511
          %s286 = scalar_select %p285, %s284, 511
          %s287 = smul.addr %s286, 8
          %s288 = scalar_lea.vmem %s0, %s287
          %s289 = smul.u32 256, %s18
        $region52: #{tpu_custom_call.1} parent=47 // pred_fallthru
          _
      $region48: #{tpu_custom_call.1} parent=5 // pred_fallthru
        _
      %p290 = scmp.le.s32.totalorder 1, %s18
      %p291 = scmp.lt.s32.totalorder %s18, 3
      %p292 = pnand %p290, %p291
      %p293 = pneg %p292
      // Predicated region
      $region53: #{tpu_custom_call.1} parent=5 // pred_check
        _
      $region54: #{tpu_custom_call.1} parent=5 // pred_check_branch
        %295 = sbr.rel (%p292) target = $region56
      $region55: #{tpu_custom_call.1} parent=5 // pred_region
        %s296 = ssub.s32 %s18, 1
        %s297 = smul.u32 256, %s23
        %p298 = scmp.lt.s32.totalorder %s297, 511
        %s299 = scalar_select %p298, %s297, 511
        %s300 = smul.addr %s299, 8
        %s301 = scalar_lea.vmem %s0, %s300
        %p302 = pneg %p44
        %p303 = pneg %p41
        %p304 = pneg %p65
        %p305 = pneg %p62
        %p306 = pneg %p86
        %p307 = pneg %p83
        %p308 = pneg %p107
        %p309 = pneg %p104
        %p310 = pneg %p128
        %p311 = pneg %p125
        %p312 = pneg %p149
        %p313 = pneg %p146
        %p314 = pneg %p170
        %p315 = pneg %p167
        %p316 = pneg %p191
        %p317 = pneg %p188
        %p318 = pneg %p212
        %p319 = pneg %p209
        %p320 = pneg %p238
        %p321 = pneg %p235
        %s322 = sand.u32 %s225, 1
        %s323 = scalar_lea.sflag [#allocation3], %s322
        %s324 = sand.u32 %s225, 1
        %s325 = smul.addr %s324, 64
        %s326 = scalar_lea.vmem [#allocation2], %s325
        %s327 = smul.u32 256, %s23
        %p328 = scmp.lt.s32.totalorder %s327, 511
        %s329 = scalar_select %p328, %s327, 511
        %s330 = smul.addr %s329, 8
        %s331 = scalar_lea.vmem %s0, %s330
        %s332 = smul.u32 256, %s23
        %s333 = smul.u32 16, %s23
        %v335 = vld [vmem:[%s1] sm:$0xf]
        %v336 = vld [vmem:[%s1 + $0x4] sm:$0xf]
        %v337 = vld [vmem:[%s1 + $0x8] sm:$0xf]
        %v338 = vld [vmem:[%s1 + $0xc] sm:$0xf]
        %v339 = vld [vmem:[%s331] sm:$0xff]
        %v340 = vld [vmem:[%s331 + $0x8] sm:$0xff]
        %v341 = vld [vmem:[%s331 + $0x10] sm:$0xff]
        %v342 = vld [vmem:[%s331 + $0x18] sm:$0xff]
        %v343 = vld [vmem:[%s331 + $0x20] sm:$0xff]
        %v344 = vld [vmem:[%s331 + $0x28] sm:$0xff]
        %v345 = vld [vmem:[%s331 + $0x30] sm:$0xff]
        %v346 = vld [vmem:[%s331 + $0x38] sm:$0xff]
        %v347 = vld [vmem:[%s331 + $0x40] sm:$0xff]
        %v348 = vld [vmem:[%s331 + $0x48] sm:$0xff]
        %v349 = vld [vmem:[%s331 + $0x50] sm:$0xff]
        %v350 = vld [vmem:[%s331 + $0x58] sm:$0xff]
        %v351 = vld [vmem:[%s331 + $0x60] sm:$0xff]
        %v352 = vld [vmem:[%s331 + $0x68] sm:$0xff]
        %v353 = vld [vmem:[%s331 + $0x70] sm:$0xff]
        %v354 = vld [vmem:[%s331 + $0x78] sm:$0xff]
        %v355 = vld [vmem:[%s331 + $0x80] sm:$0xff]
        %v356 = vld [vmem:[%s331 + $0x88] sm:$0xff]
        %v357 = vld [vmem:[%s331 + $0x90] sm:$0xff]
        %v358 = vld [vmem:[%s331 + $0x98] sm:$0xff]
        %v359 = vld [vmem:[%s331 + $0xa0] sm:$0xff]
        %v360 = vld [vmem:[%s331 + $0xa8] sm:$0xff]
        %v361 = vld [vmem:[%s331 + $0xb0] sm:$0xff]
        %v362 = vld [vmem:[%s331 + $0xb8] sm:$0xff]
        %v363 = vld [vmem:[%s331 + $0xc0] sm:$0xff]
        %v364 = vld [vmem:[%s331 + $0xc8] sm:$0xff]
        %v365 = vld [vmem:[%s331 + $0xd0] sm:$0xff]
        %v366 = vld [vmem:[%s331 + $0xd8] sm:$0xff]
        %v367 = vld [vmem:[%s331 + $0xe0] sm:$0xff]
        %v368 = vld [vmem:[%s331 + $0xe8] sm:$0xff]
        %v369 = vld [vmem:[%s331 + $0xf0] sm:$0xff]
        %v370 = vld [vmem:[%s331 + $0xf8] sm:$0xff]
        %v371 = vld [vmem:[%s331 + $0x100] sm:$0xff]
        %v372 = vld [vmem:[%s331 + $0x108] sm:$0xff]
        %v373 = vld [vmem:[%s331 + $0x110] sm:$0xff]
        %v374 = vld [vmem:[%s331 + $0x118] sm:$0xff]
        %v375 = vld [vmem:[%s331 + $0x120] sm:$0xff]
        %v376 = vld [vmem:[%s331 + $0x128] sm:$0xff]
        %v377 = vld [vmem:[%s331 + $0x130] sm:$0xff]
        %v378 = vld [vmem:[%s331 + $0x138] sm:$0xff]
        %v379 = vld [vmem:[%s331 + $0x140] sm:$0xff]
        %v380 = vld [vmem:[%s331 + $0x148] sm:$0xff]
        %v381 = vld [vmem:[%s331 + $0x150] sm:$0xff]
        %v382 = vld [vmem:[%s331 + $0x158] sm:$0xff]
        %v383 = vld [vmem:[%s331 + $0x160] sm:$0xff]
        %v384 = vld [vmem:[%s331 + $0x168] sm:$0xff]
        %v385 = vld [vmem:[%s331 + $0x170] sm:$0xff]
        %v386 = vld [vmem:[%s331 + $0x178] sm:$0xff]
        %v387 = vld [vmem:[%s331 + $0x180] sm:$0xff]
        %v388 = vld [vmem:[%s331 + $0x188] sm:$0xff]
        %v389 = vld [vmem:[%s331 + $0x190] sm:$0xff]
        %v390 = vld [vmem:[%s331 + $0x198] sm:$0xff]
        %v391 = vld [vmem:[%s331 + $0x1a0] sm:$0xff]
        %v392 = vld [vmem:[%s331 + $0x1a8] sm:$0xff]
        %v393 = vld [vmem:[%s331 + $0x1b0] sm:$0xff]
        %v394 = vld [vmem:[%s331 + $0x1b8] sm:$0xff]
        %v395 = vld [vmem:[%s331 + $0x1c0] sm:$0xff]
        %v396 = vld [vmem:[%s331 + $0x1c8] sm:$0xff]
        %v397 = vld [vmem:[%s331 + $0x1d0] sm:$0xff]
        %v398 = vld [vmem:[%s331 + $0x1d8] sm:$0xff]
        %v399 = vld [vmem:[%s331 + $0x1e0] sm:$0xff]
        %v400 = vld [vmem:[%s331 + $0x1e8] sm:$0xff]
        %v401 = vld [vmem:[%s331 + $0x1f0] sm:$0xff]
        %v402 = vld [vmem:[%s331 + $0x1f8] sm:$0xff]
        %v403 = vld [vmem:[%s331 + $0x200] sm:$0xff]
        %v404 = vld [vmem:[%s331 + $0x208] sm:$0xff]
        %v405 = vld [vmem:[%s331 + $0x210] sm:$0xff]
        %v406 = vld [vmem:[%s331 + $0x218] sm:$0xff]
        %v407 = vld [vmem:[%s331 + $0x220] sm:$0xff]
        %v408 = vld [vmem:[%s331 + $0x228] sm:$0xff]
        %v409 = vld [vmem:[%s331 + $0x230] sm:$0xff]
        %v410 = vld [vmem:[%s331 + $0x238] sm:$0xff]
        %v411 = vld [vmem:[%s331 + $0x240] sm:$0xff]
        %v412 = vld [vmem:[%s331 + $0x248] sm:$0xff]
        %v413 = vld [vmem:[%s331 + $0x250] sm:$0xff]
        %v414 = vld [vmem:[%s331 + $0x258] sm:$0xff]
        %v415 = vld [vmem:[%s331 + $0x260] sm:$0xff]
        %v416 = vld [vmem:[%s331 + $0x268] sm:$0xff]
        %v417 = vld [vmem:[%s331 + $0x270] sm:$0xff]
        %v418 = vld [vmem:[%s331 + $0x278] sm:$0xff]
        %v419 = vld [vmem:[%s331 + $0x280] sm:$0xff]
        %v420 = vld [vmem:[%s331 + $0x288] sm:$0xff]
        %v421 = vld [vmem:[%s331 + $0x290] sm:$0xff]
        %v422 = vld [vmem:[%s331 + $0x298] sm:$0xff]
        %v423 = vld [vmem:[%s331 + $0x2a0] sm:$0xff]
        %v424 = vld [vmem:[%s331 + $0x2a8] sm:$0xff]
        %v425 = vld [vmem:[%s331 + $0x2b0] sm:$0xff]
        %v426 = vld [vmem:[%s331 + $0x2b8] sm:$0xff]
        %v427 = vld [vmem:[%s331 + $0x2c0] sm:$0xff]
        %v428 = vld [vmem:[%s331 + $0x2c8] sm:$0xff]
        %v429 = vld [vmem:[%s331 + $0x2d0] sm:$0xff]
        %v430 = vld [vmem:[%s331 + $0x2d8] sm:$0xff]
        %v431 = vld [vmem:[%s331 + $0x2e0] sm:$0xff]
        %v432 = vld [vmem:[%s331 + $0x2e8] sm:$0xff]
        %v433 = vld [vmem:[%s331 + $0x2f0] sm:$0xff]
        %v434 = vld [vmem:[%s331 + $0x2f8] sm:$0xff]
        %v435 = vld [vmem:[%s331 + $0x300] sm:$0xff]
        %v436 = vld [vmem:[%s331 + $0x308] sm:$0xff]
        %v437 = vld [vmem:[%s331 + $0x310] sm:$0xff]
        %v438 = vld [vmem:[%s331 + $0x318] sm:$0xff]
        %v439 = vld [vmem:[%s331 + $0x320] sm:$0xff]
        %v440 = vld [vmem:[%s331 + $0x328] sm:$0xff]
        %v441 = vld [vmem:[%s331 + $0x330] sm:$0xff]
        %v442 = vld [vmem:[%s331 + $0x338] sm:$0xff]
        %v443 = vld [vmem:[%s331 + $0x340] sm:$0xff]
        %v444 = vld [vmem:[%s331 + $0x348] sm:$0xff]
        %v445 = vld [vmem:[%s331 + $0x350] sm:$0xff]
        %v446 = vld [vmem:[%s331 + $0x358] sm:$0xff]
        %v447 = vld [vmem:[%s331 + $0x360] sm:$0xff]
        %v448 = vld [vmem:[%s331 + $0x368] sm:$0xff]
        %v449 = vld [vmem:[%s331 + $0x370] sm:$0xff]
        %v450 = vld [vmem:[%s331 + $0x378] sm:$0xff]
        %v451 = vld [vmem:[%s331 + $0x380] sm:$0xff]
        %v452 = vld [vmem:[%s331 + $0x388] sm:$0xff]
        %v453 = vld [vmem:[%s331 + $0x390] sm:$0xff]
        %v454 = vld [vmem:[%s331 + $0x398] sm:$0xff]
        %v455 = vld [vmem:[%s331 + $0x3a0] sm:$0xff]
        %v456 = vld [vmem:[%s331 + $0x3a8] sm:$0xff]
        %v457 = vld [vmem:[%s331 + $0x3b0] sm:$0xff]
        %v458 = vld [vmem:[%s331 + $0x3b8] sm:$0xff]
        %v459 = vld [vmem:[%s331 + $0x3c0] sm:$0xff]
        %v460 = vld [vmem:[%s331 + $0x3c8] sm:$0xff]
        %v461 = vld [vmem:[%s331 + $0x3d0] sm:$0xff]
        %v462 = vld [vmem:[%s331 + $0x3d8] sm:$0xff]
        %v463 = vld [vmem:[%s331 + $0x3e0] sm:$0xff]
        %v464 = vld [vmem:[%s331 + $0x3e8] sm:$0xff]
        %v465 = vld [vmem:[%s331 + $0x3f0] sm:$0xff]
        %v466 = vld [vmem:[%s331 + $0x3f8] sm:$0xff]
        %v467 = vld [vmem:[%s331 + $0x400] sm:$0xff]
        %v468 = vld [vmem:[%s331 + $0x408] sm:$0xff]
        %v469 = vld [vmem:[%s331 + $0x410] sm:$0xff]
        %v470 = vld [vmem:[%s331 + $0x418] sm:$0xff]
        %v471 = vld [vmem:[%s331 + $0x420] sm:$0xff]
        %v472 = vld [vmem:[%s331 + $0x428] sm:$0xff]
        %v473 = vld [vmem:[%s331 + $0x430] sm:$0xff]
        %v474 = vld [vmem:[%s331 + $0x438] sm:$0xff]
        %v475 = vld [vmem:[%s331 + $0x440] sm:$0xff]
        %v476 = vld [vmem:[%s331 + $0x448] sm:$0xff]
        %v477 = vld [vmem:[%s331 + $0x450] sm:$0xff]
        %v478 = vld [vmem:[%s331 + $0x458] sm:$0xff]
        %v479 = vld [vmem:[%s331 + $0x460] sm:$0xff]
        %v480 = vld [vmem:[%s331 + $0x468] sm:$0xff]
        %v481 = vld [vmem:[%s331 + $0x470] sm:$0xff]
        %v482 = vld [vmem:[%s331 + $0x478] sm:$0xff]
        %v483 = vld [vmem:[%s331 + $0x480] sm:$0xff]
        %v484 = vld [vmem:[%s331 + $0x488] sm:$0xff]
        %v485 = vld [vmem:[%s331 + $0x490] sm:$0xff]
        %v486 = vld [vmem:[%s331 + $0x498] sm:$0xff]
        %v487 = vld [vmem:[%s331 + $0x4a0] sm:$0xff]
        %v488 = vld [vmem:[%s331 + $0x4a8] sm:$0xff]
        %v489 = vld [vmem:[%s331 + $0x4b0] sm:$0xff]
        %v490 = vld [vmem:[%s331 + $0x4b8] sm:$0xff]
        %v491 = vld [vmem:[%s331 + $0x4c0] sm:$0xff]
        %v492 = vld [vmem:[%s331 + $0x4c8] sm:$0xff]
        %v493 = vld [vmem:[%s331 + $0x4d0] sm:$0xff]
        %v494 = vld [vmem:[%s331 + $0x4d8] sm:$0xff]
        %v495 = vld [vmem:[%s331 + $0x4e0] sm:$0xff]
        %v496 = vld [vmem:[%s331 + $0x4e8] sm:$0xff]
        %v497 = vld [vmem:[%s331 + $0x4f0] sm:$0xff]
        %v498 = vld [vmem:[%s331 + $0x4f8] sm:$0xff]
        %v499 = vld [vmem:[%s331 + $0x500] sm:$0xff]
        %v500 = vld [vmem:[%s331 + $0x508] sm:$0xff]
        %v501 = vld [vmem:[%s331 + $0x510] sm:$0xff]
        %v502 = vld [vmem:[%s331 + $0x518] sm:$0xff]
        %v503 = vld [vmem:[%s331 + $0x520] sm:$0xff]
        %v504 = vld [vmem:[%s331 + $0x528] sm:$0xff]
        %v505 = vld [vmem:[%s331 + $0x530] sm:$0xff]
        %v506 = vld [vmem:[%s331 + $0x538] sm:$0xff]
        %v507 = vld [vmem:[%s331 + $0x540] sm:$0xff]
        %v508 = vld [vmem:[%s331 + $0x548] sm:$0xff]
        %v509 = vld [vmem:[%s331 + $0x550] sm:$0xff]
        %v510 = vld [vmem:[%s331 + $0x558] sm:$0xff]
        %v511 = vld [vmem:[%s331 + $0x560] sm:$0xff]
        %v512 = vld [vmem:[%s331 + $0x568] sm:$0xff]
        %v513 = vld [vmem:[%s331 + $0x570] sm:$0xff]
        %v514 = vld [vmem:[%s331 + $0x578] sm:$0xff]
        %v515 = vld [vmem:[%s331 + $0x580] sm:$0xff]
        %v516 = vld [vmem:[%s331 + $0x588] sm:$0xff]
        %v517 = vld [vmem:[%s331 + $0x590] sm:$0xff]
        %v518 = vld [vmem:[%s331 + $0x598] sm:$0xff]
        %v519 = vld [vmem:[%s331 + $0x5a0] sm:$0xff]
        %v520 = vld [vmem:[%s331 + $0x5a8] sm:$0xff]
        %v521 = vld [vmem:[%s331 + $0x5b0] sm:$0xff]
        %v522 = vld [vmem:[%s331 + $0x5b8] sm:$0xff]
        %v523 = vld [vmem:[%s331 + $0x5c0] sm:$0xff]
        %v524 = vld [vmem:[%s331 + $0x5c8] sm:$0xff]
        %v525 = vld [vmem:[%s331 + $0x5d0] sm:$0xff]
        %v526 = vld [vmem:[%s331 + $0x5d8] sm:$0xff]
        %v527 = vld [vmem:[%s331 + $0x5e0] sm:$0xff]
        %v528 = vld [vmem:[%s331 + $0x5e8] sm:$0xff]
        %v529 = vld [vmem:[%s331 + $0x5f0] sm:$0xff]
        %v530 = vld [vmem:[%s331 + $0x5f8] sm:$0xff]
        %v531 = vld [vmem:[%s331 + $0x600] sm:$0xff]
        %v532 = vld [vmem:[%s331 + $0x608] sm:$0xff]
        %v533 = vld [vmem:[%s331 + $0x610] sm:$0xff]
        %v534 = vld [vmem:[%s331 + $0x618] sm:$0xff]
        %v535 = vld [vmem:[%s331 + $0x620] sm:$0xff]
        %v536 = vld [vmem:[%s331 + $0x628] sm:$0xff]
        %v537 = vld [vmem:[%s331 + $0x630] sm:$0xff]
        %v538 = vld [vmem:[%s331 + $0x638] sm:$0xff]
        %v539 = vld [vmem:[%s331 + $0x640] sm:$0xff]
        %v540 = vld [vmem:[%s331 + $0x648] sm:$0xff]
        %v541 = vld [vmem:[%s331 + $0x650] sm:$0xff]
        %v542 = vld [vmem:[%s331 + $0x658] sm:$0xff]
        %v543 = vld [vmem:[%s331 + $0x660] sm:$0xff]
        %v544 = vld [vmem:[%s331 + $0x668] sm:$0xff]
        %v545 = vld [vmem:[%s331 + $0x670] sm:$0xff]
        %v546 = vld [vmem:[%s331 + $0x678] sm:$0xff]
        %v547 = vld [vmem:[%s331 + $0x680] sm:$0xff]
        %v548 = vld [vmem:[%s331 + $0x688] sm:$0xff]
        %v549 = vld [vmem:[%s331 + $0x690] sm:$0xff]
        %v550 = vld [vmem:[%s331 + $0x698] sm:$0xff]
        %v551 = vld [vmem:[%s331 + $0x6a0] sm:$0xff]
        %v552 = vld [vmem:[%s331 + $0x6a8] sm:$0xff]
        %v553 = vld [vmem:[%s331 + $0x6b0] sm:$0xff]
        %v554 = vld [vmem:[%s331 + $0x6b8] sm:$0xff]
        %v555 = vld [vmem:[%s331 + $0x6c0] sm:$0xff]
        %v556 = vld [vmem:[%s331 + $0x6c8] sm:$0xff]
        %v557 = vld [vmem:[%s331 + $0x6d0] sm:$0xff]
        %v558 = vld [vmem:[%s331 + $0x6d8] sm:$0xff]
        %v559 = vld [vmem:[%s331 + $0x6e0] sm:$0xff]
        %v560 = vld [vmem:[%s331 + $0x6e8] sm:$0xff]
        %v561 = vld [vmem:[%s331 + $0x6f0] sm:$0xff]
        %v562 = vld [vmem:[%s331 + $0x6f8] sm:$0xff]
        %v563 = vld [vmem:[%s331 + $0x700] sm:$0xff]
        %v564 = vld [vmem:[%s331 + $0x708] sm:$0xff]
        %v565 = vld [vmem:[%s331 + $0x710] sm:$0xff]
        %v566 = vld [vmem:[%s331 + $0x718] sm:$0xff]
        %v567 = vld [vmem:[%s331 + $0x720] sm:$0xff]
        %v568 = vld [vmem:[%s331 + $0x728] sm:$0xff]
        %v569 = vld [vmem:[%s331 + $0x730] sm:$0xff]
        %v570 = vld [vmem:[%s331 + $0x738] sm:$0xff]
        %v571 = vld [vmem:[%s331 + $0x740] sm:$0xff]
        %v572 = vld [vmem:[%s331 + $0x748] sm:$0xff]
        %v573 = vld [vmem:[%s331 + $0x750] sm:$0xff]
        %v574 = vld [vmem:[%s331 + $0x758] sm:$0xff]
        %v575 = vld [vmem:[%s331 + $0x760] sm:$0xff]
        %v576 = vld [vmem:[%s331 + $0x768] sm:$0xff]
        %v577 = vld [vmem:[%s331 + $0x770] sm:$0xff]
        %v578 = vld [vmem:[%s331 + $0x778] sm:$0xff]
        %v579 = vld [vmem:[%s331 + $0x780] sm:$0xff]
        %v580 = vld [vmem:[%s331 + $0x788] sm:$0xff]
        %v581 = vld [vmem:[%s331 + $0x790] sm:$0xff]
        %v582 = vld [vmem:[%s331 + $0x798] sm:$0xff]
        %v583 = vld [vmem:[%s331 + $0x7a0] sm:$0xff]
        %v584 = vld [vmem:[%s331 + $0x7a8] sm:$0xff]
        %v585 = vld [vmem:[%s331 + $0x7b0] sm:$0xff]
        %v586 = vld [vmem:[%s331 + $0x7b8] sm:$0xff]
        %v587 = vld [vmem:[%s331 + $0x7c0] sm:$0xff]
        %v588 = vld [vmem:[%s331 + $0x7c8] sm:$0xff]
        %v589 = vld [vmem:[%s331 + $0x7d0] sm:$0xff]
        %v590 = vld [vmem:[%s331 + $0x7d8] sm:$0xff]
        %v591 = vld [vmem:[%s331 + $0x7e0] sm:$0xff]
        %v592 = vld [vmem:[%s331 + $0x7e8] sm:$0xff]
        %v593 = vld [vmem:[%s331 + $0x7f0] sm:$0xff]
        %v594 = vld [vmem:[%s331 + $0x7f8] sm:$0xff]
        %v595 = vpack.c.bf16 %v340, %v339
        %v596 = vpack.c.bf16 %v342, %v341
        %v597 = vpack.c.bf16 %v344, %v343
        %v598 = vpack.c.bf16 %v346, %v345
        %v599 = vpack.c.bf16 %v348, %v347
        %v600 = vpack.c.bf16 %v350, %v349
        %v601 = vpack.c.bf16 %v352, %v351
        %v602 = vpack.c.bf16 %v354, %v353
        %v603 = vpack.c.bf16 %v356, %v355
        %v604 = vpack.c.bf16 %v358, %v357
        %v605 = vpack.c.bf16 %v360, %v359
        %v606 = vpack.c.bf16 %v362, %v361
        %v607 = vpack.c.bf16 %v364, %v363
        %v608 = vpack.c.bf16 %v366, %v365
        %v609 = vpack.c.bf16 %v368, %v367
        %v610 = vpack.c.bf16 %v370, %v369
        %v611 = vpack.c.bf16 %v372, %v371
        %v612 = vpack.c.bf16 %v374, %v373
        %v613 = vpack.c.bf16 %v376, %v375
        %v614 = vpack.c.bf16 %v378, %v377
        %v615 = vpack.c.bf16 %v380, %v379
        %v616 = vpack.c.bf16 %v382, %v381
        %v617 = vpack.c.bf16 %v384, %v383
        %v618 = vpack.c.bf16 %v386, %v385
        %v619 = vpack.c.bf16 %v388, %v387
        %v620 = vpack.c.bf16 %v390, %v389
        %v621 = vpack.c.bf16 %v392, %v391
        %v622 = vpack.c.bf16 %v394, %v393
        %v623 = vpack.c.bf16 %v396, %v395
        %v624 = vpack.c.bf16 %v398, %v397
        %v625 = vpack.c.bf16 %v400, %v399
        %v626 = vpack.c.bf16 %v402, %v401
        %v627 = vpack.c.bf16 %v404, %v403
        %v628 = vpack.c.bf16 %v406, %v405
        %v629 = vpack.c.bf16 %v408, %v407
        %v630 = vpack.c.bf16 %v410, %v409
        %v631 = vpack.c.bf16 %v412, %v411
        %v632 = vpack.c.bf16 %v414, %v413
        %v633 = vpack.c.bf16 %v416, %v415
        %v634 = vpack.c.bf16 %v418, %v417
        %v635 = vpack.c.bf16 %v420, %v419
        %v636 = vpack.c.bf16 %v422, %v421
        %v637 = vpack.c.bf16 %v424, %v423
        %v638 = vpack.c.bf16 %v426, %v425
        %v639 = vpack.c.bf16 %v428, %v427
        %v640 = vpack.c.bf16 %v430, %v429
        %v641 = vpack.c.bf16 %v432, %v431
        %v642 = vpack.c.bf16 %v434, %v433
        %v643 = vpack.c.bf16 %v436, %v435
        %v644 = vpack.c.bf16 %v438, %v437
        %v645 = vpack.c.bf16 %v440, %v439
        %v646 = vpack.c.bf16 %v442, %v441
        %v647 = vpack.c.bf16 %v444, %v443
        %v648 = vpack.c.bf16 %v446, %v445
        %v649 = vpack.c.bf16 %v448, %v447
        %v650 = vpack.c.bf16 %v450, %v449
        %v651 = vpack.c.bf16 %v452, %v451
        %v652 = vpack.c.bf16 %v454, %v453
        %v653 = vpack.c.bf16 %v456, %v455
        %v654 = vpack.c.bf16 %v458, %v457
        %v655 = vpack.c.bf16 %v460, %v459
        %v656 = vpack.c.bf16 %v462, %v461
        %v657 = vpack.c.bf16 %v464, %v463
        %v658 = vpack.c.bf16 %v466, %v465
        %v659 = vpack.c.bf16 %v468, %v467
        %v660 = vpack.c.bf16 %v470, %v469
        %v661 = vpack.c.bf16 %v472, %v471
        %v662 = vpack.c.bf16 %v474, %v473
        %v663 = vpack.c.bf16 %v476, %v475
        %v664 = vpack.c.bf16 %v478, %v477
        %v665 = vpack.c.bf16 %v480, %v479
        %v666 = vpack.c.bf16 %v482, %v481
        %v667 = vpack.c.bf16 %v484, %v483
        %v668 = vpack.c.bf16 %v486, %v485
        %v669 = vpack.c.bf16 %v488, %v487
        %v670 = vpack.c.bf16 %v490, %v489
        %v671 = vpack.c.bf16 %v492, %v491
        %v672 = vpack.c.bf16 %v494, %v493
        %v673 = vpack.c.bf16 %v496, %v495
        %v674 = vpack.c.bf16 %v498, %v497
        %v675 = vpack.c.bf16 %v500, %v499
        %v676 = vpack.c.bf16 %v502, %v501
        %v677 = vpack.c.bf16 %v504, %v503
        %v678 = vpack.c.bf16 %v506, %v505
        %v679 = vpack.c.bf16 %v508, %v507
        %v680 = vpack.c.bf16 %v510, %v509
        %v681 = vpack.c.bf16 %v512, %v511
        %v682 = vpack.c.bf16 %v514, %v513
        %v683 = vpack.c.bf16 %v516, %v515
        %v684 = vpack.c.bf16 %v518, %v517
        %v685 = vpack.c.bf16 %v520, %v519
        %v686 = vpack.c.bf16 %v522, %v521
        %v687 = vpack.c.bf16 %v524, %v523
        %v688 = vpack.c.bf16 %v526, %v525
        %v689 = vpack.c.bf16 %v528, %v527
        %v690 = vpack.c.bf16 %v530, %v529
        %v691 = vpack.c.bf16 %v532, %v531
        %v692 = vpack.c.bf16 %v534, %v533
        %v693 = vpack.c.bf16 %v536, %v535
        %v694 = vpack.c.bf16 %v538, %v537
        %v695 = vpack.c.bf16 %v540, %v539
        %v696 = vpack.c.bf16 %v542, %v541
        %v697 = vpack.c.bf16 %v544, %v543
        %v698 = vpack.c.bf16 %v546, %v545
        %v699 = vpack.c.bf16 %v548, %v547
        %v700 = vpack.c.bf16 %v550, %v549
        %v701 = vpack.c.bf16 %v552, %v551
        %v702 = vpack.c.bf16 %v554, %v553
        %v703 = vpack.c.bf16 %v556, %v555
        %v704 = vpack.c.bf16 %v558, %v557
        %v705 = vpack.c.bf16 %v560, %v559
        %v706 = vpack.c.bf16 %v562, %v561
        %v707 = vpack.c.bf16 %v564, %v563
        %v708 = vpack.c.bf16 %v566, %v565
        %v709 = vpack.c.bf16 %v568, %v567
        %v710 = vpack.c.bf16 %v570, %v569
        %v711 = vpack.c.bf16 %v572, %v571
        %v712 = vpack.c.bf16 %v574, %v573
        %v713 = vpack.c.bf16 %v576, %v575
        %v714 = vpack.c.bf16 %v578, %v577
        %v715 = vpack.c.bf16 %v580, %v579
        %v716 = vpack.c.bf16 %v582, %v581
        %v717 = vpack.c.bf16 %v584, %v583
        %v718 = vpack.c.bf16 %v586, %v585
        %v719 = vpack.c.bf16 %v588, %v587
        %v720 = vpack.c.bf16 %v590, %v589
        %v721 = vpack.c.bf16 %v592, %v591
        %v722 = vpack.c.bf16 %v594, %v593
        %v723 = vld [vmem:[%s2] sm:$0xff]
        %v724 = vld [vmem:[%s2 + $0x8] sm:$0xff]
        %v725 = vld [vmem:[%s2 + $0x10] sm:$0xff]
        %v726 = vld [vmem:[%s2 + $0x18] sm:$0xff]
        %728 = vset.pattern.permute.xlu0 0
        %729 = vperm.xlu0 %728, %v723
        %v730 = vpop.permute.xlu0 %729
        %733 = vset.pattern.permute.xlu0 0
        %734 = vperm.xlu0 %733, %v724
        %v735 = vpop.permute.xlu0 %734
        %738 = vset.pattern.permute.xlu0 0
        %739 = vperm.xlu0 %738, %v725
        %v740 = vpop.permute.xlu0 %739
        %743 = vset.pattern.permute.xlu0 0
        %744 = vperm.xlu0 %743, %v726
        %v745 = vpop.permute.xlu0 %744
        %v751 = vunpack.c.l.b16 %v335
        %v752 = vunpack.c.l.b16 %v336
        %v753 = vunpack.c.l.b16 %v337
        %v754 = vunpack.c.l.b16 %v338
        %v755 = vpack.c.b16 %v752, %v751
        %v756 = vpack.c.b16 %v754, %v753
        %vm757 = vcmask 64512
        %v759 = vsel %vm757, %v755, 0
        %v762 = vsel %vm757, %v756, 0
        %v765 = vsel %vm757, %v595, 0
        %v768 = vsel %vm757, %v596, 0
        %v771 = vsel %vm757, %v597, 0
        %v774 = vsel %vm757, %v598, 0
        %v777 = vsel %vm757, %v599, 0
        %v780 = vsel %vm757, %v600, 0
        %v783 = vsel %vm757, %v601, 0
        %v786 = vsel %vm757, %v602, 0
        %v789 = vsel %vm757, %v603, 0
        %v792 = vsel %vm757, %v604, 0
        %v795 = vsel %vm757, %v605, 0
        %v798 = vsel %vm757, %v606, 0
        %v801 = vsel %vm757, %v607, 0
        %v804 = vsel %vm757, %v608, 0
        %v807 = vsel %vm757, %v609, 0
        %v810 = vsel %vm757, %v610, 0
        %v813 = vsel %vm757, %v611, 0
        %v816 = vsel %vm757, %v612, 0
        %v819 = vsel %vm757, %v613, 0
        %v822 = vsel %vm757, %v614, 0
        %v825 = vsel %vm757, %v615, 0
        %v828 = vsel %vm757, %v616, 0
        %v831 = vsel %vm757, %v617, 0
        %v834 = vsel %vm757, %v618, 0
        %v837 = vsel %vm757, %v619, 0
        %v840 = vsel %vm757, %v620, 0
        %v843 = vsel %vm757, %v621, 0
        %v846 = vsel %vm757, %v622, 0
        %v849 = vsel %vm757, %v623, 0
        %v852 = vsel %vm757, %v624, 0
        %v855 = vsel %vm757, %v625, 0
        %v858 = vsel %vm757, %v626, 0
        %v861 = vsel %vm757, %v627, 0
        %v864 = vsel %vm757, %v628, 0
        %v867 = vsel %vm757, %v629, 0
        %v870 = vsel %vm757, %v630, 0
        %v873 = vsel %vm757, %v631, 0
        %v876 = vsel %vm757, %v632, 0
        %v879 = vsel %vm757, %v633, 0
        %v882 = vsel %vm757, %v634, 0
        %v885 = vsel %vm757, %v635, 0
        %v888 = vsel %vm757, %v636, 0
        %v891 = vsel %vm757, %v637, 0
        %v894 = vsel %vm757, %v638, 0
        %v897 = vsel %vm757, %v639, 0
        %v900 = vsel %vm757, %v640, 0
        %v903 = vsel %vm757, %v641, 0
        %v906 = vsel %vm757, %v642, 0
        %v909 = vsel %vm757, %v643, 0
        %v912 = vsel %vm757, %v644, 0
        %v915 = vsel %vm757, %v645, 0
        %v918 = vsel %vm757, %v646, 0
        %v921 = vsel %vm757, %v647, 0
        %v924 = vsel %vm757, %v648, 0
        %v927 = vsel %vm757, %v649, 0
        %v930 = vsel %vm757, %v650, 0
        %v933 = vsel %vm757, %v651, 0
        %v936 = vsel %vm757, %v652, 0
        %v939 = vsel %vm757, %v653, 0
        %v942 = vsel %vm757, %v654, 0
        %v945 = vsel %vm757, %v655, 0
        %v948 = vsel %vm757, %v656, 0
        %v951 = vsel %vm757, %v657, 0
        %v954 = vsel %vm757, %v658, 0
        %v957 = vsel %vm757, %v659, 0
        %v960 = vsel %vm757, %v660, 0
        %v963 = vsel %vm757, %v661, 0
        %v966 = vsel %vm757, %v662, 0
        %v969 = vsel %vm757, %v663, 0
        %v972 = vsel %vm757, %v664, 0
        %v975 = vsel %vm757, %v665, 0
        %v978 = vsel %vm757, %v666, 0
        %v981 = vsel %vm757, %v667, 0
        %v984 = vsel %vm757, %v668, 0
        %v987 = vsel %vm757, %v669, 0
        %v990 = vsel %vm757, %v670, 0
        %v993 = vsel %vm757, %v671, 0
        %v996 = vsel %vm757, %v672, 0
        %v999 = vsel %vm757, %v673, 0
        %v1002 = vsel %vm757, %v674, 0
        %v1005 = vsel %vm757, %v675, 0
        %v1008 = vsel %vm757, %v676, 0
        %v1011 = vsel %vm757, %v677, 0
        %v1014 = vsel %vm757, %v678, 0
        %v1017 = vsel %vm757, %v679, 0
        %v1020 = vsel %vm757, %v680, 0
        %v1023 = vsel %vm757, %v681, 0
        %v1026 = vsel %vm757, %v682, 0
        %v1029 = vsel %vm757, %v683, 0
        %v1032 = vsel %vm757, %v684, 0
        %v1035 = vsel %vm757, %v685, 0
        %v1038 = vsel %vm757, %v686, 0
        %v1041 = vsel %vm757, %v687, 0
        %v1044 = vsel %vm757, %v688, 0
        %v1047 = vsel %vm757, %v689, 0
        %v1050 = vsel %vm757, %v690, 0
        %v1053 = vsel %vm757, %v691, 0
        %v1056 = vsel %vm757, %v692, 0
        %v1059 = vsel %vm757, %v693, 0
        %v1062 = vsel %vm757, %v694, 0
        %v1065 = vsel %vm757, %v695, 0
        %v1068 = vsel %vm757, %v696, 0
        %v1071 = vsel %vm757, %v697, 0
        %v1074 = vsel %vm757, %v698, 0
        %v1077 = vsel %vm757, %v699, 0
        %v1080 = vsel %vm757, %v700, 0
        %v1083 = vsel %vm757, %v701, 0
        %v1086 = vsel %vm757, %v702, 0
        %v1089 = vsel %vm757, %v703, 0
        %v1092 = vsel %vm757, %v704, 0
        %v1095 = vsel %vm757, %v705, 0
        %v1098 = vsel %vm757, %v706, 0
        %v1101 = vsel %vm757, %v707, 0
        %v1104 = vsel %vm757, %v708, 0
        %v1107 = vsel %vm757, %v709, 0
        %v1110 = vsel %vm757, %v710, 0
        %v1113 = vsel %vm757, %v711, 0
        %v1116 = vsel %vm757, %v712, 0
        %v1119 = vsel %vm757, %v713, 0
        %v1122 = vsel %vm757, %v714, 0
        %v1125 = vsel %vm757, %v715, 0
        %v1128 = vsel %vm757, %v716, 0
        %v1131 = vsel %vm757, %v717, 0
        %v1134 = vsel %vm757, %v718, 0
        %v1137 = vsel %vm757, %v719, 0
        %v1140 = vsel %vm757, %v720, 0
        %v1143 = vsel %vm757, %v721, 0
        %v1146 = vsel %vm757, %v722, 0
        %1148 = vmatprep.subr.bf16.mxu0 0
        %1149 = vmatpush1.bf16.xpose.msra.mxu0 %v765
        %1150 = vmatprep.subr.bf16.mxu0 0
        %1151 = vmatpush1.bf16.xpose.msra.mxu0 %v768
        %1152 = vmatprep.subr.bf16.mxu0 0
        %1153 = vmatpush1.bf16.xpose.msra.mxu0 %v771
        %1154 = vmatprep.subr.bf16.mxu0 0
        %1155 = vmatpush1.bf16.xpose.msra.mxu0 %v774
        %1156 = vmatprep.subr.bf16.mxu0 0
        %1157 = vmatpush1.bf16.xpose.msra.mxu0 %v777
        %1158 = vmatprep.subr.bf16.mxu0 0
        %1159 = vmatpush1.bf16.xpose.msra.mxu0 %v780
        %1160 = vmatprep.subr.bf16.mxu0 0
        %1161 = vmatpush1.bf16.xpose.msra.mxu0 %v783
        %1162 = vmatprep.subr.bf16.mxu0 0
        %1163 = vmatpush1.bf16.xpose.msra.mxu0 %v786
        %1164 = vmatprep.subr.bf16.mxu0 0
        %1165 = vmatpush1.bf16.xpose.msra.mxu0 %v789
        %1166 = vmatprep.subr.bf16.mxu0 0
        %1167 = vmatpush1.bf16.xpose.msra.mxu0 %v792
        %1168 = vmatprep.subr.bf16.mxu0 0
        %1169 = vmatpush1.bf16.xpose.msra.mxu0 %v795
        %1170 = vmatprep.subr.bf16.mxu0 0
        %1171 = vmatpush1.bf16.xpose.msra.mxu0 %v798
        %1172 = vmatprep.subr.bf16.mxu0 0
        %1173 = vmatpush1.bf16.xpose.msra.mxu0 %v801
        %1174 = vmatprep.subr.bf16.mxu0 0
        %1175 = vmatpush1.bf16.xpose.msra.mxu0 %v804
        %1176 = vmatprep.subr.bf16.mxu0 0
        %1177 = vmatpush1.bf16.xpose.msra.mxu0 %v807
        %1178 = vmatprep.subr.bf16.mxu0 0
        %1179 = vmatpush1.bf16.xpose.msra.mxu0 %v810
        %1180 = vmatprep.mubr.bf16.mxu0 0
        %1181 = vmatmul.mubr.bf16.gmra.mrb[0].mxu0 %v759
        %v1182 = vpop.f32.mrb[0].mxu0
        %v1183 = vadd.f32 %v730, %v1182
        %v1184 = vpop.f32.mrb[0].mxu0
        %v1185 = vadd.f32 %v730, %v1184
        %v1186 = vpop.f32.mrb[0].mxu0
        %v1187 = vadd.f32 %v735, %v1186
        %v1188 = vpop.f32.mrb[0].mxu0
        %v1189 = vadd.f32 %v735, %v1188
        %1190 = vmatprep.mubr.bf16.mxu0 0
        %1191 = vmatmul.mubr.bf16.gmra.mrb[0].mxu0 %v762
        %v1192 = vpop.f32.mrb[0].mxu0
        %v1193 = vadd.f32 %v740, %v1192
        %v1194 = vpop.f32.mrb[0].mxu0
        %v1195 = vadd.f32 %v740, %v1194
        %v1196 = vpop.f32.mrb[0].mxu0
        %v1197 = vadd.f32 %v745, %v1196
        %v1198 = vpop.f32.mrb[0].mxu0
        %v1199 = vadd.f32 %v745, %v1198
        %1200 = vdwg.mxu0
        %1201 = vmatprep.subr.bf16.mxu0 0
        %1202 = vmatpush1.bf16.xpose.msra.mxu0 %v813
        %1203 = vmatprep.subr.bf16.mxu0 0
        %1204 = vmatpush1.bf16.xpose.msra.mxu0 %v816
        %1205 = vmatprep.subr.bf16.mxu0 0
        %1206 = vmatpush1.bf16.xpose.msra.mxu0 %v819
        %1207 = vmatprep.subr.bf16.mxu0 0
        %1208 = vmatpush1.bf16.xpose.msra.mxu0 %v822
        %1209 = vmatprep.subr.bf16.mxu0 0
        %1210 = vmatpush1.bf16.xpose.msra.mxu0 %v825
        %1211 = vmatprep.subr.bf16.mxu0 0
        %1212 = vmatpush1.bf16.xpose.msra.mxu0 %v828
        %1213 = vmatprep.subr.bf16.mxu0 0
        %1214 = vmatpush1.bf16.xpose.msra.mxu0 %v831
        %1215 = vmatprep.subr.bf16.mxu0 0
        %1216 = vmatpush1.bf16.xpose.msra.mxu0 %v834
        %1217 = vmatprep.subr.bf16.mxu0 0
        %1218 = vmatpush1.bf16.xpose.msra.mxu0 %v837
        %1219 = vmatprep.subr.bf16.mxu0 0
        %1220 = vmatpush1.bf16.xpose.msra.mxu0 %v840
        %1221 = vmatprep.subr.bf16.mxu0 0
        %1222 = vmatpush1.bf16.xpose.msra.mxu0 %v843
        %1223 = vmatprep.subr.bf16.mxu0 0
        %1224 = vmatpush1.bf16.xpose.msra.mxu0 %v846
        %1225 = vmatprep.subr.bf16.mxu0 0
        %1226 = vmatpush1.bf16.xpose.msra.mxu0 %v849
        %1227 = vmatprep.subr.bf16.mxu0 0
        %1228 = vmatpush1.bf16.xpose.msra.mxu0 %v852
        %1229 = vmatprep.subr.bf16.mxu0 0
        %1230 = vmatpush1.bf16.xpose.msra.mxu0 %v855
        %1231 = vmatprep.subr.bf16.mxu0 0
        %1232 = vmatpush1.bf16.xpose.msra.mxu0 %v858
        %1233 = vmatprep.mubr.bf16.mxu0 0
        %1234 = vmatmul.mubr.bf16.gmra.mrb[0].mxu0 %v759
        %v1235 = vpop.f32.mrb[0].mxu0
        %v1236 = vadd.f32 %v730, %v1235
        %v1237 = vpop.f32.mrb[0].mxu0
        %v1238 = vadd.f32 %v730, %v1237
        %v1239 = vpop.f32.mrb[0].mxu0
        %v1240 = vadd.f32 %v735, %v1239
        %v1241 = vpop.f32.mrb[0].mxu0
        %v1242 = vadd.f32 %v735, %v1241
        %1243 = vmatprep.mubr.bf16.mxu0 0
        %1244 = vmatmul.mubr.bf16.gmra.mrb[0].mxu0 %v762
        %v1245 = vpop.f32.mrb[0].mxu0
        %v1246 = vadd.f32 %v740, %v1245
        %v1247 = vpop.f32.mrb[0].mxu0
        %v1248 = vadd.f32 %v740, %v1247
        %v1249 = vpop.f32.mrb[0].mxu0
        %v1250 = vadd.f32 %v745, %v1249
        %v1251 = vpop.f32.mrb[0].mxu0
        %v1252 = vadd.f32 %v745, %v1251
        %1253 = vdwg.mxu0
        %1254 = vmatprep.subr.bf16.mxu0 0
        %1255 = vmatpush1.bf16.xpose.msra.mxu0 %v861
        %1256 = vmatprep.subr.bf16.mxu0 0
        %1257 = vmatpush1.bf16.xpose.msra.mxu0 %v864
        %1258 = vmatprep.subr.bf16.mxu0 0
        %1259 = vmatpush1.bf16.xpose.msra.mxu0 %v867
        %1260 = vmatprep.subr.bf16.mxu0 0
        %1261 = vmatpush1.bf16.xpose.msra.mxu0 %v870
        %1262 = vmatprep.subr.bf16.mxu0 0
        %1263 = vmatpush1.bf16.xpose.msra.mxu0 %v873
        %1264 = vmatprep.subr.bf16.mxu0 0
        %1265 = vmatpush1.bf16.xpose.msra.mxu0 %v876
        %1266 = vmatprep.subr.bf16.mxu0 0
        %1267 = vmatpush1.bf16.xpose.msra.mxu0 %v879
        %1268 = vmatprep.subr.bf16.mxu0 0
        %1269 = vmatpush1.bf16.xpose.msra.mxu0 %v882
        %1270 = vmatprep.subr.bf16.mxu0 0
        %1271 = vmatpush1.bf16.xpose.msra.mxu0 %v885
        %1272 = vmatprep.subr.bf16.mxu0 0
        %1273 = vmatpush1.bf16.xpose.msra.mxu0 %v888
        %1274 = vmatprep.subr.bf16.mxu0 0
        %1275 = vmatpush1.bf16.xpose.msra.mxu0 %v891
        %1276 = vmatprep.subr.bf16.mxu0 0
        %1277 = vmatpush1.bf16.xpose.msra.mxu0 %v894
        %1278 = vmatprep.subr.bf16.mxu0 0
        %1279 = vmatpush1.bf16.xpose.msra.mxu0 %v897
        %1280 = vmatprep.subr.bf16.mxu0 0
        %1281 = vmatpush1.bf16.xpose.msra.mxu0 %v900
        %1282 = vmatprep.subr.bf16.mxu0 0
        %1283 = vmatpush1.bf16.xpose.msra.mxu0 %v903
        %1284 = vmatprep.subr.bf16.mxu0 0
        %1285 = vmatpush1.bf16.xpose.msra.mxu0 %v906
        %1286 = vmatprep.mubr.bf16.mxu0 0
        %1287 = vmatmul.mubr.bf16.gmra.mrb[0].mxu0 %v759
        %v1288 = vpop.f32.mrb[0].mxu0
        %v1289 = vadd.f32 %v730, %v1288
        %v1290 = vpop.f32.mrb[0].mxu0
        %v1291 = vadd.f32 %v730, %v1290
        %v1292 = vpop.f32.mrb[0].mxu0
        %v1293 = vadd.f32 %v735, %v1292
        %v1294 = vpop.f32.mrb[0].mxu0
        %v1295 = vadd.f32 %v735, %v1294
        %1296 = vmatprep.mubr.bf16.mxu0 0
        %1297 = vmatmul.mubr.bf16.gmra.mrb[0].mxu0 %v762
        %v1298 = vpop.f32.mrb[0].mxu0
        %v1299 = vadd.f32 %v740, %v1298
        %v1300 = vpop.f32.mrb[0].mxu0
        %v1301 = vadd.f32 %v740, %v1300
        %v1302 = vpop.f32.mrb[0].mxu0
        %v1303 = vadd.f32 %v745, %v1302
        %v1304 = vpop.f32.mrb[0].mxu0
        %v1305 = vadd.f32 %v745, %v1304
        %1306 = vdwg.mxu0
        %1307 = vmatprep.subr.bf16.mxu0 0
        %1308 = vmatpush1.bf16.xpose.msra.mxu0 %v909
        %1309 = vmatprep.subr.bf16.mxu0 0
        %1310 = vmatpush1.bf16.xpose.msra.mxu0 %v912
        %1311 = vmatprep.subr.bf16.mxu0 0
        %1312 = vmatpush1.bf16.xpose.msra.mxu0 %v915
        %1313 = vmatprep.subr.bf16.mxu0 0
        %1314 = vmatpush1.bf16.xpose.msra.mxu0 %v918
        %1315 = vmatprep.subr.bf16.mxu0 0
        %1316 = vmatpush1.bf16.xpose.msra.mxu0 %v921
        %1317 = vmatprep.subr.bf16.mxu0 0
        %1318 = vmatpush1.bf16.xpose.msra.mxu0 %v924
        %1319 = vmatprep.subr.bf16.mxu0 0
        %1320 = vmatpush1.bf16.xpose.msra.mxu0 %v927
        %1321 = vmatprep.subr.bf16.mxu0 0
        %1322 = vmatpush1.bf16.xpose.msra.mxu0 %v930
        %1323 = vmatprep.subr.bf16.mxu0 0
        %1324 = vmatpush1.bf16.xpose.msra.mxu0 %v933
        %1325 = vmatprep.subr.bf16.mxu0 0
        %1326 = vmatpush1.bf16.xpose.msra.mxu0 %v936
        %1327 = vmatprep.subr.bf16.mxu0 0
        %1328 = vmatpush1.bf16.xpose.msra.mxu0 %v939
        %1329 = vmatprep.subr.bf16.mxu0 0
        %1330 = vmatpush1.bf16.xpose.msra.mxu0 %v942
        %1331 = vmatprep.subr.bf16.mxu0 0
        %1332 = vmatpush1.bf16.xpose.msra.mxu0 %v945
        %1333 = vmatprep.subr.bf16.mxu0 0
        %1334 = vmatpush1.bf16.xpose.msra.mxu0 %v948
        %1335 = vmatprep.subr.bf16.mxu0 0
        %1336 = vmatpush1.bf16.xpose.msra.mxu0 %v951
        %1337 = vmatprep.subr.bf16.mxu0 0
        %1338 = vmatpush1.bf16.xpose.msra.mxu0 %v954
        %1339 = vmatprep.mubr.bf16.mxu0 0
        %1340 = vmatmul.mubr.bf16.gmra.mrb[0].mxu0 %v759
        %v1341 = vpop.f32.mrb[0].mxu0
        %v1342 = vadd.f32 %v730, %v1341
        %v1343 = vpop.f32.mrb[0].mxu0
        %v1344 = vadd.f32 %v730, %v1343
        %v1345 = vpop.f32.mrb[0].mxu0
        %v1346 = vadd.f32 %v735, %v1345
        %v1347 = vpop.f32.mrb[0].mxu0
        %v1348 = vadd.f32 %v735, %v1347
        %1349 = vmatprep.mubr.bf16.mxu0 0
        %1350 = vmatmul.mubr.bf16.gmra.mrb[0].mxu0 %v762
        %v1351 = vpop.f32.mrb[0].mxu0
        %v1352 = vadd.f32 %v740, %v1351
        %v1353 = vpop.f32.mrb[0].mxu0
        %v1354 = vadd.f32 %v740, %v1353
        %v1355 = vpop.f32.mrb[0].mxu0
        %v1356 = vadd.f32 %v745, %v1355
        %v1357 = vpop.f32.mrb[0].mxu0
        %v1358 = vadd.f32 %v745, %v1357
        %1359 = vdwg.mxu0
        %1360 = vmatprep.subr.bf16.mxu0 0
        %1361 = vmatpush1.bf16.xpose.msra.mxu0 %v957
        %1362 = vmatprep.subr.bf16.mxu0 0
        %1363 = vmatpush1.bf16.xpose.msra.mxu0 %v960
        %1364 = vmatprep.subr.bf16.mxu0 0
        %1365 = vmatpush1.bf16.xpose.msra.mxu0 %v963
        %1366 = vmatprep.subr.bf16.mxu0 0
        %1367 = vmatpush1.bf16.xpose.msra.mxu0 %v966
        %1368 = vmatprep.subr.bf16.mxu0 0
        %1369 = vmatpush1.bf16.xpose.msra.mxu0 %v969
        %1370 = vmatprep.subr.bf16.mxu0 0
        %1371 = vmatpush1.bf16.xpose.msra.mxu0 %v972
        %1372 = vmatprep.subr.bf16.mxu0 0
        %1373 = vmatpush1.bf16.xpose.msra.mxu0 %v975
        %1374 = vmatprep.subr.bf16.mxu0 0
        %1375 = vmatpush1.bf16.xpose.msra.mxu0 %v978
        %1376 = vmatprep.subr.bf16.mxu0 0
        %1377 = vmatpush1.bf16.xpose.msra.mxu0 %v981
        %1378 = vmatprep.subr.bf16.mxu0 0
        %1379 = vmatpush1.bf16.xpose.msra.mxu0 %v984
        %1380 = vmatprep.subr.bf16.mxu0 0
        %1381 = vmatpush1.bf16.xpose.msra.mxu0 %v987
        %1382 = vmatprep.subr.bf16.mxu0 0
        %1383 = vmatpush1.bf16.xpose.msra.mxu0 %v990
        %1384 = vmatprep.subr.bf16.mxu0 0
        %1385 = vmatpush1.bf16.xpose.msra.mxu0 %v993
        %1386 = vmatprep.subr.bf16.mxu0 0
        %1387 = vmatpush1.bf16.xpose.msra.mxu0 %v996
        %1388 = vmatprep.subr.bf16.mxu0 0
        %1389 = vmatpush1.bf16.xpose.msra.mxu0 %v999
        %1390 = vmatprep.subr.bf16.mxu0 0
        %1391 = vmatpush1.bf16.xpose.msra.mxu0 %v1002
        %1392 = vmatprep.mubr.bf16.mxu0 0
        %1393 = vmatmul.mubr.bf16.gmra.mrb[0].mxu0 %v759
        %v1394 = vpop.f32.mrb[0].mxu0
        %v1395 = vadd.f32 %v730, %v1394
        %v1396 = vpop.f32.mrb[0].mxu0
        %v1397 = vadd.f32 %v730, %v1396
        %v1398 = vpop.f32.mrb[0].mxu0
        %v1399 = vadd.f32 %v735, %v1398
        %v1400 = vpop.f32.mrb[0].mxu0
        %v1401 = vadd.f32 %v735, %v1400
        %1402 = vmatprep.mubr.bf16.mxu0 0
        %1403 = vmatmul.mubr.bf16.gmra.mrb[0].mxu0 %v762
        %v1404 = vpop.f32.mrb[0].mxu0
        %v1405 = vadd.f32 %v740, %v1404
        %v1406 = vpop.f32.mrb[0].mxu0
        %v1407 = vadd.f32 %v740, %v1406
        %v1408 = vpop.f32.mrb[0].mxu0
        %v1409 = vadd.f32 %v745, %v1408
        %v1410 = vpop.f32.mrb[0].mxu0
        %v1411 = vadd.f32 %v745, %v1410
        %1412 = vdwg.mxu0
        %1413 = vmatprep.subr.bf16.mxu0 0
        %1414 = vmatpush1.bf16.xpose.msra.mxu0 %v1005
        %1415 = vmatprep.subr.bf16.mxu0 0
        %1416 = vmatpush1.bf16.xpose.msra.mxu0 %v1008
        %1417 = vmatprep.subr.bf16.mxu0 0
        %1418 = vmatpush1.bf16.xpose.msra.mxu0 %v1011
        %1419 = vmatprep.subr.bf16.mxu0 0
        %1420 = vmatpush1.bf16.xpose.msra.mxu0 %v1014
        %1421 = vmatprep.subr.bf16.mxu0 0
        %1422 = vmatpush1.bf16.xpose.msra.mxu0 %v1017
        %1423 = vmatprep.subr.bf16.mxu0 0
        %1424 = vmatpush1.bf16.xpose.msra.mxu0 %v1020
        %1425 = vmatprep.subr.bf16.mxu0 0
        %1426 = vmatpush1.bf16.xpose.msra.mxu0 %v1023
        %1427 = vmatprep.subr.bf16.mxu0 0
        %1428 = vmatpush1.bf16.xpose.msra.mxu0 %v1026
        %1429 = vmatprep.subr.bf16.mxu0 0
        %1430 = vmatpush1.bf16.xpose.msra.mxu0 %v1029
        %1431 = vmatprep.subr.bf16.mxu0 0
        %1432 = vmatpush1.bf16.xpose.msra.mxu0 %v1032
        %1433 = vmatprep.subr.bf16.mxu0 0
        %1434 = vmatpush1.bf16.xpose.msra.mxu0 %v1035
        %1435 = vmatprep.subr.bf16.mxu0 0
        %1436 = vmatpush1.bf16.xpose.msra.mxu0 %v1038
        %1437 = vmatprep.subr.bf16.mxu0 0
        %1438 = vmatpush1.bf16.xpose.msra.mxu0 %v1041
        %1439 = vmatprep.subr.bf16.mxu0 0
        %1440 = vmatpush1.bf16.xpose.msra.mxu0 %v1044
        %1441 = vmatprep.subr.bf16.mxu0 0
        %1442 = vmatpush1.bf16.xpose.msra.mxu0 %v1047
        %1443 = vmatprep.subr.bf16.mxu0 0
        %1444 = vmatpush1.bf16.xpose.msra.mxu0 %v1050
        %1445 = vmatprep.mubr.bf16.mxu0 0
        %1446 = vmatmul.mubr.bf16.gmra.mrb[0].mxu0 %v759
        %v1447 = vpop.f32.mrb[0].mxu0
        %v1448 = vadd.f32 %v730, %v1447
        %v1449 = vpop.f32.mrb[0].mxu0
        %v1450 = vadd.f32 %v730, %v1449
        %v1451 = vpop.f32.mrb[0].mxu0
        %v1452 = vadd.f32 %v735, %v1451
        %v1453 = vpop.f32.mrb[0].mxu0
        %v1454 = vadd.f32 %v735, %v1453
        %1455 = vmatprep.mubr.bf16.mxu0 0
        %1456 = vmatmul.mubr.bf16.gmra.mrb[0].mxu0 %v762
        %v1457 = vpop.f32.mrb[0].mxu0
        %v1458 = vadd.f32 %v740, %v1457
        %v1459 = vpop.f32.mrb[0].mxu0
        %v1460 = vadd.f32 %v740, %v1459
        %v1461 = vpop.f32.mrb[0].mxu0
        %v1462 = vadd.f32 %v745, %v1461
        %v1463 = vpop.f32.mrb[0].mxu0
        %v1464 = vadd.f32 %v745, %v1463
        %1465 = vdwg.mxu0
        %1466 = vmatprep.subr.bf16.mxu0 0
        %1467 = vmatpush1.bf16.xpose.msra.mxu0 %v1053
        %1468 = vmatprep.subr.bf16.mxu0 0
        %1469 = vmatpush1.bf16.xpose.msra.mxu0 %v1056
        %1470 = vmatprep.subr.bf16.mxu0 0
        %1471 = vmatpush1.bf16.xpose.msra.mxu0 %v1059
        %1472 = vmatprep.subr.bf16.mxu0 0
        %1473 = vmatpush1.bf16.xpose.msra.mxu0 %v1062
        %1474 = vmatprep.subr.bf16.mxu0 0
        %1475 = vmatpush1.bf16.xpose.msra.mxu0 %v1065
        %1476 = vmatprep.subr.bf16.mxu0 0
        %1477 = vmatpush1.bf16.xpose.msra.mxu0 %v1068
        %1478 = vmatprep.subr.bf16.mxu0 0
        %1479 = vmatpush1.bf16.xpose.msra.mxu0 %v1071
        %1480 = vmatprep.subr.bf16.mxu0 0
        %1481 = vmatpush1.bf16.xpose.msra.mxu0 %v1074
        %1482 = vmatprep.subr.bf16.mxu0 0
        %1483 = vmatpush1.bf16.xpose.msra.mxu0 %v1077
        %1484 = vmatprep.subr.bf16.mxu0 0
        %1485 = vmatpush1.bf16.xpose.msra.mxu0 %v1080
        %1486 = vmatprep.subr.bf16.mxu0 0
        %1487 = vmatpush1.bf16.xpose.msra.mxu0 %v1083
        %1488 = vmatprep.subr.bf16.mxu0 0
        %1489 = vmatpush1.bf16.xpose.msra.mxu0 %v1086
        %1490 = vmatprep.subr.bf16.mxu0 0
        %1491 = vmatpush1.bf16.xpose.msra.mxu0 %v1089
        %1492 = vmatprep.subr.bf16.mxu0 0
        %1493 = vmatpush1.bf16.xpose.msra.mxu0 %v1092
        %1494 = vmatprep.subr.bf16.mxu0 0
        %1495 = vmatpush1.bf16.xpose.msra.mxu0 %v1095
        %1496 = vmatprep.subr.bf16.mxu0 0
        %1497 = vmatpush1.bf16.xpose.msra.mxu0 %v1098
        %1498 = vmatprep.mubr.bf16.mxu0 0
        %1499 = vmatmul.mubr.bf16.gmra.mrb[0].mxu0 %v759
        %v1500 = vpop.f32.mrb[0].mxu0
        %v1501 = vadd.f32 %v730, %v1500
        %v1502 = vpop.f32.mrb[0].mxu0
        %v1503 = vadd.f32 %v730, %v1502
        %v1504 = vpop.f32.mrb[0].mxu0
        %v1505 = vadd.f32 %v735, %v1504
        %v1506 = vpop.f32.mrb[0].mxu0
        %v1507 = vadd.f32 %v735, %v1506
        %1508 = vmatprep.mubr.bf16.mxu0 0
        %1509 = vmatmul.mubr.bf16.gmra.mrb[0].mxu0 %v762
        %v1510 = vpop.f32.mrb[0].mxu0
        %v1511 = vadd.f32 %v740, %v1510
        %v1512 = vpop.f32.mrb[0].mxu0
        %v1513 = vadd.f32 %v740, %v1512
        %v1514 = vpop.f32.mrb[0].mxu0
        %v1515 = vadd.f32 %v745, %v1514
        %v1516 = vpop.f32.mrb[0].mxu0
        %v1517 = vadd.f32 %v745, %v1516
        %1518 = vdwg.mxu0
        %1519 = vmatprep.subr.bf16.mxu0 0
        %1520 = vmatpush1.bf16.xpose.msra.mxu0 %v1101
        %1521 = vmatprep.subr.bf16.mxu0 0
        %1522 = vmatpush1.bf16.xpose.msra.mxu0 %v1104
        %1523 = vmatprep.subr.bf16.mxu0 0
        %1524 = vmatpush1.bf16.xpose.msra.mxu0 %v1107
        %1525 = vmatprep.subr.bf16.mxu0 0
        %1526 = vmatpush1.bf16.xpose.msra.mxu0 %v1110
        %1527 = vmatprep.subr.bf16.mxu0 0
        %1528 = vmatpush1.bf16.xpose.msra.mxu0 %v1113
        %1529 = vmatprep.subr.bf16.mxu0 0
        %1530 = vmatpush1.bf16.xpose.msra.mxu0 %v1116
        %1531 = vmatprep.subr.bf16.mxu0 0
        %1532 = vmatpush1.bf16.xpose.msra.mxu0 %v1119
        %1533 = vmatprep.subr.bf16.mxu0 0
        %1534 = vmatpush1.bf16.xpose.msra.mxu0 %v1122
        %1535 = vmatprep.subr.bf16.mxu0 0
        %1536 = vmatpush1.bf16.xpose.msra.mxu0 %v1125
        %1537 = vmatprep.subr.bf16.mxu0 0
        %1538 = vmatpush1.bf16.xpose.msra.mxu0 %v1128
        %1539 = vmatprep.subr.bf16.mxu0 0
        %1540 = vmatpush1.bf16.xpose.msra.mxu0 %v1131
        %1541 = vmatprep.subr.bf16.mxu0 0
        %1542 = vmatpush1.bf16.xpose.msra.mxu0 %v1134
        %1543 = vmatprep.subr.bf16.mxu0 0
        %1544 = vmatpush1.bf16.xpose.msra.mxu0 %v1137
        %1545 = vmatprep.subr.bf16.mxu0 0
        %1546 = vmatpush1.bf16.xpose.msra.mxu0 %v1140
        %1547 = vmatprep.subr.bf16.mxu0 0
        %1548 = vmatpush1.bf16.xpose.msra.mxu0 %v1143
        %1549 = vmatprep.subr.bf16.mxu0 0
        %1550 = vmatpush1.bf16.xpose.msra.mxu0 %v1146
        %1551 = vmatprep.mubr.bf16.mxu0 0
        %1552 = vmatmul.mubr.bf16.gmra.mrb[0].mxu0 %v759
        %v1553 = vpop.f32.mrb[0].mxu0
        %v1554 = vadd.f32 %v730, %v1553
        %v1555 = vpop.f32.mrb[0].mxu0
        %v1556 = vadd.f32 %v730, %v1555
        %v1557 = vpop.f32.mrb[0].mxu0
        %v1558 = vadd.f32 %v735, %v1557
        %v1559 = vpop.f32.mrb[0].mxu0
        %v1560 = vadd.f32 %v735, %v1559
        %1561 = vmatprep.mubr.bf16.mxu0 0
        %1562 = vmatmul.mubr.bf16.gmra.mrb[0].mxu0 %v762
        %v1563 = vpop.f32.mrb[0].mxu0
        %v1564 = vadd.f32 %v740, %v1563
        %v1565 = vpop.f32.mrb[0].mxu0
        %v1566 = vadd.f32 %v740, %v1565
        %v1567 = vpop.f32.mrb[0].mxu0
        %v1568 = vadd.f32 %v745, %v1567
        %v1569 = vpop.f32.mrb[0].mxu0
        %v1570 = vadd.f32 %v745, %v1569
        %1571 = vdwg.mxu0
        %v1572 = vmax.f32 %v1183, 0.0
        %v1573 = vmax.f32 %v1185, 0.0
        %v1574 = vmax.f32 %v1236, 0.0
        %v1575 = vmax.f32 %v1238, 0.0
        %v1576 = vmax.f32 %v1289, 0.0
        %v1577 = vmax.f32 %v1291, 0.0
        %v1578 = vmax.f32 %v1342, 0.0
        %v1579 = vmax.f32 %v1344, 0.0
        %v1580 = vmax.f32 %v1395, 0.0
        %v1581 = vmax.f32 %v1397, 0.0
        %v1582 = vmax.f32 %v1448, 0.0
        %v1583 = vmax.f32 %v1450, 0.0
        %v1584 = vmax.f32 %v1501, 0.0
        %v1585 = vmax.f32 %v1503, 0.0
        %v1586 = vmax.f32 %v1554, 0.0
        %v1587 = vmax.f32 %v1556, 0.0
        %v1588 = vmax.f32 %v1187, 0.0
        %v1589 = vmax.f32 %v1189, 0.0
        %v1590 = vmax.f32 %v1240, 0.0
        %v1591 = vmax.f32 %v1242, 0.0
        %v1592 = vmax.f32 %v1293, 0.0
        %v1593 = vmax.f32 %v1295, 0.0
        %v1594 = vmax.f32 %v1346, 0.0
        %v1595 = vmax.f32 %v1348, 0.0
        %v1596 = vmax.f32 %v1399, 0.0
        %v1597 = vmax.f32 %v1401, 0.0
        %v1598 = vmax.f32 %v1452, 0.0
        %v1599 = vmax.f32 %v1454, 0.0
        %v1600 = vmax.f32 %v1505, 0.0
        %v1601 = vmax.f32 %v1507, 0.0
        %v1602 = vmax.f32 %v1558, 0.0
        %v1603 = vmax.f32 %v1560, 0.0
        %v1604 = vmax.f32 %v1193, 0.0
        %v1605 = vmax.f32 %v1195, 0.0
        %v1606 = vmax.f32 %v1246, 0.0
        %v1607 = vmax.f32 %v1248, 0.0
        %v1608 = vmax.f32 %v1299, 0.0
        %v1609 = vmax.f32 %v1301, 0.0
        %v1610 = vmax.f32 %v1352, 0.0
        %v1611 = vmax.f32 %v1354, 0.0
        %v1612 = vmax.f32 %v1405, 0.0
        %v1613 = vmax.f32 %v1407, 0.0
        %v1614 = vmax.f32 %v1458, 0.0
        %v1615 = vmax.f32 %v1460, 0.0
        %v1616 = vmax.f32 %v1511, 0.0
        %v1617 = vmax.f32 %v1513, 0.0
        %v1618 = vmax.f32 %v1564, 0.0
        %v1619 = vmax.f32 %v1566, 0.0
        %v1620 = vmax.f32 %v1197, 0.0
        %v1621 = vmax.f32 %v1199, 0.0
        %v1622 = vmax.f32 %v1250, 0.0
        %v1623 = vmax.f32 %v1252, 0.0
        %v1624 = vmax.f32 %v1303, 0.0
        %v1625 = vmax.f32 %v1305, 0.0
        %v1626 = vmax.f32 %v1356, 0.0
        %v1627 = vmax.f32 %v1358, 0.0
        %v1628 = vmax.f32 %v1409, 0.0
        %v1629 = vmax.f32 %v1411, 0.0
        %v1630 = vmax.f32 %v1462, 0.0
        %v1631 = vmax.f32 %v1464, 0.0
        %v1632 = vmax.f32 %v1515, 0.0
        %v1633 = vmax.f32 %v1517, 0.0
        %v1634 = vmax.f32 %v1568, 0.0
        %v1635 = vmax.f32 %v1570, 0.0
        %v1636 = vld [vmem:[%s3] sm:$0xf]
        %v1637 = vld [vmem:[%s3 + $0x4] sm:$0xf]
        %v1638 = vld [vmem:[%s3 + $0x8] sm:$0xf]
        %v1639 = vld [vmem:[%s3 + $0xc] sm:$0xf]
        %v1640 = vpack.c.bf16 %v1588, %v1572
        %v1641 = vpack.c.bf16 %v1589, %v1573
        %v1642 = vpack.c.bf16 %v1590, %v1574
        %v1643 = vpack.c.bf16 %v1591, %v1575
        %v1644 = vpack.c.bf16 %v1592, %v1576
        %v1645 = vpack.c.bf16 %v1593, %v1577
        %v1646 = vpack.c.bf16 %v1594, %v1578
        %v1647 = vpack.c.bf16 %v1595, %v1579
        %v1648 = vpack.c.bf16 %v1596, %v1580
        %v1649 = vpack.c.bf16 %v1597, %v1581
        %v1650 = vpack.c.bf16 %v1598, %v1582
        %v1651 = vpack.c.bf16 %v1599, %v1583
        %v1652 = vpack.c.bf16 %v1600, %v1584
        %v1653 = vpack.c.bf16 %v1601, %v1585
        %v1654 = vpack.c.bf16 %v1602, %v1586
        %v1655 = vpack.c.bf16 %v1603, %v1587
        %v1656 = vpack.c.bf16 %v1620, %v1604
        %v1657 = vpack.c.bf16 %v1621, %v1605
        %v1658 = vpack.c.bf16 %v1622, %v1606
        %v1659 = vpack.c.bf16 %v1623, %v1607
        %v1660 = vpack.c.bf16 %v1624, %v1608
        %v1661 = vpack.c.bf16 %v1625, %v1609
        %v1662 = vpack.c.bf16 %v1626, %v1610
        %v1663 = vpack.c.bf16 %v1627, %v1611
        %v1664 = vpack.c.bf16 %v1628, %v1612
        %v1665 = vpack.c.bf16 %v1629, %v1613
        %v1666 = vpack.c.bf16 %v1630, %v1614
        %v1667 = vpack.c.bf16 %v1631, %v1615
        %v1668 = vpack.c.bf16 %v1632, %v1616
        %v1669 = vpack.c.bf16 %v1633, %v1617
        %v1670 = vpack.c.bf16 %v1634, %v1618
        %v1671 = vpack.c.bf16 %v1635, %v1619
        %v1672 = vld [vmem:[%s4] sm:$0xff]
        %v1673 = vld [vmem:[%s4 + $0x8] sm:$0xff]
        %v1674 = vld [vmem:[%s4 + $0x10] sm:$0xff]
        %v1675 = vld [vmem:[%s4 + $0x18] sm:$0xff]
        %1677 = vset.pattern.permute.xlu0 0
        %1678 = vperm.xlu0 %1677, %v1672
        %v1679 = vpop.permute.xlu0 %1678
        %1682 = vset.pattern.permute.xlu0 0
        %1683 = vperm.xlu0 %1682, %v1673
        %v1684 = vpop.permute.xlu0 %1683
        %1687 = vset.pattern.permute.xlu0 0
        %1688 = vperm.xlu0 %1687, %v1674
        %v1689 = vpop.permute.xlu0 %1688
        %1692 = vset.pattern.permute.xlu0 0
        %1693 = vperm.xlu0 %1692, %v1675
        %v1694 = vpop.permute.xlu0 %1693
        %v1700 = vunpack.c.l.b16 %v1636
        %v1701 = vunpack.c.l.b16 %v1637
        %v1702 = vunpack.c.l.b16 %v1638
        %v1703 = vunpack.c.l.b16 %v1639
        %v1704 = vpack.c.b16 %v1701, %v1700
        %v1705 = vpack.c.b16 %v1703, %v1702
        %vm1706 = vcmask 261120
        %v1708 = vsel %vm1706, %v1704, 0
        %v1711 = vsel %vm1706, %v1705, 0
        %1713 = vmatprep.subr.bf16.mxu0 %v1641
        %1714 = vmatpush1.bf16.msra.mxu0 %v1640
        %1715 = vmatprep.subr.bf16.mxu0 %v1657
        %1716 = vmatpush1.bf16.msra.mxu0 %v1656
        %1717 = vmatprep.subr.bf16.mxu0 0
        %1718 = vmatpush1.bf16.msra.mxu0 0
        %1719 = vmatprep.subr.bf16.mxu0 0
        %1720 = vmatpush1.bf16.msra.mxu0 0
        %1721 = vmatprep.subr.bf16.mxu0 0
        %1722 = vmatpush1.bf16.msra.mxu0 0
        %1723 = vmatprep.subr.bf16.mxu0 0
        %1724 = vmatpush1.bf16.msra.mxu0 0
        %1725 = vmatprep.subr.bf16.mxu0 0
        %1726 = vmatpush1.bf16.msra.mxu0 0
        %1727 = vmatprep.subr.bf16.mxu0 0
        %1728 = vmatpush1.bf16.msra.mxu0 0
        %1729 = vmatprep.subr.bf16.mxu0 0
        %1730 = vmatpush1.bf16.msra.mxu0 0
        %1731 = vmatprep.subr.bf16.mxu0 0
        %1732 = vmatpush1.bf16.msra.mxu0 0
        %1733 = vmatprep.subr.bf16.mxu0 0
        %1734 = vmatpush1.bf16.msra.mxu0 0
        %1735 = vmatprep.subr.bf16.mxu0 0
        %1736 = vmatpush1.bf16.msra.mxu0 0
        %1737 = vmatprep.subr.bf16.mxu0 0
        %1738 = vmatpush1.bf16.msra.mxu0 0
        %1739 = vmatprep.subr.bf16.mxu0 0
        %1740 = vmatpush1.bf16.msra.mxu0 0
        %1741 = vmatprep.subr.bf16.mxu0 0
        %1742 = vmatpush1.bf16.msra.mxu0 0
        %1743 = vmatprep.subr.bf16.mxu0 0
        %1744 = vmatpush1.bf16.msra.mxu0 0
        %1745 = vmatprep.mubr.bf16.mxu0 0
        %1746 = vmatmul.mubr.bf16.gmra.mrb[0].mxu0 %v1708
        %v1747 = vpop.f32.mrb[0].mxu0
        %v1748 = vadd.f32 %v1679, %v1747
        %v1749 = vpop.f32.mrb[0].mxu0
        %v1750 = vadd.f32 %v1679, %v1749
        %v1751 = vpop.f32.mrb[0].mxu0
        %v1752 = vadd.f32 %v1684, %v1751
        %v1753 = vpop.f32.mrb[0].mxu0
        %v1754 = vadd.f32 %v1684, %v1753
        %1755 = vmatprep.mubr.bf16.mxu0 0
        %1756 = vmatmul.mubr.bf16.gmra.mrb[0].mxu0 %v1711
        %v1757 = vpop.f32.mrb[0].mxu0
        %v1758 = vadd.f32 %v1689, %v1757
        %v1759 = vpop.f32.mrb[0].mxu0
        %v1760 = vadd.f32 %v1689, %v1759
        %v1761 = vpop.f32.mrb[0].mxu0
        %v1762 = vadd.f32 %v1694, %v1761
        %v1763 = vpop.f32.mrb[0].mxu0
        %v1764 = vadd.f32 %v1694, %v1763
        %1765 = vdwg.mxu0
        %1766 = vmatprep.subr.bf16.mxu0 %v1643
        %1767 = vmatpush1.bf16.msra.mxu0 %v1642
        %1768 = vmatprep.subr.bf16.mxu0 %v1659
        %1769 = vmatpush1.bf16.msra.mxu0 %v1658
        %1770 = vmatprep.subr.bf16.mxu0 0
        %1771 = vmatpush1.bf16.msra.mxu0 0
        %1772 = vmatprep.subr.bf16.mxu0 0
        %1773 = vmatpush1.bf16.msra.mxu0 0
        %1774 = vmatprep.subr.bf16.mxu0 0
        %1775 = vmatpush1.bf16.msra.mxu0 0
        %1776 = vmatprep.subr.bf16.mxu0 0
        %1777 = vmatpush1.bf16.msra.mxu0 0
        %1778 = vmatprep.subr.bf16.mxu0 0
        %1779 = vmatpush1.bf16.msra.mxu0 0
        %1780 = vmatprep.subr.bf16.mxu0 0
        %1781 = vmatpush1.bf16.msra.mxu0 0
        %1782 = vmatprep.subr.bf16.mxu0 0
        %1783 = vmatpush1.bf16.msra.mxu0 0
        %1784 = vmatprep.subr.bf16.mxu0 0
        %1785 = vmatpush1.bf16.msra.mxu0 0
        %1786 = vmatprep.subr.bf16.mxu0 0
        %1787 = vmatpush1.bf16.msra.mxu0 0
        %1788 = vmatprep.subr.bf16.mxu0 0
        %1789 = vmatpush1.bf16.msra.mxu0 0
        %1790 = vmatprep.subr.bf16.mxu0 0
        %1791 = vmatpush1.bf16.msra.mxu0 0
        %1792 = vmatprep.subr.bf16.mxu0 0
        %1793 = vmatpush1.bf16.msra.mxu0 0
        %1794 = vmatprep.subr.bf16.mxu0 0
        %1795 = vmatpush1.bf16.msra.mxu0 0
        %1796 = vmatprep.subr.bf16.mxu0 0
        %1797 = vmatpush1.bf16.msra.mxu0 0
        %1798 = vmatprep.mubr.bf16.mxu0 0
        %1799 = vmatmul.mubr.bf16.gmra.mrb[0].mxu0 %v1708
        %v1800 = vpop.f32.mrb[0].mxu0
        %v1801 = vadd.f32 %v1679, %v1800
        %v1802 = vpop.f32.mrb[0].mxu0
        %v1803 = vadd.f32 %v1679, %v1802
        %v1804 = vpop.f32.mrb[0].mxu0
        %v1805 = vadd.f32 %v1684, %v1804
        %v1806 = vpop.f32.mrb[0].mxu0
        %v1807 = vadd.f32 %v1684, %v1806
        %1808 = vmatprep.mubr.bf16.mxu0 0
        %1809 = vmatmul.mubr.bf16.gmra.mrb[0].mxu0 %v1711
        %v1810 = vpop.f32.mrb[0].mxu0
        %v1811 = vadd.f32 %v1689, %v1810
        %v1812 = vpop.f32.mrb[0].mxu0
        %v1813 = vadd.f32 %v1689, %v1812
        %v1814 = vpop.f32.mrb[0].mxu0
        %v1815 = vadd.f32 %v1694, %v1814
        %v1816 = vpop.f32.mrb[0].mxu0
        %v1817 = vadd.f32 %v1694, %v1816
        %1818 = vdwg.mxu0
        %1819 = vmatprep.subr.bf16.mxu0 %v1645
        %1820 = vmatpush1.bf16.msra.mxu0 %v1644
        %1821 = vmatprep.subr.bf16.mxu0 %v1661
        %1822 = vmatpush1.bf16.msra.mxu0 %v1660
        %1823 = vmatprep.subr.bf16.mxu0 0
        %1824 = vmatpush1.bf16.msra.mxu0 0
        %1825 = vmatprep.subr.bf16.mxu0 0
        %1826 = vmatpush1.bf16.msra.mxu0 0
        %1827 = vmatprep.subr.bf16.mxu0 0
        %1828 = vmatpush1.bf16.msra.mxu0 0
        %1829 = vmatprep.subr.bf16.mxu0 0
        %1830 = vmatpush1.bf16.msra.mxu0 0
        %1831 = vmatprep.subr.bf16.mxu0 0
        %1832 = vmatpush1.bf16.msra.mxu0 0
        %1833 = vmatprep.subr.bf16.mxu0 0
        %1834 = vmatpush1.bf16.msra.mxu0 0
        %1835 = vmatprep.subr.bf16.mxu0 0
        %1836 = vmatpush1.bf16.msra.mxu0 0
        %1837 = vmatprep.subr.bf16.mxu0 0
        %1838 = vmatpush1.bf16.msra.mxu0 0
        %1839 = vmatprep.subr.bf16.mxu0 0
        %1840 = vmatpush1.bf16.msra.mxu0 0
        %1841 = vmatprep.subr.bf16.mxu0 0
        %1842 = vmatpush1.bf16.msra.mxu0 0
        %1843 = vmatprep.subr.bf16.mxu0 0
        %1844 = vmatpush1.bf16.msra.mxu0 0
        %1845 = vmatprep.subr.bf16.mxu0 0
        %1846 = vmatpush1.bf16.msra.mxu0 0
        %1847 = vmatprep.subr.bf16.mxu0 0
        %1848 = vmatpush1.bf16.msra.mxu0 0
        %1849 = vmatprep.subr.bf16.mxu0 0
        %1850 = vmatpush1.bf16.msra.mxu0 0
        %1851 = vmatprep.mubr.bf16.mxu0 0
        %1852 = vmatmul.mubr.bf16.gmra.mrb[0].mxu0 %v1708
        %v1853 = vpop.f32.mrb[0].mxu0
        %v1854 = vadd.f32 %v1679, %v1853
        %v1855 = vpop.f32.mrb[0].mxu0
        %v1856 = vadd.f32 %v1679, %v1855
        %v1857 = vpop.f32.mrb[0].mxu0
        %v1858 = vadd.f32 %v1684, %v1857
        %v1859 = vpop.f32.mrb[0].mxu0
        %v1860 = vadd.f32 %v1684, %v1859
        %1861 = vmatprep.mubr.bf16.mxu0 0
        %1862 = vmatmul.mubr.bf16.gmra.mrb[0].mxu0 %v1711
        %v1863 = vpop.f32.mrb[0].mxu0
        %v1864 = vadd.f32 %v1689, %v1863
        %v1865 = vpop.f32.mrb[0].mxu0
        %v1866 = vadd.f32 %v1689, %v1865
        %v1867 = vpop.f32.mrb[0].mxu0
        %v1868 = vadd.f32 %v1694, %v1867
        %v1869 = vpop.f32.mrb[0].mxu0
        %v1870 = vadd.f32 %v1694, %v1869
        %1871 = vdwg.mxu0
        %1872 = vmatprep.subr.bf16.mxu0 %v1647
        %1873 = vmatpush1.bf16.msra.mxu0 %v1646
        %1874 = vmatprep.subr.bf16.mxu0 %v1663
        %1875 = vmatpush1.bf16.msra.mxu0 %v1662
        %1876 = vmatprep.subr.bf16.mxu0 0
        %1877 = vmatpush1.bf16.msra.mxu0 0
        %1878 = vmatprep.subr.bf16.mxu0 0
        %1879 = vmatpush1.bf16.msra.mxu0 0
        %1880 = vmatprep.subr.bf16.mxu0 0
        %1881 = vmatpush1.bf16.msra.mxu0 0
        %1882 = vmatprep.subr.bf16.mxu0 0
        %1883 = vmatpush1.bf16.msra.mxu0 0
        %1884 = vmatprep.subr.bf16.mxu0 0
        %1885 = vmatpush1.bf16.msra.mxu0 0
        %1886 = vmatprep.subr.bf16.mxu0 0
        %1887 = vmatpush1.bf16.msra.mxu0 0
        %1888 = vmatprep.subr.bf16.mxu0 0
        %1889 = vmatpush1.bf16.msra.mxu0 0
        %1890 = vmatprep.subr.bf16.mxu0 0
        %1891 = vmatpush1.bf16.msra.mxu0 0
        %1892 = vmatprep.subr.bf16.mxu0 0
        %1893 = vmatpush1.bf16.msra.mxu0 0
        %1894 = vmatprep.subr.bf16.mxu0 0
        %1895 = vmatpush1.bf16.msra.mxu0 0
        %1896 = vmatprep.subr.bf16.mxu0 0
        %1897 = vmatpush1.bf16.msra.mxu0 0
        %1898 = vmatprep.subr.bf16.mxu0 0
        %1899 = vmatpush1.bf16.msra.mxu0 0
        %1900 = vmatprep.subr.bf16.mxu0 0
        %1901 = vmatpush1.bf16.msra.mxu0 0
        %1902 = vmatprep.subr.bf16.mxu0 0
        %1903 = vmatpush1.bf16.msra.mxu0 0
        %1904 = vmatprep.mubr.bf16.mxu0 0
        %1905 = vmatmul.mubr.bf16.gmra.mrb[0].mxu0 %v1708
        %v1906 = vpop.f32.mrb[0].mxu0
        %v1907 = vadd.f32 %v1679, %v1906
        %v1908 = vpop.f32.mrb[0].mxu0
        %v1909 = vadd.f32 %v1679, %v1908
        %v1910 = vpop.f32.mrb[0].mxu0
        %v1911 = vadd.f32 %v1684, %v1910
        %v1912 = vpop.f32.mrb[0].mxu0
        %v1913 = vadd.f32 %v1684, %v1912
        %1914 = vmatprep.mubr.bf16.mxu0 0
        %1915 = vmatmul.mubr.bf16.gmra.mrb[0].mxu0 %v1711
        %v1916 = vpop.f32.mrb[0].mxu0
        %v1917 = vadd.f32 %v1689, %v1916
        %v1918 = vpop.f32.mrb[0].mxu0
        %v1919 = vadd.f32 %v1689, %v1918
        %v1920 = vpop.f32.mrb[0].mxu0
        %v1921 = vadd.f32 %v1694, %v1920
        %v1922 = vpop.f32.mrb[0].mxu0
        %v1923 = vadd.f32 %v1694, %v1922
        %1924 = vdwg.mxu0
        %1925 = vmatprep.subr.bf16.mxu0 %v1649
        %1926 = vmatpush1.bf16.msra.mxu0 %v1648
        %1927 = vmatprep.subr.bf16.mxu0 %v1665
        %1928 = vmatpush1.bf16.msra.mxu0 %v1664
        %1929 = vmatprep.subr.bf16.mxu0 0
        %1930 = vmatpush1.bf16.msra.mxu0 0
        %1931 = vmatprep.subr.bf16.mxu0 0
        %1932 = vmatpush1.bf16.msra.mxu0 0
        %1933 = vmatprep.subr.bf16.mxu0 0
        %1934 = vmatpush1.bf16.msra.mxu0 0
        %1935 = vmatprep.subr.bf16.mxu0 0
        %1936 = vmatpush1.bf16.msra.mxu0 0
        %1937 = vmatprep.subr.bf16.mxu0 0
        %1938 = vmatpush1.bf16.msra.mxu0 0
        %1939 = vmatprep.subr.bf16.mxu0 0
        %1940 = vmatpush1.bf16.msra.mxu0 0
        %1941 = vmatprep.subr.bf16.mxu0 0
        %1942 = vmatpush1.bf16.msra.mxu0 0
        %1943 = vmatprep.subr.bf16.mxu0 0
        %1944 = vmatpush1.bf16.msra.mxu0 0
        %1945 = vmatprep.subr.bf16.mxu0 0
        %1946 = vmatpush1.bf16.msra.mxu0 0
        %1947 = vmatprep.subr.bf16.mxu0 0
        %1948 = vmatpush1.bf16.msra.mxu0 0
        %1949 = vmatprep.subr.bf16.mxu0 0
        %1950 = vmatpush1.bf16.msra.mxu0 0
        %1951 = vmatprep.subr.bf16.mxu0 0
        %1952 = vmatpush1.bf16.msra.mxu0 0
        %1953 = vmatprep.subr.bf16.mxu0 0
        %1954 = vmatpush1.bf16.msra.mxu0 0
        %1955 = vmatprep.subr.bf16.mxu0 0
        %1956 = vmatpush1.bf16.msra.mxu0 0
        %1957 = vmatprep.mubr.bf16.mxu0 0
        %1958 = vmatmul.mubr.bf16.gmra.mrb[0].mxu0 %v1708
        %v1959 = vpop.f32.mrb[0].mxu0
        %v1960 = vadd.f32 %v1679, %v1959
        %v1961 = vpop.f32.mrb[0].mxu0
        %v1962 = vadd.f32 %v1679, %v1961
        %v1963 = vpop.f32.mrb[0].mxu0
        %v1964 = vadd.f32 %v1684, %v1963
        %v1965 = vpop.f32.mrb[0].mxu0
        %v1966 = vadd.f32 %v1684, %v1965
        %1967 = vmatprep.mubr.bf16.mxu0 0
        %1968 = vmatmul.mubr.bf16.gmra.mrb[0].mxu0 %v1711
        %v1969 = vpop.f32.mrb[0].mxu0
        %v1970 = vadd.f32 %v1689, %v1969
        %v1971 = vpop.f32.mrb[0].mxu0
        %v1972 = vadd.f32 %v1689, %v1971
        %v1973 = vpop.f32.mrb[0].mxu0
        %v1974 = vadd.f32 %v1694, %v1973
        %v1975 = vpop.f32.mrb[0].mxu0
        %v1976 = vadd.f32 %v1694, %v1975
        %1977 = vdwg.mxu0
        %1978 = vmatprep.subr.bf16.mxu0 %v1651
        %1979 = vmatpush1.bf16.msra.mxu0 %v1650
        %1980 = vmatprep.subr.bf16.mxu0 %v1667
        %1981 = vmatpush1.bf16.msra.mxu0 %v1666
        %1982 = vmatprep.subr.bf16.mxu0 0
        %1983 = vmatpush1.bf16.msra.mxu0 0
        %1984 = vmatprep.subr.bf16.mxu0 0
        %1985 = vmatpush1.bf16.msra.mxu0 0
        %1986 = vmatprep.subr.bf16.mxu0 0
        %1987 = vmatpush1.bf16.msra.mxu0 0
        %1988 = vmatprep.subr.bf16.mxu0 0
        %1989 = vmatpush1.bf16.msra.mxu0 0
        %1990 = vmatprep.subr.bf16.mxu0 0
        %1991 = vmatpush1.bf16.msra.mxu0 0
        %1992 = vmatprep.subr.bf16.mxu0 0
        %1993 = vmatpush1.bf16.msra.mxu0 0
        %1994 = vmatprep.subr.bf16.mxu0 0
        %1995 = vmatpush1.bf16.msra.mxu0 0
        %1996 = vmatprep.subr.bf16.mxu0 0
        %1997 = vmatpush1.bf16.msra.mxu0 0
        %1998 = vmatprep.subr.bf16.mxu0 0
        %1999 = vmatpush1.bf16.msra.mxu0 0
        %2000 = vmatprep.subr.bf16.mxu0 0
        %2001 = vmatpush1.bf16.msra.mxu0 0
        %2002 = vmatprep.subr.bf16.mxu0 0
        %2003 = vmatpush1.bf16.msra.mxu0 0
        %2004 = vmatprep.subr.bf16.mxu0 0
        %2005 = vmatpush1.bf16.msra.mxu0 0
        %2006 = vmatprep.subr.bf16.mxu0 0
        %2007 = vmatpush1.bf16.msra.mxu0 0
        %2008 = vmatprep.subr.bf16.mxu0 0
        %2009 = vmatpush1.bf16.msra.mxu0 0
        %2010 = vmatprep.mubr.bf16.mxu0 0
        %2011 = vmatmul.mubr.bf16.gmra.mrb[0].mxu0 %v1708
        %v2012 = vpop.f32.mrb[0].mxu0
        %v2013 = vadd.f32 %v1679, %v2012
        %v2014 = vpop.f32.mrb[0].mxu0
        %v2015 = vadd.f32 %v1679, %v2014
        %v2016 = vpop.f32.mrb[0].mxu0
        %v2017 = vadd.f32 %v1684, %v2016
        %v2018 = vpop.f32.mrb[0].mxu0
        %v2019 = vadd.f32 %v1684, %v2018
        %2020 = vmatprep.mubr.bf16.mxu0 0
        %2021 = vmatmul.mubr.bf16.gmra.mrb[0].mxu0 %v1711
        %v2022 = vpop.f32.mrb[0].mxu0
        %v2023 = vadd.f32 %v1689, %v2022
        %v2024 = vpop.f32.mrb[0].mxu0
        %v2025 = vadd.f32 %v1689, %v2024
        %v2026 = vpop.f32.mrb[0].mxu0
        %v2027 = vadd.f32 %v1694, %v2026
        %v2028 = vpop.f32.mrb[0].mxu0
        %v2029 = vadd.f32 %v1694, %v2028
        %2030 = vdwg.mxu0
        %2031 = vmatprep.subr.bf16.mxu0 %v1653
        %2032 = vmatpush1.bf16.msra.mxu0 %v1652
        %2033 = vmatprep.subr.bf16.mxu0 %v1669
        %2034 = vmatpush1.bf16.msra.mxu0 %v1668
        %2035 = vmatprep.subr.bf16.mxu0 0
        %2036 = vmatpush1.bf16.msra.mxu0 0
        %2037 = vmatprep.subr.bf16.mxu0 0
        %2038 = vmatpush1.bf16.msra.mxu0 0
        %2039 = vmatprep.subr.bf16.mxu0 0
        %2040 = vmatpush1.bf16.msra.mxu0 0
        %2041 = vmatprep.subr.bf16.mxu0 0
        %2042 = vmatpush1.bf16.msra.mxu0 0
        %2043 = vmatprep.subr.bf16.mxu0 0
        %2044 = vmatpush1.bf16.msra.mxu0 0
        %2045 = vmatprep.subr.bf16.mxu0 0
        %2046 = vmatpush1.bf16.msra.mxu0 0
        %2047 = vmatprep.subr.bf16.mxu0 0
        %2048 = vmatpush1.bf16.msra.mxu0 0
        %2049 = vmatprep.subr.bf16.mxu0 0
        %2050 = vmatpush1.bf16.msra.mxu0 0
        %2051 = vmatprep.subr.bf16.mxu0 0
        %2052 = vmatpush1.bf16.msra.mxu0 0
        %2053 = vmatprep.subr.bf16.mxu0 0
        %2054 = vmatpush1.bf16.msra.mxu0 0
        %2055 = vmatprep.subr.bf16.mxu0 0
        %2056 = vmatpush1.bf16.msra.mxu0 0
        %2057 = vmatprep.subr.bf16.mxu0 0
        %2058 = vmatpush1.bf16.msra.mxu0 0
        %2059 = vmatprep.subr.bf16.mxu0 0
        %2060 = vmatpush1.bf16.msra.mxu0 0
        %2061 = vmatprep.subr.bf16.mxu0 0
        %2062 = vmatpush1.bf16.msra.mxu0 0
        %2063 = vmatprep.mubr.bf16.mxu0 0
        %2064 = vmatmul.mubr.bf16.gmra.mrb[0].mxu0 %v1708
        %v2065 = vpop.f32.mrb[0].mxu0
        %v2066 = vadd.f32 %v1679, %v2065
        %v2067 = vpop.f32.mrb[0].mxu0
        %v2068 = vadd.f32 %v1679, %v2067
        %v2069 = vpop.f32.mrb[0].mxu0
        %v2070 = vadd.f32 %v1684, %v2069
        %v2071 = vpop.f32.mrb[0].mxu0
        %v2072 = vadd.f32 %v1684, %v2071
        %2073 = vmatprep.mubr.bf16.mxu0 0
        %2074 = vmatmul.mubr.bf16.gmra.mrb[0].mxu0 %v1711
        %v2075 = vpop.f32.mrb[0].mxu0
        %v2076 = vadd.f32 %v1689, %v2075
        %v2077 = vpop.f32.mrb[0].mxu0
        %v2078 = vadd.f32 %v1689, %v2077
        %v2079 = vpop.f32.mrb[0].mxu0
        %v2080 = vadd.f32 %v1694, %v2079
        %v2081 = vpop.f32.mrb[0].mxu0
        %v2082 = vadd.f32 %v1694, %v2081
        %2083 = vdwg.mxu0
        %2084 = vmatprep.subr.bf16.mxu0 %v1655
        %2085 = vmatpush1.bf16.msra.mxu0 %v1654
        %2086 = vmatprep.subr.bf16.mxu0 %v1671
        %2087 = vmatpush1.bf16.msra.mxu0 %v1670
        %2088 = vmatprep.subr.bf16.mxu0 0
        %2089 = vmatpush1.bf16.msra.mxu0 0
        %2090 = vmatprep.subr.bf16.mxu0 0
        %2091 = vmatpush1.bf16.msra.mxu0 0
        %2092 = vmatprep.subr.bf16.mxu0 0
        %2093 = vmatpush1.bf16.msra.mxu0 0
        %2094 = vmatprep.subr.bf16.mxu0 0
        %2095 = vmatpush1.bf16.msra.mxu0 0
        %2096 = vmatprep.subr.bf16.mxu0 0
        %2097 = vmatpush1.bf16.msra.mxu0 0
        %2098 = vmatprep.subr.bf16.mxu0 0
        %2099 = vmatpush1.bf16.msra.mxu0 0
        %2100 = vmatprep.subr.bf16.mxu0 0
        %2101 = vmatpush1.bf16.msra.mxu0 0
        %2102 = vmatprep.subr.bf16.mxu0 0
        %2103 = vmatpush1.bf16.msra.mxu0 0
        %2104 = vmatprep.subr.bf16.mxu0 0
        %2105 = vmatpush1.bf16.msra.mxu0 0
        %2106 = vmatprep.subr.bf16.mxu0 0
        %2107 = vmatpush1.bf16.msra.mxu0 0
        %2108 = vmatprep.subr.bf16.mxu0 0
        %2109 = vmatpush1.bf16.msra.mxu0 0
        %2110 = vmatprep.subr.bf16.mxu0 0
        %2111 = vmatpush1.bf16.msra.mxu0 0
        %2112 = vmatprep.subr.bf16.mxu0 0
        %2113 = vmatpush1.bf16.msra.mxu0 0
        %2114 = vmatprep.subr.bf16.mxu0 0
        %2115 = vmatpush1.bf16.msra.mxu0 0
        %2116 = vmatprep.mubr.bf16.mxu0 0
        %2117 = vmatmul.mubr.bf16.gmra.mrb[0].mxu0 %v1708
        %v2118 = vpop.f32.mrb[0].mxu0
        %v2119 = vadd.f32 %v1679, %v2118
        %v2120 = vpop.f32.mrb[0].mxu0
        %v2121 = vadd.f32 %v1679, %v2120
        %v2122 = vpop.f32.mrb[0].mxu0
        %v2123 = vadd.f32 %v1684, %v2122
        %v2124 = vpop.f32.mrb[0].mxu0
        %v2125 = vadd.f32 %v1684, %v2124
        %2126 = vmatprep.mubr.bf16.mxu0 0
        %2127 = vmatmul.mubr.bf16.gmra.mrb[0].mxu0 %v1711
        %v2128 = vpop.f32.mrb[0].mxu0
        %v2129 = vadd.f32 %v1689, %v2128
        %v2130 = vpop.f32.mrb[0].mxu0
        %v2131 = vadd.f32 %v1689, %v2130
        %v2132 = vpop.f32.mrb[0].mxu0
        %v2133 = vadd.f32 %v1694, %v2132
        %v2134 = vpop.f32.mrb[0].mxu0
        %v2135 = vadd.f32 %v1694, %v2134
        %2136 = vdwg.mxu0
        %v2137 = vmax.f32 %v1748, 0.0
        %v2138 = vmax.f32 %v1750, 0.0
        %v2139 = vmax.f32 %v1801, 0.0
        %v2140 = vmax.f32 %v1803, 0.0
        %v2141 = vmax.f32 %v1854, 0.0
        %v2142 = vmax.f32 %v1856, 0.0
        %v2143 = vmax.f32 %v1907, 0.0
        %v2144 = vmax.f32 %v1909, 0.0
        %v2145 = vmax.f32 %v1960, 0.0
        %v2146 = vmax.f32 %v1962, 0.0
        %v2147 = vmax.f32 %v2013, 0.0
        %v2148 = vmax.f32 %v2015, 0.0
        %v2149 = vmax.f32 %v2066, 0.0
        %v2150 = vmax.f32 %v2068, 0.0
        %v2151 = vmax.f32 %v2119, 0.0
        %v2152 = vmax.f32 %v2121, 0.0
        %v2153 = vmax.f32 %v1752, 0.0
        %v2154 = vmax.f32 %v1754, 0.0
        %v2155 = vmax.f32 %v1805, 0.0
        %v2156 = vmax.f32 %v1807, 0.0
        %v2157 = vmax.f32 %v1858, 0.0
        %v2158 = vmax.f32 %v1860, 0.0
        %v2159 = vmax.f32 %v1911, 0.0
        %v2160 = vmax.f32 %v1913, 0.0
        %v2161 = vmax.f32 %v1964, 0.0
        %v2162 = vmax.f32 %v1966, 0.0
        %v2163 = vmax.f32 %v2017, 0.0
        %v2164 = vmax.f32 %v2019, 0.0
        %v2165 = vmax.f32 %v2070, 0.0
        %v2166 = vmax.f32 %v2072, 0.0
        %v2167 = vmax.f32 %v2123, 0.0
        %v2168 = vmax.f32 %v2125, 0.0
        %v2169 = vmax.f32 %v1758, 0.0
        %v2170 = vmax.f32 %v1760, 0.0
        %v2171 = vmax.f32 %v1811, 0.0
        %v2172 = vmax.f32 %v1813, 0.0
        %v2173 = vmax.f32 %v1864, 0.0
        %v2174 = vmax.f32 %v1866, 0.0
        %v2175 = vmax.f32 %v1917, 0.0
        %v2176 = vmax.f32 %v1919, 0.0
        %v2177 = vmax.f32 %v1970, 0.0
        %v2178 = vmax.f32 %v1972, 0.0
        %v2179 = vmax.f32 %v2023, 0.0
        %v2180 = vmax.f32 %v2025, 0.0
        %v2181 = vmax.f32 %v2076, 0.0
        %v2182 = vmax.f32 %v2078, 0.0
        %v2183 = vmax.f32 %v2129, 0.0
        %v2184 = vmax.f32 %v2131, 0.0
        %v2185 = vmax.f32 %v1762, 0.0
        %v2186 = vmax.f32 %v1764, 0.0
        %v2187 = vmax.f32 %v1815, 0.0
        %v2188 = vmax.f32 %v1817, 0.0
        %v2189 = vmax.f32 %v1868, 0.0
        %v2190 = vmax.f32 %v1870, 0.0
        %v2191 = vmax.f32 %v1921, 0.0
        %v2192 = vmax.f32 %v1923, 0.0
        %v2193 = vmax.f32 %v1974, 0.0
        %v2194 = vmax.f32 %v1976, 0.0
        %v2195 = vmax.f32 %v2027, 0.0
        %v2196 = vmax.f32 %v2029, 0.0
        %v2197 = vmax.f32 %v2080, 0.0
        %v2198 = vmax.f32 %v2082, 0.0
        %v2199 = vmax.f32 %v2133, 0.0
        %v2200 = vmax.f32 %v2135, 0.0
        %v2201 = vld [vmem:[%s5] sm:$0xf]
        %v2202 = vld [vmem:[%s5 + $0x4] sm:$0xf]
        %v2203 = vld [vmem:[%s5 + $0x8] sm:$0xf]
        %v2204 = vld [vmem:[%s5 + $0xc] sm:$0xf]
        %v2205 = vpack.c.bf16 %v2153, %v2137
        %v2206 = vpack.c.bf16 %v2154, %v2138
        %v2207 = vpack.c.bf16 %v2155, %v2139
        %v2208 = vpack.c.bf16 %v2156, %v2140
        %v2209 = vpack.c.bf16 %v2157, %v2141
        %v2210 = vpack.c.bf16 %v2158, %v2142
        %v2211 = vpack.c.bf16 %v2159, %v2143
        %v2212 = vpack.c.bf16 %v2160, %v2144
        %v2213 = vpack.c.bf16 %v2161, %v2145
        %v2214 = vpack.c.bf16 %v2162, %v2146
        %v2215 = vpack.c.bf16 %v2163, %v2147
        %v2216 = vpack.c.bf16 %v2164, %v2148
        %v2217 = vpack.c.bf16 %v2165, %v2149
        %v2218 = vpack.c.bf16 %v2166, %v2150
        %v2219 = vpack.c.bf16 %v2167, %v2151
        %v2220 = vpack.c.bf16 %v2168, %v2152
        %v2221 = vpack.c.bf16 %v2185, %v2169
        %v2222 = vpack.c.bf16 %v2186, %v2170
        %v2223 = vpack.c.bf16 %v2187, %v2171
        %v2224 = vpack.c.bf16 %v2188, %v2172
        %v2225 = vpack.c.bf16 %v2189, %v2173
        %v2226 = vpack.c.bf16 %v2190, %v2174
        %v2227 = vpack.c.bf16 %v2191, %v2175
        %v2228 = vpack.c.bf16 %v2192, %v2176
        %v2229 = vpack.c.bf16 %v2193, %v2177
        %v2230 = vpack.c.bf16 %v2194, %v2178
        %v2231 = vpack.c.bf16 %v2195, %v2179
        %v2232 = vpack.c.bf16 %v2196, %v2180
        %v2233 = vpack.c.bf16 %v2197, %v2181
        %v2234 = vpack.c.bf16 %v2198, %v2182
        %v2235 = vpack.c.bf16 %v2199, %v2183
        %v2236 = vpack.c.bf16 %v2200, %v2184
        %v2237 = vld [vmem:[%s6] sm:$0xff]
        %v2238 = vld [vmem:[%s6 + $0x8] sm:$0xff]
        %v2239 = vld [vmem:[%s6 + $0x10] sm:$0xff]
        %v2240 = vld [vmem:[%s6 + $0x18] sm:$0xff]
        %2242 = vset.pattern.permute.xlu0 0
        %2243 = vperm.xlu0 %2242, %v2237
        %v2244 = vpop.permute.xlu0 %2243
        %2247 = vset.pattern.permute.xlu0 0
        %2248 = vperm.xlu0 %2247, %v2238
        %v2249 = vpop.permute.xlu0 %2248
        %2252 = vset.pattern.permute.xlu0 0
        %2253 = vperm.xlu0 %2252, %v2239
        %v2254 = vpop.permute.xlu0 %2253
        %2257 = vset.pattern.permute.xlu0 0
        %2258 = vperm.xlu0 %2257, %v2240
        %v2259 = vpop.permute.xlu0 %2258
        %v2265 = vunpack.c.l.b16 %v2201
        %v2266 = vunpack.c.l.b16 %v2202
        %v2267 = vunpack.c.l.b16 %v2203
        %v2268 = vunpack.c.l.b16 %v2204
        %v2269 = vpack.c.b16 %v2266, %v2265
        %v2270 = vpack.c.b16 %v2268, %v2267
        %v2272 = vsel %vm1706, %v2269, 0
        %v2275 = vsel %vm1706, %v2270, 0
        %2277 = vmatprep.subr.bf16.mxu0 %v2206
        %2278 = vmatpush1.bf16.msra.mxu0 %v2205
        %2279 = vmatprep.subr.bf16.mxu0 %v2222
        %2280 = vmatpush1.bf16.msra.mxu0 %v2221
        %2281 = vmatprep.subr.bf16.mxu0 0
        %2282 = vmatpush1.bf16.msra.mxu0 0
        %2283 = vmatprep.subr.bf16.mxu0 0
        %2284 = vmatpush1.bf16.msra.mxu0 0
        %2285 = vmatprep.subr.bf16.mxu0 0
        %2286 = vmatpush1.bf16.msra.mxu0 0
        %2287 = vmatprep.subr.bf16.mxu0 0
        %2288 = vmatpush1.bf16.msra.mxu0 0
        %2289 = vmatprep.subr.bf16.mxu0 0
        %2290 = vmatpush1.bf16.msra.mxu0 0
        %2291 = vmatprep.subr.bf16.mxu0 0
        %2292 = vmatpush1.bf16.msra.mxu0 0
        %2293 = vmatprep.subr.bf16.mxu0 0
        %2294 = vmatpush1.bf16.msra.mxu0 0
        %2295 = vmatprep.subr.bf16.mxu0 0
        %2296 = vmatpush1.bf16.msra.mxu0 0
        %2297 = vmatprep.subr.bf16.mxu0 0
        %2298 = vmatpush1.bf16.msra.mxu0 0
        %2299 = vmatprep.subr.bf16.mxu0 0
        %2300 = vmatpush1.bf16.msra.mxu0 0
        %2301 = vmatprep.subr.bf16.mxu0 0
        %2302 = vmatpush1.bf16.msra.mxu0 0
        %2303 = vmatprep.subr.bf16.mxu0 0
        %2304 = vmatpush1.bf16.msra.mxu0 0
        %2305 = vmatprep.subr.bf16.mxu0 0
        %2306 = vmatpush1.bf16.msra.mxu0 0
        %2307 = vmatprep.subr.bf16.mxu0 0
        %2308 = vmatpush1.bf16.msra.mxu0 0
        %2309 = vmatprep.mubr.bf16.mxu0 0
        %2310 = vmatmul.mubr.bf16.gmra.mrb[0].mxu0 %v2272
        %v2311 = vpop.f32.mrb[0].mxu0
        %v2312 = vadd.f32 %v2244, %v2311
        %v2313 = vpop.f32.mrb[0].mxu0
        %v2314 = vadd.f32 %v2244, %v2313
        %v2315 = vpop.f32.mrb[0].mxu0
        %v2316 = vadd.f32 %v2249, %v2315
        %v2317 = vpop.f32.mrb[0].mxu0
        %v2318 = vadd.f32 %v2249, %v2317
        %2319 = vmatprep.mubr.bf16.mxu0 0
        %2320 = vmatmul.mubr.bf16.gmra.mrb[0].mxu0 %v2275
        %v2321 = vpop.f32.mrb[0].mxu0
        %v2322 = vadd.f32 %v2254, %v2321
        %v2323 = vpop.f32.mrb[0].mxu0
        %v2324 = vadd.f32 %v2254, %v2323
        %v2325 = vpop.f32.mrb[0].mxu0
        %v2326 = vadd.f32 %v2259, %v2325
        %v2327 = vpop.f32.mrb[0].mxu0
        %v2328 = vadd.f32 %v2259, %v2327
        %2329 = vdwg.mxu0
        %2330 = vmatprep.subr.bf16.mxu0 %v2208
        %2331 = vmatpush1.bf16.msra.mxu0 %v2207
        %2332 = vmatprep.subr.bf16.mxu0 %v2224
        %2333 = vmatpush1.bf16.msra.mxu0 %v2223
        %2334 = vmatprep.subr.bf16.mxu0 0
        %2335 = vmatpush1.bf16.msra.mxu0 0
        %2336 = vmatprep.subr.bf16.mxu0 0
        %2337 = vmatpush1.bf16.msra.mxu0 0
        %2338 = vmatprep.subr.bf16.mxu0 0
        %2339 = vmatpush1.bf16.msra.mxu0 0
        %2340 = vmatprep.subr.bf16.mxu0 0
        %2341 = vmatpush1.bf16.msra.mxu0 0
        %2342 = vmatprep.subr.bf16.mxu0 0
        %2343 = vmatpush1.bf16.msra.mxu0 0
        %2344 = vmatprep.subr.bf16.mxu0 0
        %2345 = vmatpush1.bf16.msra.mxu0 0
        %2346 = vmatprep.subr.bf16.mxu0 0
        %2347 = vmatpush1.bf16.msra.mxu0 0
        %2348 = vmatprep.subr.bf16.mxu0 0
        %2349 = vmatpush1.bf16.msra.mxu0 0
        %2350 = vmatprep.subr.bf16.mxu0 0
        %2351 = vmatpush1.bf16.msra.mxu0 0
        %2352 = vmatprep.subr.bf16.mxu0 0
        %2353 = vmatpush1.bf16.msra.mxu0 0
        %2354 = vmatprep.subr.bf16.mxu0 0
        %2355 = vmatpush1.bf16.msra.mxu0 0
        %2356 = vmatprep.subr.bf16.mxu0 0
        %2357 = vmatpush1.bf16.msra.mxu0 0
        %2358 = vmatprep.subr.bf16.mxu0 0
        %2359 = vmatpush1.bf16.msra.mxu0 0
        %2360 = vmatprep.subr.bf16.mxu0 0
        %2361 = vmatpush1.bf16.msra.mxu0 0
        %2362 = vmatprep.mubr.bf16.mxu0 0
        %2363 = vmatmul.mubr.bf16.gmra.mrb[0].mxu0 %v2272
        %v2364 = vpop.f32.mrb[0].mxu0
        %v2365 = vadd.f32 %v2244, %v2364
        %v2366 = vpop.f32.mrb[0].mxu0
        %v2367 = vadd.f32 %v2244, %v2366
        %v2368 = vpop.f32.mrb[0].mxu0
        %v2369 = vadd.f32 %v2249, %v2368
        %v2370 = vpop.f32.mrb[0].mxu0
        %v2371 = vadd.f32 %v2249, %v2370
        %2372 = vmatprep.mubr.bf16.mxu0 0
        %2373 = vmatmul.mubr.bf16.gmra.mrb[0].mxu0 %v2275
        %v2374 = vpop.f32.mrb[0].mxu0
        %v2375 = vadd.f32 %v2254, %v2374
        %v2376 = vpop.f32.mrb[0].mxu0
        %v2377 = vadd.f32 %v2254, %v2376
        %v2378 = vpop.f32.mrb[0].mxu0
        %v2379 = vadd.f32 %v2259, %v2378
        %v2380 = vpop.f32.mrb[0].mxu0
        %v2381 = vadd.f32 %v2259, %v2380
        %2382 = vdwg.mxu0
        %2383 = vmatprep.subr.bf16.mxu0 %v2210
        %2384 = vmatpush1.bf16.msra.mxu0 %v2209
        %2385 = vmatprep.subr.bf16.mxu0 %v2226
        %2386 = vmatpush1.bf16.msra.mxu0 %v2225
        %2387 = vmatprep.subr.bf16.mxu0 0
        %2388 = vmatpush1.bf16.msra.mxu0 0
        %2389 = vmatprep.subr.bf16.mxu0 0
        %2390 = vmatpush1.bf16.msra.mxu0 0
        %2391 = vmatprep.subr.bf16.mxu0 0
        %2392 = vmatpush1.bf16.msra.mxu0 0
        %2393 = vmatprep.subr.bf16.mxu0 0
        %2394 = vmatpush1.bf16.msra.mxu0 0
        %2395 = vmatprep.subr.bf16.mxu0 0
        %2396 = vmatpush1.bf16.msra.mxu0 0
        %2397 = vmatprep.subr.bf16.mxu0 0
        %2398 = vmatpush1.bf16.msra.mxu0 0
        %2399 = vmatprep.subr.bf16.mxu0 0
        %2400 = vmatpush1.bf16.msra.mxu0 0
        %2401 = vmatprep.subr.bf16.mxu0 0
        %2402 = vmatpush1.bf16.msra.mxu0 0
        %2403 = vmatprep.subr.bf16.mxu0 0
        %2404 = vmatpush1.bf16.msra.mxu0 0
        %2405 = vmatprep.subr.bf16.mxu0 0
        %2406 = vmatpush1.bf16.msra.mxu0 0
        %2407 = vmatprep.subr.bf16.mxu0 0
        %2408 = vmatpush1.bf16.msra.mxu0 0
        %2409 = vmatprep.subr.bf16.mxu0 0
        %2410 = vmatpush1.bf16.msra.mxu0 0
        %2411 = vmatprep.subr.bf16.mxu0 0
        %2412 = vmatpush1.bf16.msra.mxu0 0
        %2413 = vmatprep.subr.bf16.mxu0 0
        %2414 = vmatpush1.bf16.msra.mxu0 0
        %2415 = vmatprep.mubr.bf16.mxu0 0
        %2416 = vmatmul.mubr.bf16.gmra.mrb[0].mxu0 %v2272
        %v2417 = vpop.f32.mrb[0].mxu0
        %v2418 = vadd.f32 %v2244, %v2417
        %v2419 = vpop.f32.mrb[0].mxu0
        %v2420 = vadd.f32 %v2244, %v2419
        %v2421 = vpop.f32.mrb[0].mxu0
        %v2422 = vadd.f32 %v2249, %v2421
        %v2423 = vpop.f32.mrb[0].mxu0
        %v2424 = vadd.f32 %v2249, %v2423
        %2425 = vmatprep.mubr.bf16.mxu0 0
        %2426 = vmatmul.mubr.bf16.gmra.mrb[0].mxu0 %v2275
        %v2427 = vpop.f32.mrb[0].mxu0
        %v2428 = vadd.f32 %v2254, %v2427
        %v2429 = vpop.f32.mrb[0].mxu0
        %v2430 = vadd.f32 %v2254, %v2429
        %v2431 = vpop.f32.mrb[0].mxu0
        %v2432 = vadd.f32 %v2259, %v2431
        %v2433 = vpop.f32.mrb[0].mxu0
        %v2434 = vadd.f32 %v2259, %v2433
        %2435 = vdwg.mxu0
        %2436 = vmatprep.subr.bf16.mxu0 %v2212
        %2437 = vmatpush1.bf16.msra.mxu0 %v2211
        %2438 = vmatprep.subr.bf16.mxu0 %v2228
        %2439 = vmatpush1.bf16.msra.mxu0 %v2227
        %2440 = vmatprep.subr.bf16.mxu0 0
        %2441 = vmatpush1.bf16.msra.mxu0 0
        %2442 = vmatprep.subr.bf16.mxu0 0
        %2443 = vmatpush1.bf16.msra.mxu0 0
        %2444 = vmatprep.subr.bf16.mxu0 0
        %2445 = vmatpush1.bf16.msra.mxu0 0
        %2446 = vmatprep.subr.bf16.mxu0 0
        %2447 = vmatpush1.bf16.msra.mxu0 0
        %2448 = vmatprep.subr.bf16.mxu0 0
        %2449 = vmatpush1.bf16.msra.mxu0 0
        %2450 = vmatprep.subr.bf16.mxu0 0
        %2451 = vmatpush1.bf16.msra.mxu0 0
        %2452 = vmatprep.subr.bf16.mxu0 0
        %2453 = vmatpush1.bf16.msra.mxu0 0
        %2454 = vmatprep.subr.bf16.mxu0 0
        %2455 = vmatpush1.bf16.msra.mxu0 0
        %2456 = vmatprep.subr.bf16.mxu0 0
        %2457 = vmatpush1.bf16.msra.mxu0 0
        %2458 = vmatprep.subr.bf16.mxu0 0
        %2459 = vmatpush1.bf16.msra.mxu0 0
        %2460 = vmatprep.subr.bf16.mxu0 0
        %2461 = vmatpush1.bf16.msra.mxu0 0
        %2462 = vmatprep.subr.bf16.mxu0 0
        %2463 = vmatpush1.bf16.msra.mxu0 0
        %2464 = vmatprep.subr.bf16.mxu0 0
        %2465 = vmatpush1.bf16.msra.mxu0 0
        %2466 = vmatprep.subr.bf16.mxu0 0
        %2467 = vmatpush1.bf16.msra.mxu0 0
        %2468 = vmatprep.mubr.bf16.mxu0 0
        %2469 = vmatmul.mubr.bf16.gmra.mrb[0].mxu0 %v2272
        %v2470 = vpop.f32.mrb[0].mxu0
        %v2471 = vadd.f32 %v2244, %v2470
        %v2472 = vpop.f32.mrb[0].mxu0
        %v2473 = vadd.f32 %v2244, %v2472
        %v2474 = vpop.f32.mrb[0].mxu0
        %v2475 = vadd.f32 %v2249, %v2474
        %v2476 = vpop.f32.mrb[0].mxu0
        %v2477 = vadd.f32 %v2249, %v2476
        %2478 = vmatprep.mubr.bf16.mxu0 0
        %2479 = vmatmul.mubr.bf16.gmra.mrb[0].mxu0 %v2275
        %v2480 = vpop.f32.mrb[0].mxu0
        %v2481 = vadd.f32 %v2254, %v2480
        %v2482 = vpop.f32.mrb[0].mxu0
        %v2483 = vadd.f32 %v2254, %v2482
        %v2484 = vpop.f32.mrb[0].mxu0
        %v2485 = vadd.f32 %v2259, %v2484
        %v2486 = vpop.f32.mrb[0].mxu0
        %v2487 = vadd.f32 %v2259, %v2486
        %2488 = vdwg.mxu0
        %2489 = vmatprep.subr.bf16.mxu0 %v2214
        %2490 = vmatpush1.bf16.msra.mxu0 %v2213
        %2491 = vmatprep.subr.bf16.mxu0 %v2230
        %2492 = vmatpush1.bf16.msra.mxu0 %v2229
        %2493 = vmatprep.subr.bf16.mxu0 0
        %2494 = vmatpush1.bf16.msra.mxu0 0
        %2495 = vmatprep.subr.bf16.mxu0 0
        %2496 = vmatpush1.bf16.msra.mxu0 0
        %2497 = vmatprep.subr.bf16.mxu0 0
        %2498 = vmatpush1.bf16.msra.mxu0 0
        %2499 = vmatprep.subr.bf16.mxu0 0
        %2500 = vmatpush1.bf16.msra.mxu0 0
        %2501 = vmatprep.subr.bf16.mxu0 0
        %2502 = vmatpush1.bf16.msra.mxu0 0
        %2503 = vmatprep.subr.bf16.mxu0 0
        %2504 = vmatpush1.bf16.msra.mxu0 0
        %2505 = vmatprep.subr.bf16.mxu0 0
        %2506 = vmatpush1.bf16.msra.mxu0 0
        %2507 = vmatprep.subr.bf16.mxu0 0
        %2508 = vmatpush1.bf16.msra.mxu0 0
        %2509 = vmatprep.subr.bf16.mxu0 0
        %2510 = vmatpush1.bf16.msra.mxu0 0
        %2511 = vmatprep.subr.bf16.mxu0 0
        %2512 = vmatpush1.bf16.msra.mxu0 0
        %2513 = vmatprep.subr.bf16.mxu0 0
        %2514 = vmatpush1.bf16.msra.mxu0 0
        %2515 = vmatprep.subr.bf16.mxu0 0
        %2516 = vmatpush1.bf16.msra.mxu0 0
        %2517 = vmatprep.subr.bf16.mxu0 0
        %2518 = vmatpush1.bf16.msra.mxu0 0
        %2519 = vmatprep.subr.bf16.mxu0 0
        %2520 = vmatpush1.bf16.msra.mxu0 0
        %2521 = vmatprep.mubr.bf16.mxu0 0
        %2522 = vmatmul.mubr.bf16.gmra.mrb[0].mxu0 %v2272
        %v2523 = vpop.f32.mrb[0].mxu0
        %v2524 = vadd.f32 %v2244, %v2523
        %v2525 = vpop.f32.mrb[0].mxu0
        %v2526 = vadd.f32 %v2244, %v2525
        %v2527 = vpop.f32.mrb[0].mxu0
        %v2528 = vadd.f32 %v2249, %v2527
        %v2529 = vpop.f32.mrb[0].mxu0
        %v2530 = vadd.f32 %v2249, %v2529
        %2531 = vmatprep.mubr.bf16.mxu0 0
        %2532 = vmatmul.mubr.bf16.gmra.mrb[0].mxu0 %v2275
        %v2533 = vpop.f32.mrb[0].mxu0
        %v2534 = vadd.f32 %v2254, %v2533
        %v2535 = vpop.f32.mrb[0].mxu0
        %v2536 = vadd.f32 %v2254, %v2535
        %v2537 = vpop.f32.mrb[0].mxu0
        %v2538 = vadd.f32 %v2259, %v2537
        %v2539 = vpop.f32.mrb[0].mxu0
        %v2540 = vadd.f32 %v2259, %v2539
        %2541 = vdwg.mxu0
        %2542 = vmatprep.subr.bf16.mxu0 %v2216
        %2543 = vmatpush1.bf16.msra.mxu0 %v2215
        %2544 = vmatprep.subr.bf16.mxu0 %v2232
        %2545 = vmatpush1.bf16.msra.mxu0 %v2231
        %2546 = vmatprep.subr.bf16.mxu0 0
        %2547 = vmatpush1.bf16.msra.mxu0 0
        %2548 = vmatprep.subr.bf16.mxu0 0
        %2549 = vmatpush1.bf16.msra.mxu0 0
        %2550 = vmatprep.subr.bf16.mxu0 0
        %2551 = vmatpush1.bf16.msra.mxu0 0
        %2552 = vmatprep.subr.bf16.mxu0 0
        %2553 = vmatpush1.bf16.msra.mxu0 0
        %2554 = vmatprep.subr.bf16.mxu0 0
        %2555 = vmatpush1.bf16.msra.mxu0 0
        %2556 = vmatprep.subr.bf16.mxu0 0
        %2557 = vmatpush1.bf16.msra.mxu0 0
        %2558 = vmatprep.subr.bf16.mxu0 0
        %2559 = vmatpush1.bf16.msra.mxu0 0
        %2560 = vmatprep.subr.bf16.mxu0 0
        %2561 = vmatpush1.bf16.msra.mxu0 0
        %2562 = vmatprep.subr.bf16.mxu0 0
        %2563 = vmatpush1.bf16.msra.mxu0 0
        %2564 = vmatprep.subr.bf16.mxu0 0
        %2565 = vmatpush1.bf16.msra.mxu0 0
        %2566 = vmatprep.subr.bf16.mxu0 0
        %2567 = vmatpush1.bf16.msra.mxu0 0
        %2568 = vmatprep.subr.bf16.mxu0 0
        %2569 = vmatpush1.bf16.msra.mxu0 0
        %2570 = vmatprep.subr.bf16.mxu0 0
        %2571 = vmatpush1.bf16.msra.mxu0 0
        %2572 = vmatprep.subr.bf16.mxu0 0
        %2573 = vmatpush1.bf16.msra.mxu0 0
        %2574 = vmatprep.mubr.bf16.mxu0 0
        %2575 = vmatmul.mubr.bf16.gmra.mrb[0].mxu0 %v2272
        %v2576 = vpop.f32.mrb[0].mxu0
        %v2577 = vadd.f32 %v2244, %v2576
        %v2578 = vpop.f32.mrb[0].mxu0
        %v2579 = vadd.f32 %v2244, %v2578
        %v2580 = vpop.f32.mrb[0].mxu0
        %v2581 = vadd.f32 %v2249, %v2580
        %v2582 = vpop.f32.mrb[0].mxu0
        %v2583 = vadd.f32 %v2249, %v2582
        %2584 = vmatprep.mubr.bf16.mxu0 0
        %2585 = vmatmul.mubr.bf16.gmra.mrb[0].mxu0 %v2275
        %v2586 = vpop.f32.mrb[0].mxu0
        %v2587 = vadd.f32 %v2254, %v2586
        %v2588 = vpop.f32.mrb[0].mxu0
        %v2589 = vadd.f32 %v2254, %v2588
        %v2590 = vpop.f32.mrb[0].mxu0
        %v2591 = vadd.f32 %v2259, %v2590
        %v2592 = vpop.f32.mrb[0].mxu0
        %v2593 = vadd.f32 %v2259, %v2592
        %2594 = vdwg.mxu0
        %2595 = vmatprep.subr.bf16.mxu0 %v2218
        %2596 = vmatpush1.bf16.msra.mxu0 %v2217
        %2597 = vmatprep.subr.bf16.mxu0 %v2234
        %2598 = vmatpush1.bf16.msra.mxu0 %v2233
        %2599 = vmatprep.subr.bf16.mxu0 0
        %2600 = vmatpush1.bf16.msra.mxu0 0
        %2601 = vmatprep.subr.bf16.mxu0 0
        %2602 = vmatpush1.bf16.msra.mxu0 0
        %2603 = vmatprep.subr.bf16.mxu0 0
        %2604 = vmatpush1.bf16.msra.mxu0 0
        %2605 = vmatprep.subr.bf16.mxu0 0
        %2606 = vmatpush1.bf16.msra.mxu0 0
        %2607 = vmatprep.subr.bf16.mxu0 0
        %2608 = vmatpush1.bf16.msra.mxu0 0
        %2609 = vmatprep.subr.bf16.mxu0 0
        %2610 = vmatpush1.bf16.msra.mxu0 0
        %2611 = vmatprep.subr.bf16.mxu0 0
        %2612 = vmatpush1.bf16.msra.mxu0 0
        %2613 = vmatprep.subr.bf16.mxu0 0
        %2614 = vmatpush1.bf16.msra.mxu0 0
        %2615 = vmatprep.subr.bf16.mxu0 0
        %2616 = vmatpush1.bf16.msra.mxu0 0
        %2617 = vmatprep.subr.bf16.mxu0 0
        %2618 = vmatpush1.bf16.msra.mxu0 0
        %2619 = vmatprep.subr.bf16.mxu0 0
        %2620 = vmatpush1.bf16.msra.mxu0 0
        %2621 = vmatprep.subr.bf16.mxu0 0
        %2622 = vmatpush1.bf16.msra.mxu0 0
        %2623 = vmatprep.subr.bf16.mxu0 0
        %2624 = vmatpush1.bf16.msra.mxu0 0
        %2625 = vmatprep.subr.bf16.mxu0 0
        %2626 = vmatpush1.bf16.msra.mxu0 0
        %2627 = vmatprep.mubr.bf16.mxu0 0
        %2628 = vmatmul.mubr.bf16.gmra.mrb[0].mxu0 %v2272
        %v2629 = vpop.f32.mrb[0].mxu0
        %v2630 = vadd.f32 %v2244, %v2629
        %v2631 = vpop.f32.mrb[0].mxu0
        %v2632 = vadd.f32 %v2244, %v2631
        %v2633 = vpop.f32.mrb[0].mxu0
        %v2634 = vadd.f32 %v2249, %v2633
        %v2635 = vpop.f32.mrb[0].mxu0
        %v2636 = vadd.f32 %v2249, %v2635
        %2637 = vmatprep.mubr.bf16.mxu0 0
        %2638 = vmatmul.mubr.bf16.gmra.mrb[0].mxu0 %v2275
        %v2639 = vpop.f32.mrb[0].mxu0
        %v2640 = vadd.f32 %v2254, %v2639
        %v2641 = vpop.f32.mrb[0].mxu0
        %v2642 = vadd.f32 %v2254, %v2641
        %v2643 = vpop.f32.mrb[0].mxu0
        %v2644 = vadd.f32 %v2259, %v2643
        %v2645 = vpop.f32.mrb[0].mxu0
        %v2646 = vadd.f32 %v2259, %v2645
        %2647 = vdwg.mxu0
        %2648 = vmatprep.subr.bf16.mxu0 %v2220
        %2649 = vmatpush1.bf16.msra.mxu0 %v2219
        %2650 = vmatprep.subr.bf16.mxu0 %v2236
        %2651 = vmatpush1.bf16.msra.mxu0 %v2235
        %2652 = vmatprep.subr.bf16.mxu0 0
        %2653 = vmatpush1.bf16.msra.mxu0 0
        %2654 = vmatprep.subr.bf16.mxu0 0
        %2655 = vmatpush1.bf16.msra.mxu0 0
        %2656 = vmatprep.subr.bf16.mxu0 0
        %2657 = vmatpush1.bf16.msra.mxu0 0
        %2658 = vmatprep.subr.bf16.mxu0 0
        %2659 = vmatpush1.bf16.msra.mxu0 0
        %2660 = vmatprep.subr.bf16.mxu0 0
        %2661 = vmatpush1.bf16.msra.mxu0 0
        %2662 = vmatprep.subr.bf16.mxu0 0
        %2663 = vmatpush1.bf16.msra.mxu0 0
        %2664 = vmatprep.subr.bf16.mxu0 0
        %2665 = vmatpush1.bf16.msra.mxu0 0
        %2666 = vmatprep.subr.bf16.mxu0 0
        %2667 = vmatpush1.bf16.msra.mxu0 0
        %2668 = vmatprep.subr.bf16.mxu0 0
        %2669 = vmatpush1.bf16.msra.mxu0 0
        %2670 = vmatprep.subr.bf16.mxu0 0
        %2671 = vmatpush1.bf16.msra.mxu0 0
        %2672 = vmatprep.subr.bf16.mxu0 0
        %2673 = vmatpush1.bf16.msra.mxu0 0
        %2674 = vmatprep.subr.bf16.mxu0 0
        %2675 = vmatpush1.bf16.msra.mxu0 0
        %2676 = vmatprep.subr.bf16.mxu0 0
        %2677 = vmatpush1.bf16.msra.mxu0 0
        %2678 = vmatprep.subr.bf16.mxu0 0
        %2679 = vmatpush1.bf16.msra.mxu0 0
        %2680 = vmatprep.mubr.bf16.mxu0 0
        %2681 = vmatmul.mubr.bf16.gmra.mrb[0].mxu0 %v2272
        %v2682 = vpop.f32.mrb[0].mxu0
        %v2683 = vadd.f32 %v2244, %v2682
        %v2684 = vpop.f32.mrb[0].mxu0
        %v2685 = vadd.f32 %v2244, %v2684
        %v2686 = vpop.f32.mrb[0].mxu0
        %v2687 = vadd.f32 %v2249, %v2686
        %v2688 = vpop.f32.mrb[0].mxu0
        %v2689 = vadd.f32 %v2249, %v2688
        %2690 = vmatprep.mubr.bf16.mxu0 0
        %2691 = vmatmul.mubr.bf16.gmra.mrb[0].mxu0 %v2275
        %v2692 = vpop.f32.mrb[0].mxu0
        %v2693 = vadd.f32 %v2254, %v2692
        %v2694 = vpop.f32.mrb[0].mxu0
        %v2695 = vadd.f32 %v2254, %v2694
        %v2696 = vpop.f32.mrb[0].mxu0
        %v2697 = vadd.f32 %v2259, %v2696
        %v2698 = vpop.f32.mrb[0].mxu0
        %v2699 = vadd.f32 %v2259, %v2698
        %2700 = vdwg.mxu0
        %v2701 = vmax.f32 %v2312, 0.0
        %v2702 = vmax.f32 %v2314, 0.0
        %v2703 = vmax.f32 %v2365, 0.0
        %v2704 = vmax.f32 %v2367, 0.0
        %v2705 = vmax.f32 %v2418, 0.0
        %v2706 = vmax.f32 %v2420, 0.0
        %v2707 = vmax.f32 %v2471, 0.0
        %v2708 = vmax.f32 %v2473, 0.0
        %v2709 = vmax.f32 %v2524, 0.0
        %v2710 = vmax.f32 %v2526, 0.0
        %v2711 = vmax.f32 %v2577, 0.0
        %v2712 = vmax.f32 %v2579, 0.0
        %v2713 = vmax.f32 %v2630, 0.0
        %v2714 = vmax.f32 %v2632, 0.0
        %v2715 = vmax.f32 %v2683, 0.0
        %v2716 = vmax.f32 %v2685, 0.0
        %v2717 = vmax.f32 %v2316, 0.0
        %v2718 = vmax.f32 %v2318, 0.0
        %v2719 = vmax.f32 %v2369, 0.0
        %v2720 = vmax.f32 %v2371, 0.0
        %v2721 = vmax.f32 %v2422, 0.0
        %v2722 = vmax.f32 %v2424, 0.0
        %v2723 = vmax.f32 %v2475, 0.0
        %v2724 = vmax.f32 %v2477, 0.0
        %v2725 = vmax.f32 %v2528, 0.0
        %v2726 = vmax.f32 %v2530, 0.0
        %v2727 = vmax.f32 %v2581, 0.0
        %v2728 = vmax.f32 %v2583, 0.0
        %v2729 = vmax.f32 %v2634, 0.0
        %v2730 = vmax.f32 %v2636, 0.0
        %v2731 = vmax.f32 %v2687, 0.0
        %v2732 = vmax.f32 %v2689, 0.0
        %v2733 = vmax.f32 %v2322, 0.0
        %v2734 = vmax.f32 %v2324, 0.0
        %v2735 = vmax.f32 %v2375, 0.0
        %v2736 = vmax.f32 %v2377, 0.0
        %v2737 = vmax.f32 %v2428, 0.0
        %v2738 = vmax.f32 %v2430, 0.0
        %v2739 = vmax.f32 %v2481, 0.0
        %v2740 = vmax.f32 %v2483, 0.0
        %v2741 = vmax.f32 %v2534, 0.0
        %v2742 = vmax.f32 %v2536, 0.0
        %v2743 = vmax.f32 %v2587, 0.0
        %v2744 = vmax.f32 %v2589, 0.0
        %v2745 = vmax.f32 %v2640, 0.0
        %v2746 = vmax.f32 %v2642, 0.0
        %v2747 = vmax.f32 %v2693, 0.0
        %v2748 = vmax.f32 %v2695, 0.0
        %v2749 = vmax.f32 %v2326, 0.0
        %v2750 = vmax.f32 %v2328, 0.0
        %v2751 = vmax.f32 %v2379, 0.0
        %v2752 = vmax.f32 %v2381, 0.0
        %v2753 = vmax.f32 %v2432, 0.0
        %v2754 = vmax.f32 %v2434, 0.0
        %v2755 = vmax.f32 %v2485, 0.0
        %v2756 = vmax.f32 %v2487, 0.0
        %v2757 = vmax.f32 %v2538, 0.0
        %v2758 = vmax.f32 %v2540, 0.0
        %v2759 = vmax.f32 %v2591, 0.0
        %v2760 = vmax.f32 %v2593, 0.0
        %v2761 = vmax.f32 %v2644, 0.0
        %v2762 = vmax.f32 %v2646, 0.0
        %v2763 = vmax.f32 %v2697, 0.0
        %v2764 = vmax.f32 %v2699, 0.0
        %v2765 = vld [vmem:[%s7] sm:$0x3]
        %v2766 = vpack.c.bf16 %v2717, %v2701
        %v2767 = vpack.c.bf16 %v2718, %v2702
        %v2768 = vpack.c.bf16 %v2719, %v2703
        %v2769 = vpack.c.bf16 %v2720, %v2704
        %v2770 = vpack.c.bf16 %v2721, %v2705
        %v2771 = vpack.c.bf16 %v2722, %v2706
        %v2772 = vpack.c.bf16 %v2723, %v2707
        %v2773 = vpack.c.bf16 %v2724, %v2708
        %v2774 = vpack.c.bf16 %v2725, %v2709
        %v2775 = vpack.c.bf16 %v2726, %v2710
        %v2776 = vpack.c.bf16 %v2727, %v2711
        %v2777 = vpack.c.bf16 %v2728, %v2712
        %v2778 = vpack.c.bf16 %v2729, %v2713
        %v2779 = vpack.c.bf16 %v2730, %v2714
        %v2780 = vpack.c.bf16 %v2731, %v2715
        %v2781 = vpack.c.bf16 %v2732, %v2716
        %v2782 = vpack.c.bf16 %v2749, %v2733
        %v2783 = vpack.c.bf16 %v2750, %v2734
        %v2784 = vpack.c.bf16 %v2751, %v2735
        %v2785 = vpack.c.bf16 %v2752, %v2736
        %v2786 = vpack.c.bf16 %v2753, %v2737
        %v2787 = vpack.c.bf16 %v2754, %v2738
        %v2788 = vpack.c.bf16 %v2755, %v2739
        %v2789 = vpack.c.bf16 %v2756, %v2740
        %v2790 = vpack.c.bf16 %v2757, %v2741
        %v2791 = vpack.c.bf16 %v2758, %v2742
        %v2792 = vpack.c.bf16 %v2759, %v2743
        %v2793 = vpack.c.bf16 %v2760, %v2744
        %v2794 = vpack.c.bf16 %v2761, %v2745
        %v2795 = vpack.c.bf16 %v2762, %v2746
        %v2796 = vpack.c.bf16 %v2763, %v2747
        %v2797 = vpack.c.bf16 %v2764, %v2748
        %v2798 = vld [vmem:[%s8] sm:$0xf]
        %2800 = vset.pattern.permute.xlu0 0
        %2801 = vperm.xlu0 %2800, %v2798
        %v2802 = vpop.permute.xlu0 %2801
        %v2805 = vsel %vm1706, %v2765, 0
        %2807 = vmatprep.subr.bf16.mxu0 %v2767
        %2808 = vmatpush1.bf16.msra.mxu0 %v2766
        %2809 = vmatprep.subr.bf16.mxu0 %v2783
        %2810 = vmatpush1.bf16.msra.mxu0 %v2782
        %2811 = vmatprep.subr.bf16.mxu0 0
        %2812 = vmatpush1.bf16.msra.mxu0 0
        %2813 = vmatprep.subr.bf16.mxu0 0
        %2814 = vmatpush1.bf16.msra.mxu0 0
        %2815 = vmatprep.subr.bf16.mxu0 0
        %2816 = vmatpush1.bf16.msra.mxu0 0
        %2817 = vmatprep.subr.bf16.mxu0 0
        %2818 = vmatpush1.bf16.msra.mxu0 0
        %2819 = vmatprep.subr.bf16.mxu0 0
        %2820 = vmatpush1.bf16.msra.mxu0 0
        %2821 = vmatprep.subr.bf16.mxu0 0
        %2822 = vmatpush1.bf16.msra.mxu0 0
        %2823 = vmatprep.subr.bf16.mxu0 0
        %2824 = vmatpush1.bf16.msra.mxu0 0
        %2825 = vmatprep.subr.bf16.mxu0 0
        %2826 = vmatpush1.bf16.msra.mxu0 0
        %2827 = vmatprep.subr.bf16.mxu0 0
        %2828 = vmatpush1.bf16.msra.mxu0 0
        %2829 = vmatprep.subr.bf16.mxu0 0
        %2830 = vmatpush1.bf16.msra.mxu0 0
        %2831 = vmatprep.subr.bf16.mxu0 0
        %2832 = vmatpush1.bf16.msra.mxu0 0
        %2833 = vmatprep.subr.bf16.mxu0 0
        %2834 = vmatpush1.bf16.msra.mxu0 0
        %2835 = vmatprep.subr.bf16.mxu0 0
        %2836 = vmatpush1.bf16.msra.mxu0 0
        %2837 = vmatprep.subr.bf16.mxu0 0
        %2838 = vmatpush1.bf16.msra.mxu0 0
        %2839 = vmatprep.mubr.bf16.mxu0 0
        %2840 = vmatmul.mubr.bf16.gmra.mrb[0].mxu0 %v2805
        %v2841 = vpop.f32.mrb[0].mxu0
        %v2842 = vadd.f32 %v2802, %v2841
        %v2843 = vpop.f32.mrb[0].mxu0
        %v2844 = vadd.f32 %v2802, %v2843
        %v2845 = vpop.f32.mrb[0].mxu0
        %v2846 = vpop.f32.mrb[0].mxu0
        %2847 = vdwg.mxu0
        %2848 = vmatprep.subr.bf16.mxu0 %v2769
        %2849 = vmatpush1.bf16.msra.mxu0 %v2768
        %2850 = vmatprep.subr.bf16.mxu0 %v2785
        %2851 = vmatpush1.bf16.msra.mxu0 %v2784
        %2852 = vmatprep.subr.bf16.mxu0 0
        %2853 = vmatpush1.bf16.msra.mxu0 0
        %2854 = vmatprep.subr.bf16.mxu0 0
        %2855 = vmatpush1.bf16.msra.mxu0 0
        %2856 = vmatprep.subr.bf16.mxu0 0
        %2857 = vmatpush1.bf16.msra.mxu0 0
        %2858 = vmatprep.subr.bf16.mxu0 0
        %2859 = vmatpush1.bf16.msra.mxu0 0
        %2860 = vmatprep.subr.bf16.mxu0 0
        %2861 = vmatpush1.bf16.msra.mxu0 0
        %2862 = vmatprep.subr.bf16.mxu0 0
        %2863 = vmatpush1.bf16.msra.mxu0 0
        %2864 = vmatprep.subr.bf16.mxu0 0
        %2865 = vmatpush1.bf16.msra.mxu0 0
        %2866 = vmatprep.subr.bf16.mxu0 0
        %2867 = vmatpush1.bf16.msra.mxu0 0
        %2868 = vmatprep.subr.bf16.mxu0 0
        %2869 = vmatpush1.bf16.msra.mxu0 0
        %2870 = vmatprep.subr.bf16.mxu0 0
        %2871 = vmatpush1.bf16.msra.mxu0 0
        %2872 = vmatprep.subr.bf16.mxu0 0
        %2873 = vmatpush1.bf16.msra.mxu0 0
        %2874 = vmatprep.subr.bf16.mxu0 0
        %2875 = vmatpush1.bf16.msra.mxu0 0
        %2876 = vmatprep.subr.bf16.mxu0 0
        %2877 = vmatpush1.bf16.msra.mxu0 0
        %2878 = vmatprep.subr.bf16.mxu0 0
        %2879 = vmatpush1.bf16.msra.mxu0 0
        %2880 = vmatprep.mubr.bf16.mxu0 0
        %2881 = vmatmul.mubr.bf16.gmra.mrb[0].mxu0 %v2805
        %v2882 = vpop.f32.mrb[0].mxu0
        %v2883 = vadd.f32 %v2802, %v2882
        %v2884 = vpop.f32.mrb[0].mxu0
        %v2885 = vadd.f32 %v2802, %v2884
        %v2886 = vpop.f32.mrb[0].mxu0
        %v2887 = vpop.f32.mrb[0].mxu0
        %2888 = vdwg.mxu0
        %2889 = vmatprep.subr.bf16.mxu0 %v2771
        %2890 = vmatpush1.bf16.msra.mxu0 %v2770
        %2891 = vmatprep.subr.bf16.mxu0 %v2787
        %2892 = vmatpush1.bf16.msra.mxu0 %v2786
        %2893 = vmatprep.subr.bf16.mxu0 0
        %2894 = vmatpush1.bf16.msra.mxu0 0
        %2895 = vmatprep.subr.bf16.mxu0 0
        %2896 = vmatpush1.bf16.msra.mxu0 0
        %2897 = vmatprep.subr.bf16.mxu0 0
        %2898 = vmatpush1.bf16.msra.mxu0 0
        %2899 = vmatprep.subr.bf16.mxu0 0
        %2900 = vmatpush1.bf16.msra.mxu0 0
        %2901 = vmatprep.subr.bf16.mxu0 0
        %2902 = vmatpush1.bf16.msra.mxu0 0
        %2903 = vmatprep.subr.bf16.mxu0 0
        %2904 = vmatpush1.bf16.msra.mxu0 0
        %2905 = vmatprep.subr.bf16.mxu0 0
        %2906 = vmatpush1.bf16.msra.mxu0 0
        %2907 = vmatprep.subr.bf16.mxu0 0
        %2908 = vmatpush1.bf16.msra.mxu0 0
        %2909 = vmatprep.subr.bf16.mxu0 0
        %2910 = vmatpush1.bf16.msra.mxu0 0
        %2911 = vmatprep.subr.bf16.mxu0 0
        %2912 = vmatpush1.bf16.msra.mxu0 0
        %2913 = vmatprep.subr.bf16.mxu0 0
        %2914 = vmatpush1.bf16.msra.mxu0 0
        %2915 = vmatprep.subr.bf16.mxu0 0
        %2916 = vmatpush1.bf16.msra.mxu0 0
        %2917 = vmatprep.subr.bf16.mxu0 0
        %2918 = vmatpush1.bf16.msra.mxu0 0
        %2919 = vmatprep.subr.bf16.mxu0 0
        %2920 = vmatpush1.bf16.msra.mxu0 0
        %2921 = vmatprep.mubr.bf16.mxu0 0
        %2922 = vmatmul.mubr.bf16.gmra.mrb[0].mxu0 %v2805
        %v2923 = vpop.f32.mrb[0].mxu0
        %v2924 = vadd.f32 %v2802, %v2923
        %v2925 = vpop.f32.mrb[0].mxu0
        %v2926 = vadd.f32 %v2802, %v2925
        %v2927 = vpop.f32.mrb[0].mxu0
        %v2928 = vpop.f32.mrb[0].mxu0
        %2929 = vdwg.mxu0
        %2930 = vmatprep.subr.bf16.mxu0 %v2773
        %2931 = vmatpush1.bf16.msra.mxu0 %v2772
        %2932 = vmatprep.subr.bf16.mxu0 %v2789
        %2933 = vmatpush1.bf16.msra.mxu0 %v2788
        %2934 = vmatprep.subr.bf16.mxu0 0
        %2935 = vmatpush1.bf16.msra.mxu0 0
        %2936 = vmatprep.subr.bf16.mxu0 0
        %2937 = vmatpush1.bf16.msra.mxu0 0
        %2938 = vmatprep.subr.bf16.mxu0 0
        %2939 = vmatpush1.bf16.msra.mxu0 0
        %2940 = vmatprep.subr.bf16.mxu0 0
        %2941 = vmatpush1.bf16.msra.mxu0 0
        %2942 = vmatprep.subr.bf16.mxu0 0
        %2943 = vmatpush1.bf16.msra.mxu0 0
        %2944 = vmatprep.subr.bf16.mxu0 0
        %2945 = vmatpush1.bf16.msra.mxu0 0
        %2946 = vmatprep.subr.bf16.mxu0 0
        %2947 = vmatpush1.bf16.msra.mxu0 0
        %2948 = vmatprep.subr.bf16.mxu0 0
        %2949 = vmatpush1.bf16.msra.mxu0 0
        %2950 = vmatprep.subr.bf16.mxu0 0
        %2951 = vmatpush1.bf16.msra.mxu0 0
        %2952 = vmatprep.subr.bf16.mxu0 0
        %2953 = vmatpush1.bf16.msra.mxu0 0
        %2954 = vmatprep.subr.bf16.mxu0 0
        %2955 = vmatpush1.bf16.msra.mxu0 0
        %2956 = vmatprep.subr.bf16.mxu0 0
        %2957 = vmatpush1.bf16.msra.mxu0 0
        %2958 = vmatprep.subr.bf16.mxu0 0
        %2959 = vmatpush1.bf16.msra.mxu0 0
        %2960 = vmatprep.subr.bf16.mxu0 0
        %2961 = vmatpush1.bf16.msra.mxu0 0
        %2962 = vmatprep.mubr.bf16.mxu0 0
        %2963 = vmatmul.mubr.bf16.gmra.mrb[0].mxu0 %v2805
        %v2964 = vpop.f32.mrb[0].mxu0
        %v2965 = vadd.f32 %v2802, %v2964
        %v2966 = vpop.f32.mrb[0].mxu0
        %v2967 = vadd.f32 %v2802, %v2966
        %v2968 = vpop.f32.mrb[0].mxu0
        %v2969 = vpop.f32.mrb[0].mxu0
        %2970 = vdwg.mxu0
        %2971 = vmatprep.subr.bf16.mxu0 %v2775
        %2972 = vmatpush1.bf16.msra.mxu0 %v2774
        %2973 = vmatprep.subr.bf16.mxu0 %v2791
        %2974 = vmatpush1.bf16.msra.mxu0 %v2790
        %2975 = vmatprep.subr.bf16.mxu0 0
        %2976 = vmatpush1.bf16.msra.mxu0 0
        %2977 = vmatprep.subr.bf16.mxu0 0
        %2978 = vmatpush1.bf16.msra.mxu0 0
        %2979 = vmatprep.subr.bf16.mxu0 0
        %2980 = vmatpush1.bf16.msra.mxu0 0
        %2981 = vmatprep.subr.bf16.mxu0 0
        %2982 = vmatpush1.bf16.msra.mxu0 0
        %2983 = vmatprep.subr.bf16.mxu0 0
        %2984 = vmatpush1.bf16.msra.mxu0 0
        %2985 = vmatprep.subr.bf16.mxu0 0
        %2986 = vmatpush1.bf16.msra.mxu0 0
        %2987 = vmatprep.subr.bf16.mxu0 0
        %2988 = vmatpush1.bf16.msra.mxu0 0
        %2989 = vmatprep.subr.bf16.mxu0 0
        %2990 = vmatpush1.bf16.msra.mxu0 0
        %2991 = vmatprep.subr.bf16.mxu0 0
        %2992 = vmatpush1.bf16.msra.mxu0 0
        %2993 = vmatprep.subr.bf16.mxu0 0
        %2994 = vmatpush1.bf16.msra.mxu0 0
        %2995 = vmatprep.subr.bf16.mxu0 0
        %2996 = vmatpush1.bf16.msra.mxu0 0
        %2997 = vmatprep.subr.bf16.mxu0 0
        %2998 = vmatpush1.bf16.msra.mxu0 0
        %2999 = vmatprep.subr.bf16.mxu0 0
        %3000 = vmatpush1.bf16.msra.mxu0 0
        %3001 = vmatprep.subr.bf16.mxu0 0
        %3002 = vmatpush1.bf16.msra.mxu0 0
        %3003 = vmatprep.mubr.bf16.mxu0 0
        %3004 = vmatmul.mubr.bf16.gmra.mrb[0].mxu0 %v2805
        %v3005 = vpop.f32.mrb[0].mxu0
        %v3006 = vadd.f32 %v2802, %v3005
        %v3007 = vpop.f32.mrb[0].mxu0
        %v3008 = vadd.f32 %v2802, %v3007
        %v3009 = vpop.f32.mrb[0].mxu0
        %v3010 = vpop.f32.mrb[0].mxu0
        %3011 = vdwg.mxu0
        %3012 = vmatprep.subr.bf16.mxu0 %v2777
        %3013 = vmatpush1.bf16.msra.mxu0 %v2776
        %3014 = vmatprep.subr.bf16.mxu0 %v2793
        %3015 = vmatpush1.bf16.msra.mxu0 %v2792
        %3016 = vmatprep.subr.bf16.mxu0 0
        %3017 = vmatpush1.bf16.msra.mxu0 0
        %3018 = vmatprep.subr.bf16.mxu0 0
        %3019 = vmatpush1.bf16.msra.mxu0 0
        %3020 = vmatprep.subr.bf16.mxu0 0
        %3021 = vmatpush1.bf16.msra.mxu0 0
        %3022 = vmatprep.subr.bf16.mxu0 0
        %3023 = vmatpush1.bf16.msra.mxu0 0
        %3024 = vmatprep.subr.bf16.mxu0 0
        %3025 = vmatpush1.bf16.msra.mxu0 0
        %3026 = vmatprep.subr.bf16.mxu0 0
        %3027 = vmatpush1.bf16.msra.mxu0 0
        %3028 = vmatprep.subr.bf16.mxu0 0
        %3029 = vmatpush1.bf16.msra.mxu0 0
        %3030 = vmatprep.subr.bf16.mxu0 0
        %3031 = vmatpush1.bf16.msra.mxu0 0
        %3032 = vmatprep.subr.bf16.mxu0 0
        %3033 = vmatpush1.bf16.msra.mxu0 0
        %3034 = vmatprep.subr.bf16.mxu0 0
        %3035 = vmatpush1.bf16.msra.mxu0 0
        %3036 = vmatprep.subr.bf16.mxu0 0
        %3037 = vmatpush1.bf16.msra.mxu0 0
        %3038 = vmatprep.subr.bf16.mxu0 0
        %3039 = vmatpush1.bf16.msra.mxu0 0
        %3040 = vmatprep.subr.bf16.mxu0 0
        %3041 = vmatpush1.bf16.msra.mxu0 0
        %3042 = vmatprep.subr.bf16.mxu0 0
        %3043 = vmatpush1.bf16.msra.mxu0 0
        %3044 = vmatprep.mubr.bf16.mxu0 0
        %3045 = vmatmul.mubr.bf16.gmra.mrb[0].mxu0 %v2805
        %v3046 = vpop.f32.mrb[0].mxu0
        %v3047 = vadd.f32 %v2802, %v3046
        %v3048 = vpop.f32.mrb[0].mxu0
        %v3049 = vadd.f32 %v2802, %v3048
        %v3050 = vpop.f32.mrb[0].mxu0
        %v3051 = vpop.f32.mrb[0].mxu0
        %3052 = vdwg.mxu0
        %3053 = vmatprep.subr.bf16.mxu0 %v2779
        %3054 = vmatpush1.bf16.msra.mxu0 %v2778
        %3055 = vmatprep.subr.bf16.mxu0 %v2795
        %3056 = vmatpush1.bf16.msra.mxu0 %v2794
        %3057 = vmatprep.subr.bf16.mxu0 0
        %3058 = vmatpush1.bf16.msra.mxu0 0
        %3059 = vmatprep.subr.bf16.mxu0 0
        %3060 = vmatpush1.bf16.msra.mxu0 0
        %3061 = vmatprep.subr.bf16.mxu0 0
        %3062 = vmatpush1.bf16.msra.mxu0 0
        %3063 = vmatprep.subr.bf16.mxu0 0
        %3064 = vmatpush1.bf16.msra.mxu0 0
        %3065 = vmatprep.subr.bf16.mxu0 0
        %3066 = vmatpush1.bf16.msra.mxu0 0
        %3067 = vmatprep.subr.bf16.mxu0 0
        %3068 = vmatpush1.bf16.msra.mxu0 0
        %3069 = vmatprep.subr.bf16.mxu0 0
        %3070 = vmatpush1.bf16.msra.mxu0 0
        %3071 = vmatprep.subr.bf16.mxu0 0
        %3072 = vmatpush1.bf16.msra.mxu0 0
        %3073 = vmatprep.subr.bf16.mxu0 0
        %3074 = vmatpush1.bf16.msra.mxu0 0
        %3075 = vmatprep.subr.bf16.mxu0 0
        %3076 = vmatpush1.bf16.msra.mxu0 0
        %3077 = vmatprep.subr.bf16.mxu0 0
        %3078 = vmatpush1.bf16.msra.mxu0 0
        %3079 = vmatprep.subr.bf16.mxu0 0
        %3080 = vmatpush1.bf16.msra.mxu0 0
        %3081 = vmatprep.subr.bf16.mxu0 0
        %3082 = vmatpush1.bf16.msra.mxu0 0
        %3083 = vmatprep.subr.bf16.mxu0 0
        %3084 = vmatpush1.bf16.msra.mxu0 0
        %3085 = vmatprep.mubr.bf16.mxu0 0
        %3086 = vmatmul.mubr.bf16.gmra.mrb[0].mxu0 %v2805
        %v3087 = vpop.f32.mrb[0].mxu0
        %v3088 = vadd.f32 %v2802, %v3087
        %v3089 = vpop.f32.mrb[0].mxu0
        %v3090 = vadd.f32 %v2802, %v3089
        %v3091 = vpop.f32.mrb[0].mxu0
        %v3092 = vpop.f32.mrb[0].mxu0
        %3093 = vdwg.mxu0
        %3094 = vmatprep.subr.bf16.mxu0 %v2781
        %3095 = vmatpush1.bf16.msra.mxu0 %v2780
        %3096 = vmatprep.subr.bf16.mxu0 %v2797
        %3097 = vmatpush1.bf16.msra.mxu0 %v2796
        %3098 = vmatprep.subr.bf16.mxu0 0
        %3099 = vmatpush1.bf16.msra.mxu0 0
        %3100 = vmatprep.subr.bf16.mxu0 0
        %3101 = vmatpush1.bf16.msra.mxu0 0
        %3102 = vmatprep.subr.bf16.mxu0 0
        %3103 = vmatpush1.bf16.msra.mxu0 0
        %3104 = vmatprep.subr.bf16.mxu0 0
        %3105 = vmatpush1.bf16.msra.mxu0 0
        %3106 = vmatprep.subr.bf16.mxu0 0
        %3107 = vmatpush1.bf16.msra.mxu0 0
        %3108 = vmatprep.subr.bf16.mxu0 0
        %3109 = vmatpush1.bf16.msra.mxu0 0
        %3110 = vmatprep.subr.bf16.mxu0 0
        %3111 = vmatpush1.bf16.msra.mxu0 0
        %3112 = vmatprep.subr.bf16.mxu0 0
        %3113 = vmatpush1.bf16.msra.mxu0 0
        %3114 = vmatprep.subr.bf16.mxu0 0
        %3115 = vmatpush1.bf16.msra.mxu0 0
        %3116 = vmatprep.subr.bf16.mxu0 0
        %3117 = vmatpush1.bf16.msra.mxu0 0
        %3118 = vmatprep.subr.bf16.mxu0 0
        %3119 = vmatpush1.bf16.msra.mxu0 0
        %3120 = vmatprep.subr.bf16.mxu0 0
        %3121 = vmatpush1.bf16.msra.mxu0 0
        %3122 = vmatprep.subr.bf16.mxu0 0
        %3123 = vmatpush1.bf16.msra.mxu0 0
        %3124 = vmatprep.subr.bf16.mxu0 0
        %3125 = vmatpush1.bf16.msra.mxu0 0
        %3126 = vmatprep.mubr.bf16.mxu0 0
        %3127 = vmatmul.mubr.bf16.gmra.mrb[0].mxu0 %v2805
        %v3128 = vpop.f32.mrb[0].mxu0
        %v3129 = vadd.f32 %v2802, %v3128
        %v3130 = vpop.f32.mrb[0].mxu0
        %v3131 = vadd.f32 %v2802, %v3130
        %v3132 = vpop.f32.mrb[0].mxu0
        %v3133 = vpop.f32.mrb[0].mxu0
        %3134 = vdwg.mxu0
        %v3151 = vcombine.low %v2842, %v2844
        %v3152 = vcombine.low %v2883, %v2885
        %v3153 = vcombine.low %v2924, %v2926
        %v3154 = vcombine.low %v2965, %v2967
        %v3155 = vcombine.low %v3006, %v3008
        %v3156 = vcombine.low %v3047, %v3049
        %v3157 = vcombine.low %v3088, %v3090
        %v3158 = vcombine.low %v3129, %v3131
        %3167 = vst [vmem:[%s326] sm:$0xff] %v3151
        %3168 = vst [vmem:[%s326 + $0x8] sm:$0xff] %v3152
        %3169 = vst [vmem:[%s326 + $0x10] sm:$0xff] %v3153
        %3170 = vst [vmem:[%s326 + $0x18] sm:$0xff] %v3154
        %3171 = vst [vmem:[%s326 + $0x20] sm:$0xff] %v3155
        %3172 = vst [vmem:[%s326 + $0x28] sm:$0xff] %v3156
        %3173 = vst [vmem:[%s326 + $0x30] sm:$0xff] %v3157
        %3174 = vst [vmem:[%s326 + $0x38] sm:$0xff] %v3158
        %s3175 = sand.u32 %s225, 1
        %s3176 = scalar_lea.sflag [#allocation3], %s3175
        %s3177 = sand.u32 %s225, 1
        %s3178 = smul.addr %s3177, 64
        %s3179 = scalar_lea.vmem [#allocation2], %s3178
        // Predicated region
        $region57: #{tpu_custom_call.1} parent=55 // pred_check
          %p3180 = pneg %p235
        $region58: #{tpu_custom_call.1} parent=55 // pred_check_branch
          %3182 = sbr.rel (%p3180) target = $region60
        $region59: #{tpu_custom_call.1} parent=55 // pred_region
          %s3183 = smul.u32 16, %s23
          %s3185 = ssub.s32 1024, 1024
          %3186 = vsyncadd %s3176, %s3185
          %s3187 = smul.addr %s3183, 64
          %s3188 = scalar_lea.hbm %s9, %s3187
          %s3190 = sshll.u32 %s3179, 4
          %s3191 = int_to_ptr.vmem [resolvable:$true] %s3190
          %3193 = dma.vmem_to_hbm [thread:$0]  %s3191, 1024, %s3188, %s3176
        $region60: #{tpu_custom_call.1} parent=55 // pred_fallthru
          _
      $region56: #{tpu_custom_call.1} parent=5 // pred_fallthru
        _
      %p3194 = scmp.le.s32.totalorder 2, %s18
      // Predicated region
      $region61: #{tpu_custom_call.1} parent=5 // pred_check
        %p3195 = pneg %p3194
      $region62: #{tpu_custom_call.1} parent=5 // pred_check_branch
        %3197 = sbr.rel (%p3195) target = $region64
      $region63: #{tpu_custom_call.1} parent=5 // pred_region
        %s3198 = ssub.s32 %s18, 2
        // Predicated region
        $region65: #{tpu_custom_call.1} parent=63 // pred_check
          %p3199 = pneg %p241
        $region66: #{tpu_custom_call.1} parent=63 // pred_check_branch
          %3201 = sbr.rel (%p3199) target = $region68
        $region67: #{tpu_custom_call.1} parent=63 // pred_region
          %s3202 = sand.u32 %s226, 1
          %s3203 = scalar_lea.sflag [#allocation3], %s3202
          %s3204 = sand.u32 %s226, 1
          %s3205 = smul.addr %s3204, 64
          %s3206 = scalar_lea.vmem [#allocation2], %s3205
          %3207 = dma.done %s3203, 1024
        $region68: #{tpu_custom_call.1} parent=63 // pred_fallthru
          _
      $region64: #{tpu_custom_call.1} parent=5 // pred_fallthru
        _
    $region6: #{tpu_custom_call.1} parent=1 // loop_footer
      %s22 = sadd.s32 1, %s18
    $region7: #{tpu_custom_call.1} parent=1 // loop_footer_branch
      %17 = sbr.rel target = $region3
    $region8: #{tpu_custom_call.1} parent=1 // loop_exit
      _
    %3208 = vsyncpa [#allocation3], 1
    %s3209 = scalar_lea.sflag [#allocation3], 1
    %3210 = vsyncpa %s3209, 1

</llo_original>
